<compile_context>
chip_gen: v7x
topology: tpu7x:2x2x1
jax: 0.10.0
libtpu: 0.0.40
codegen_flags: <defaults>
</compile_context>

<pallas_src>
import numpy as np
import jax
import jax.numpy as jnp
from jax.experimental import pallas as pl
from jax.experimental.pallas import tpu as pltpu


# ---------------------------------------------------------------------------
# Assumed encoder config (external in the original code base).
# ---------------------------------------------------------------------------
ENCODER_CONFIG = [
    {"out_channels": 64,  "kernel_size": 3, "stride": 2, "padding": 1, "activation": "silu"},
    {"out_channels": 128, "kernel_size": 3, "stride": 2, "padding": 1, "activation": "silu"},
    {"out_channels": 256, "kernel_size": 3, "stride": 2, "padding": 1, "activation": "silu"},
]

_TAPS = tuple((dh, dw) for dh in range(3) for dw in range(3))


def _silu_f32(y):
    # explicit exp-based sigmoid keeps kernel and reference numerics identical
    return y * (1.0 / (1.0 + jnp.exp(-y)))


def _phase_perm(n):
    """(n*n, n*n) 0/1 matrix: row-major (h, w) -> (parity-phase, i', j') grouping of the
    NEXT layer's padded input.  Applied as P @ y (exact on the MXU)."""
    m, half = n * n, n // 2
    P = np.zeros((m, m), np.float32)
    for h in range(n):
        for w in range(n):
            pa, pb = (h + 1) & 1, (w + 1) & 1
            ip = ((h + 1) >> 1) - (1 - pa)
            jp = ((w + 1) >> 1) - (1 - pb)
            g = (pa * 2 + pb) * half * half + ip * half + jp
            P[g, h * n + w] = 1.0
    return P


# ---------------------------------------------------------------------------
# Fused kernel: L x (3x3 stride-2 conv -> folded BN -> SiLU), activations in VMEM.
# ---------------------------------------------------------------------------
def _make_fused_kernel(spatial, chans, out_dtype):
    """spatial[l]: output H(=W) of layer l.  chans[l]: input channels of layer l."""
    L = len(spatial)
    n_perm = L - 2

    def kernel(*refs):
        x0_ref = refs[0]
        w_refs = refs[1:1 + L]                       # (9*cin_l, cout_l) bf16, BN-scale folded
        s_refs = refs[1 + L:1 + 2 * L]               # (1, cout_l) f32 shifts
        perm_refs = refs[1 + 2 * L:1 + 2 * L + n_perm]
        o_ref = refs[1 + 2 * L + n_perm]
        act_refs = refs[2 + 2 * L + n_perm:]         # VMEM scratch, one per layer >= 1

        # ---- layer 0: one big-K matmul on the wrapper-built im2col operand ------------
        # rows are already grouped by layer-1's input parity phases.
        y = jnp.dot(x0_ref[...], w_refs[0][...], preferred_element_type=jnp.float32)
        y = _silu_f32(y + s_refs[0][...]).astype(jnp.bfloat16)

        for l in range(1, L):
            so = spatial[l]                          # this layer's output spatial
            cin, cout = chans[l], chans[l + 1]
            act = act_refs[l - 1]                    # (4, so+1, so+1, cin) padded phase scratch

            # scatter the phase-grouped previous activation into the zero-padded scratch
            act[...] = jnp.zeros_like(act)
            for pa in (0, 1):
                for pb in (0, 1):
                    p = pa * 2 + pb
                    blk = y[p * so * so:(p + 1) * so * so, :].reshape(so, so, cin)
                    act[p, 1 - pa:1 - pa + so, 1 - pb:1 - pb + so, :] = blk

            # 9 per-tap accumulating MXU matmuls, all static contiguous slices
            acc = jnp.zeros((so * so, cout), jnp.float32)
            for t, (dh, dw) in enumerate(_TAPS):
                p = (dh & 1) * 2 + (dw & 1)
                ro, co = dh >> 1, dw >> 1
                slab = act[p, ro:ro + so, co:co + so, :].reshape(so * so, cin)
                acc = acc + jnp.dot(slab, w_refs[l][t * cin:(t + 1) * cin, :],
                                    preferred_element_type=jnp.float32)

            y = _silu_f32(acc + s_refs[l][...])      # folded-BN shift + SiLU, f32
            if l < L - 1:
                # regroup rows by the next layer's phases with one exact permutation matmul
                y = jnp.dot(perm_refs[l - 1][...], y.astype(jnp.bfloat16),
                            preferred_element_type=jnp.float32).astype(jnp.bfloat16)
            else:
                o_ref[...] = y.astype(out_dtype)     # lane-dense (so*so, cout) NHWC order

    return kernel


# ---------------------------------------------------------------------------
# Forward pass: fused conv blocks (one pallas_call) + Flatten (PyTorch NCHW order).
# ---------------------------------------------------------------------------
def subencoder_forward(x, params, config=ENCODER_CONFIG):
    B, cin0, H, W = x.shape
    L = len(config)
    assert L >= 2 and H == W and H % 2 == 0
    for c in config:
        assert (c.get("kernel_size", 3), c.get("stride", 2), c.get("padding", 1)) == (3, 2, 1)
    chans = [cin0] + [c["out_channels"] for c in config]
    spatial, s = [], H
    for _ in range(L):
        s //= 2
        spatial.append(s)
    assert all(sp % 2 == 0 for sp in spatial[:-1]) and spatial[-1] >= 1
    # TODO(synk): the fused kernel keeps each image's full activations VMEM-resident (fine for
    # these descriptor-sized inputs); large spatial inputs would need row tiling with halos.

    # ---- layer-0 im2col (tiny, fused by XLA), rows pre-grouped by layer-1 input phases ----
    s0 = spatial[0]
    xh = jnp.transpose(x, (0, 2, 3, 1)).astype(jnp.bfloat16)
    xp = jnp.pad(xh, ((0, 0), (1, 1), (1, 1), (0, 0)))
    taps = [xp[:, dh:dh + 2 * s0:2, dw:dw + 2 * s0:2, :] for dh, dw in _TAPS]
    cols = jnp.concatenate(taps, axis=-1)                         # (B, s0, s0, 9*cin0)
    groups = []
    for pa in (0, 1):
        for pb in (0, 1):
            g = cols[:, (1 - pa)::2, (1 - pb)::2, :]
            groups.append(g.reshape(B, (s0 // 2) ** 2, 9 * cin0))
    x0 = jnp.concatenate(groups, axis=1)                          # (B, s0*s0, 9*cin0)

    perms = [jnp.asarray(_phase_perm(spatial[l]), jnp.bfloat16) for l in range(1, L - 1)]
    kernel = _make_fused_kernel(tuple(spatial), tuple(chans), jnp.float32)

    in_specs = [pl.BlockSpec((None, s0 * s0, 9 * cin0), lambda b: (b, 0, 0))]
    in_specs += [pl.BlockSpec(p["w"].shape, lambda b: (0, 0)) for p in params]      # resident
    in_specs += [pl.BlockSpec(p["shift"].shape, lambda b: (0, 0)) for p in params]  # resident
    in_specs += [pl.BlockSpec(pm.shape, lambda b: (0, 0)) for pm in perms]          # resident

    sL, cL = spatial[-1], chans[-1]
    out = pl.pallas_call(
        kernel,
        out_shape=jax.ShapeDtypeStruct((B, sL * sL, cL), jnp.float32),
        grid_spec=pltpu.PrefetchScalarGridSpec(
            num_scalar_prefetch=0,
            grid=(B,),
            in_specs=in_specs,
            out_specs=pl.BlockSpec((None, sL * sL, cL), lambda b: (b, 0, 0)),
            scratch_shapes=[
                pltpu.VMEM((4, spatial[l] + 1, spatial[l] + 1, chans[l]), jnp.bfloat16)
                for l in range(1, L)
            ],
        ),
        compiler_params=pltpu.CompilerParams(dimension_semantics=("parallel",)),
    )(x0, *[p["w"] for p in params], *[p["shift"] for p in params], *perms)

    # nn.Flatten on NCHW -> channel-major flatten order.
    out = out.reshape(B, sL, sL, cL)
    out = jnp.transpose(out, (0, 3, 1, 2))
    return out.reshape(B, -1)


# ---------------------------------------------------------------------------
# Parameter init (PyTorch-default style); eval-mode BatchNorm folded, scale into weights.
# (To import PyTorch weights (Cout,Cin,3,3): permute to (3,3,Cin,Cout), fold BN scale,
#  reshape to (9*Cin, Cout); shift = (bias - mean)*scale + beta.)
# ---------------------------------------------------------------------------
def _init_conv_block(key, cin, cout, eps=1e-5):
    k1, k2 = jax.random.split(key)
    bound = 1.0 / np.sqrt(9 * cin)
    w = jax.random.uniform(k1, (3, 3, cin, cout), jnp.float32, -bound, bound)
    b = jax.random.uniform(k2, (cout,), jnp.float32, -bound, bound)
    # PyTorch BN eval defaults: gamma=1, beta=0, running_mean=0, running_var=1.
    scale = jnp.asarray(1.0 / np.sqrt(np.ones((cout,), np.float32) + eps))
    shift = b * scale
    w_folded = (w * scale[None, None, None, :]).reshape(9 * cin, cout)
    return {"w": w_folded.astype(jnp.bfloat16),
            "shift": shift.reshape(1, cout).astype(jnp.float32)}


def init_subencoder_params(key, in_channels, config=ENCODER_CONFIG):
    keys = jax.random.split(key, len(config))
    params, cin = [], in_channels
    for k, cfg in zip(keys, config):
        params.append(_init_conv_block(k, cin, cfg["out_channels"]))
        cin = cfg["out_channels"]
    return params


# ---------------------------------------------------------------------------
# Pure-JAX reference (same folded bf16 weights / f32 accumulation) for the sanity check.
# ---------------------------------------------------------------------------
def _reference_forward(x, params, config=ENCODER_CONFIG):
    h = jnp.transpose(x, (0, 2, 3, 1)).astype(jnp.bfloat16)
    L = len(config)
    for l, lp in enumerate(params):
        cin = lp["w"].shape[0] // 9
        cout = lp["w"].shape[1]
        w = lp["w"].reshape(3, 3, cin, cout)
        y = jax.lax.conv_general_dilated(
            h, w, window_strides=(2, 2), padding=((1, 1), (1, 1)),
            dimension_numbers=("NHWC", "HWIO", "NHWC"),
            preferred_element_type=jnp.float32)
        y = _silu_f32(y + lp["shift"].reshape(1, 1, 1, -1))
        h = y if l == L - 1 else y.astype(jnp.bfloat16)
    h = jnp.transpose(h, (0, 3, 1, 2))
    return h.reshape(h.shape[0], -1)


# ---------------------------------------------------------------------------
if __name__ == "__main__":
    B, C, H, W = 2, 4, 32, 32

    key = jax.random.PRNGKey(0)
    kx, kp = jax.random.split(key)
    x = jax.random.normal(kx, (B, C, H, W), jnp.float32)
    params = init_subencoder_params(kp, C)

    fwd = jax.jit(subencoder_forward)
    out = jax.block_until_ready(fwd(x, params))

    # 32 -> 16 -> 8 -> 4 spatial, 256 channels -> flatten 4096
    assert out.shape == (B, 256 * 4 * 4), out.shape
    assert bool(jnp.all(jnp.isfinite(out)))

    ref = jax.block_until_ready(jax.jit(_reference_forward)(x, params))
    err = float(jnp.max(jnp.abs(out - ref)))
    tol = 2e-2 * float(jnp.max(jnp.abs(ref))) + 2e-2
    assert err <= tol, (err, tol)

    print("KERNEL_OK")
</pallas_src>

<mosaic_0001>
module attributes {stable_mosaic.version = 11 : i64} {
  func.func @kernel(%arg0: i32, %arg1: memref<1x256x36xbf16, #tpu.memory_space<vmem>>, %arg2: memref<36x64xbf16, #tpu.memory_space<vmem>>, %arg3: memref<576x128xbf16, #tpu.memory_space<vmem>>, %arg4: memref<1152x256xbf16, #tpu.memory_space<vmem>>, %arg5: memref<1x64xf32, #tpu.memory_space<vmem>>, %arg6: memref<1x128xf32, #tpu.memory_space<vmem>>, %arg7: memref<1x256xf32, #tpu.memory_space<vmem>>, %arg8: memref<64x64xbf16, #tpu.memory_space<vmem>>, %arg9: memref<1x16x256xf32, #tpu.memory_space<vmem>>, %arg10: memref<4x9x9x64xbf16, #tpu.memory_space<vmem>>, %arg11: memref<4x5x5x128xbf16, #tpu.memory_space<vmem>>) attributes {dimension_semantics = [#tpu.dimension_semantics<parallel>], iteration_bounds = array<i64: 2>, scalar_prefetch = 0 : i64, scratch_operands = 2 : i64, tpu.core_type = #tpu.core_type<tc>, window_params = [{transform_indices = @transform_0, window_bounds = array<i64: 1, 256, 36>}, {pipeline_mode = #tpu.pipeline_mode<synchronous>, transform_indices = @transform_1, window_bounds = array<i64: 36, 64>}, {pipeline_mode = #tpu.pipeline_mode<synchronous>, transform_indices = @transform_2, window_bounds = array<i64: 576, 128>}, {pipeline_mode = #tpu.pipeline_mode<synchronous>, transform_indices = @transform_3, window_bounds = array<i64: 1152, 256>}, {pipeline_mode = #tpu.pipeline_mode<synchronous>, transform_indices = @transform_4, window_bounds = array<i64: 1, 64>}, {pipeline_mode = #tpu.pipeline_mode<synchronous>, transform_indices = @transform_5, window_bounds = array<i64: 1, 128>}, {pipeline_mode = #tpu.pipeline_mode<synchronous>, transform_indices = @transform_6, window_bounds = array<i64: 1, 256>}, {pipeline_mode = #tpu.pipeline_mode<synchronous>, transform_indices = @transform_7, window_bounds = array<i64: 64, 64>}, {transform_indices = @transform_8, window_bounds = array<i64: 1, 16, 256>}]} {
    %c0 = arith.constant 0 : index
    %c0_0 = arith.constant 0 : index
    %c0_1 = arith.constant 0 : index
    %0 = vector.load %arg1[%c0, %c0_0, %c0_1] : memref<1x256x36xbf16, #tpu.memory_space<vmem>>, vector<1x256x36xbf16>
    %1 = vector.shape_cast %0 : vector<1x256x36xbf16> to vector<256x36xbf16>
    %c0_2 = arith.constant 0 : index
    %c0_3 = arith.constant 0 : index
    %2 = vector.load %arg2[%c0_2, %c0_3] : memref<36x64xbf16, #tpu.memory_space<vmem>>, vector<36x64xbf16>
    %cst = arith.constant dense<0.000000e+00> : vector<256x64xf32>
    %3 = tpu.matmul %1, %2, %cst {dimension_numbers = #tpu.dot_dimension_numbers<[1], [0], [0], [1], [0, 0, 1, 1], [], []>} : vector<256x36xbf16>, vector<36x64xbf16>, vector<256x64xf32> -> vector<256x64xf32>
    %c0_4 = arith.constant 0 : index
    %c0_5 = arith.constant 0 : index
    %4 = vector.load %arg5[%c0_4, %c0_5] : memref<1x64xf32, #tpu.memory_space<vmem>>, vector<1x64xf32>
    %5 = vector.broadcast %4 : vector<1x64xf32> to vector<256x64xf32>
    %6 = arith.addf %3, %5 : vector<256x64xf32>
    %cst_6 = arith.constant 0.000000e+00 : f32
    %7 = vector.broadcast %cst_6 : f32 to vector<256x64xf32>
    %8 = arith.subf %7, %6 : vector<256x64xf32>
    %9 = math.exp %8 : vector<256x64xf32>
    %cst_7 = arith.constant 1.000000e+00 : f32
    %10 = vector.broadcast %cst_7 : f32 to vector<256x64xf32>
    %11 = arith.addf %10, %9 : vector<256x64xf32>
    %cst_8 = arith.constant 1.000000e+00 : f32
    %12 = vector.broadcast %cst_8 : f32 to vector<256x64xf32>
    %13 = arith.divf %12, %11 : vector<256x64xf32>
    %14 = arith.mulf %6, %13 : vector<256x64xf32>
    %15 = arith.truncf %14 : vector<256x64xf32> to vector<256x64xbf16>
    %cst_9 = arith.constant 0.000000e+00 : bf16
    %16 = vector.broadcast %cst_9 : bf16 to vector<4x9x9x64xbf16>
    %c0_10 = arith.constant 0 : index
    %c0_11 = arith.constant 0 : index
    %c0_12 = arith.constant 0 : index
    %c0_13 = arith.constant 0 : index
    %17 = vector.load %arg10[%c0_10, %c0_11, %c0_12, %c0_13] : memref<4x9x9x64xbf16, #tpu.memory_space<vmem>>, vector<4x9x9x64xbf16>
    tpu.vector_store %arg10[%c0_10, %c0_11, %c0_12, %c0_13], %16 {strides = array<i32>} : memref<4x9x9x64xbf16, #tpu.memory_space<vmem>>, vector<4x9x9x64xbf16>,
    %18 = vector.extract_strided_slice %15 {offsets = [0, 0], sizes = [64, 64], strides = [1, 1]} : vector<256x64xbf16> to vector<64x64xbf16>
    %19 = vector.shape_cast %18 : vector<64x64xbf16> to vector<8x8x64xbf16>
    %c0_14 = arith.constant 0 : index
    %c1 = arith.constant 1 : index
    %c1_15 = arith.constant 1 : index
    %c0_16 = arith.constant 0 : index
    %20 = vector.load %arg10[%c0_14, %c1, %c1_15, %c0_16] : memref<4x9x9x64xbf16, #tpu.memory_space<vmem>>, vector<1x8x8x64xbf16>
    %21 = vector.shape_cast %20 : vector<1x8x8x64xbf16> to vector<8x8x64xbf16>
    %22 = vector.shape_cast %19 : vector<8x8x64xbf16> to vector<1x8x8x64xbf16>
    tpu.vector_store %arg10[%c0_14, %c1, %c1_15, %c0_16], %22 {strides = array<i32>} : memref<4x9x9x64xbf16, #tpu.memory_space<vmem>>, vector<1x8x8x64xbf16>,
    %23 = vector.extract_strided_slice %15 {offsets = [64, 0], sizes = [64, 64], strides = [1, 1]} : vector<256x64xbf16> to vector<64x64xbf16>
    %24 = vector.shape_cast %23 : vector<64x64xbf16> to vector<8x8x64xbf16>
    %c1_17 = arith.constant 1 : index
    %c1_18 = arith.constant 1 : index
    %c0_19 = arith.constant 0 : index
    %c0_20 = arith.constant 0 : index
    %25 = vector.load %arg10[%c1_17, %c1_18, %c0_19, %c0_20] : memref<4x9x9x64xbf16, #tpu.memory_space<vmem>>, vector<1x8x8x64xbf16>
    %26 = vector.shape_cast %25 : vector<1x8x8x64xbf16> to vector<8x8x64xbf16>
    %27 = vector.shape_cast %24 : vector<8x8x64xbf16> to vector<1x8x8x64xbf16>
    tpu.vector_store %arg10[%c1_17, %c1_18, %c0_19, %c0_20], %27 {strides = array<i32>} : memref<4x9x9x64xbf16, #tpu.memory_space<vmem>>, vector<1x8x8x64xbf16>,
    %28 = vector.extract_strided_slice %15 {offsets = [128, 0], sizes = [64, 64], strides = [1, 1]} : vector<256x64xbf16> to vector<64x64xbf16>
    %29 = vector.shape_cast %28 : vector<64x64xbf16> to vector<8x8x64xbf16>
    %c2 = arith.constant 2 : index
    %c0_21 = arith.constant 0 : index
    %c1_22 = arith.constant 1 : index
    %c0_23 = arith.constant 0 : index
    %30 = vector.load %arg10[%c2, %c0_21, %c1_22, %c0_23] : memref<4x9x9x64xbf16, #tpu.memory_space<vmem>>, vector<1x8x8x64xbf16>
    %31 = vector.shape_cast %30 : vector<1x8x8x64xbf16> to vector<8x8x64xbf16>
    %32 = vector.shape_cast %29 : vector<8x8x64xbf16> to vector<1x8x8x64xbf16>
    tpu.vector_store %arg10[%c2, %c0_21, %c1_22, %c0_23], %32 {strides = array<i32>} : memref<4x9x9x64xbf16, #tpu.memory_space<vmem>>, vector<1x8x8x64xbf16>,
    %33 = vector.extract_strided_slice %15 {offsets = [192, 0], sizes = [64, 64], strides = [1, 1]} : vector<256x64xbf16> to vector<64x64xbf16>
    %34 = vector.shape_cast %33 : vector<64x64xbf16> to vector<8x8x64xbf16>
    %c3 = arith.constant 3 : index
    %c0_24 = arith.constant 0 : index
    %c0_25 = arith.constant 0 : index
    %c0_26 = arith.constant 0 : index
    %35 = vector.load %arg10[%c3, %c0_24, %c0_25, %c0_26] : memref<4x9x9x64xbf16, #tpu.memory_space<vmem>>, vector<1x8x8x64xbf16>
    %36 = vector.shape_cast %35 : vector<1x8x8x64xbf16> to vector<8x8x64xbf16>
    %37 = vector.shape_cast %34 : vector<8x8x64xbf16> to vector<1x8x8x64xbf16>
    tpu.vector_store %arg10[%c3, %c0_24, %c0_25, %c0_26], %37 {strides = array<i32>} : memref<4x9x9x64xbf16, #tpu.memory_space<vmem>>, vector<1x8x8x64xbf16>,
    %cst_27 = arith.constant 0.000000e+00 : f32
    %38 = vector.broadcast %cst_27 : f32 to vector<64x128xf32>
    %c0_28 = arith.constant 0 : index
    %c0_29 = arith.constant 0 : index
    %c0_30 = arith.constant 0 : index
    %c0_31 = arith.constant 0 : index
    %39 = vector.load %arg10[%c0_28, %c0_29, %c0_30, %c0_31] : memref<4x9x9x64xbf16, #tpu.memory_space<vmem>>, vector<1x8x8x64xbf16>
    %40 = vector.shape_cast %39 : vector<1x8x8x64xbf16> to vector<8x8x64xbf16>
    %41 = vector.shape_cast %40 : vector<8x8x64xbf16> to vector<64x64xbf16>
    %c0_32 = arith.constant 0 : index
    %c0_33 = arith.constant 0 : index
    %42 = vector.load %arg3[%c0_32, %c0_33] : memref<576x128xbf16, #tpu.memory_space<vmem>>, vector<64x128xbf16>
    %cst_34 = arith.constant dense<0.000000e+00> : vector<64x128xf32>
    %43 = tpu.matmul %41, %42, %cst_34 {dimension_numbers = #tpu.dot_dimension_numbers<[1], [0], [0], [1], [0, 0, 1, 1], [], []>} : vector<64x64xbf16>, vector<64x128xbf16>, vector<64x128xf32> -> vector<64x128xf32>
    %44 = arith.addf %38, %43 : vector<64x128xf32>
    %c1_35 = arith.constant 1 : index
    %c0_36 = arith.constant 0 : index
    %c0_37 = arith.constant 0 : index
    %c0_38 = arith.constant 0 : index
    %45 = vector.load %arg10[%c1_35, %c0_36, %c0_37, %c0_38] : memref<4x9x9x64xbf16, #tpu.memory_space<vmem>>, vector<1x8x8x64xbf16>
    %46 = vector.shape_cast %45 : vector<1x8x8x64xbf16> to vector<8x8x64xbf16>
    %47 = vector.shape_cast %46 : vector<8x8x64xbf16> to vector<64x64xbf16>
    %c64 = arith.constant 64 : index
    %c0_39 = arith.constant 0 : index
    %48 = vector.load %arg3[%c64, %c0_39] : memref<576x128xbf16, #tpu.memory_space<vmem>>, vector<64x128xbf16>
    %cst_40 = arith.constant dense<0.000000e+00> : vector<64x128xf32>
    %49 = tpu.matmul %47, %48, %cst_40 {dimension_numbers = #tpu.dot_dimension_numbers<[1], [0], [0], [1], [0, 0, 1, 1], [], []>} : vector<64x64xbf16>, vector<64x128xbf16>, vector<64x128xf32> -> vector<64x128xf32>
    %50 = arith.addf %44, %49 : vector<64x128xf32>
    %c0_41 = arith.constant 0 : index
    %c0_42 = arith.constant 0 : index
    %c1_43 = arith.constant 1 : index
    %c0_44 = arith.constant 0 : index
    %51 = vector.load %arg10[%c0_41, %c0_42, %c1_43, %c0_44] : memref<4x9x9x64xbf16, #tpu.memory_space<vmem>>, vector<1x8x8x64xbf16>
    %52 = vector.shape_cast %51 : vector<1x8x8x64xbf16> to vector<8x8x64xbf16>
    %53 = vector.shape_cast %52 : vector<8x8x64xbf16> to vector<64x64xbf16>
    %c128 = arith.constant 128 : index
    %c0_45 = arith.constant 0 : index
    %54 = vector.load %arg3[%c128, %c0_45] : memref<576x128xbf16, #tpu.memory_space<vmem>>, vector<64x128xbf16>
    %cst_46 = arith.constant dense<0.000000e+00> : vector<64x128xf32>
    %55 = tpu.matmul %53, %54, %cst_46 {dimension_numbers = #tpu.dot_dimension_numbers<[1], [0], [0], [1], [0, 0, 1, 1], [], []>} : vector<64x64xbf16>, vector<64x128xbf16>, vector<64x128xf32> -> vector<64x128xf32>
    %56 = arith.addf %50, %55 : vector<64x128xf32>
    %c2_47 = arith.constant 2 : index
    %c0_48 = arith.constant 0 : index
    %c0_49 = arith.constant 0 : index
    %c0_50 = arith.constant 0 : index
    %57 = vector.load %arg10[%c2_47, %c0_48, %c0_49, %c0_50] : memref<4x9x9x64xbf16, #tpu.memory_space<vmem>>, vector<1x8x8x64xbf16>
    %58 = vector.shape_cast %57 : vector<1x8x8x64xbf16> to vector<8x8x64xbf16>
    %59 = vector.shape_cast %58 : vector<8x8x64xbf16> to vector<64x64xbf16>
    %c192 = arith.constant 192 : index
    %c0_51 = arith.constant 0 : index
    %60 = vector.load %arg3[%c192, %c0_51] : memref<576x128xbf16, #tpu.memory_space<vmem>>, vector<64x128xbf16>
    %cst_52 = arith.constant dense<0.000000e+00> : vector<64x128xf32>
    %61 = tpu.matmul %59, %60, %cst_52 {dimension_numbers = #tpu.dot_dimension_numbers<[1], [0], [0], [1], [0, 0, 1, 1], [], []>} : vector<64x64xbf16>, vector<64x128xbf16>, vector<64x128xf32> -> vector<64x128xf32>
    %62 = arith.addf %56, %61 : vector<64x128xf32>
    %c3_53 = arith.constant 3 : index
    %c0_54 = arith.constant 0 : index
    %c0_55 = arith.constant 0 : index
    %c0_56 = arith.constant 0 : index
    %63 = vector.load %arg10[%c3_53, %c0_54, %c0_55, %c0_56] : memref<4x9x9x64xbf16, #tpu.memory_space<vmem>>, vector<1x8x8x64xbf16>
    %64 = vector.shape_cast %63 : vector<1x8x8x64xbf16> to vector<8x8x64xbf16>
    %65 = vector.shape_cast %64 : vector<8x8x64xbf16> to vector<64x64xbf16>
    %c256 = arith.constant 256 : index
    %c0_57 = arith.constant 0 : index
    %66 = vector.load %arg3[%c256, %c0_57] : memref<576x128xbf16, #tpu.memory_space<vmem>>, vector<64x128xbf16>
    %cst_58 = arith.constant dense<0.000000e+00> : vector<64x128xf32>
    %67 = tpu.matmul %65, %66, %cst_58 {dimension_numbers = #tpu.dot_dimension_numbers<[1], [0], [0], [1], [0, 0, 1, 1], [], []>} : vector<64x64xbf16>, vector<64x128xbf16>, vector<64x128xf32> -> vector<64x128xf32>
    %68 = arith.addf %62, %67 : vector<64x128xf32>
    %c2_59 = arith.constant 2 : index
    %c0_60 = arith.constant 0 : index
    %c1_61 = arith.constant 1 : index
    %c0_62 = arith.constant 0 : index
    %69 = vector.load %arg10[%c2_59, %c0_60, %c1_61, %c0_62] : memref<4x9x9x64xbf16, #tpu.memory_space<vmem>>, vector<1x8x8x64xbf16>
    %70 = vector.shape_cast %69 : vector<1x8x8x64xbf16> to vector<8x8x64xbf16>
    %71 = vector.shape_cast %70 : vector<8x8x64xbf16> to vector<64x64xbf16>
    %c320 = arith.constant 320 : index
    %c0_63 = arith.constant 0 : index
    %72 = vector.load %arg3[%c320, %c0_63] : memref<576x128xbf16, #tpu.memory_space<vmem>>, vector<64x128xbf16>
    %cst_64 = arith.constant dense<0.000000e+00> : vector<64x128xf32>
    %73 = tpu.matmul %71, %72, %cst_64 {dimension_numbers = #tpu.dot_dimension_numbers<[1], [0], [0], [1], [0, 0, 1, 1], [], []>} : vector<64x64xbf16>, vector<64x128xbf16>, vector<64x128xf32> -> vector<64x128xf32>
    %74 = arith.addf %68, %73 : vector<64x128xf32>
    %c0_65 = arith.constant 0 : index
    %c1_66 = arith.constant 1 : index
    %c0_67 = arith.constant 0 : index
    %c0_68 = arith.constant 0 : index
    %75 = vector.load %arg10[%c0_65, %c1_66, %c0_67, %c0_68] : memref<4x9x9x64xbf16, #tpu.memory_space<vmem>>, vector<1x8x8x64xbf16>
    %76 = vector.shape_cast %75 : vector<1x8x8x64xbf16> to vector<8x8x64xbf16>
    %77 = vector.shape_cast %76 : vector<8x8x64xbf16> to vector<64x64xbf16>
    %c384 = arith.constant 384 : index
    %c0_69 = arith.constant 0 : index
    %78 = vector.load %arg3[%c384, %c0_69] : memref<576x128xbf16, #tpu.memory_space<vmem>>, vector<64x128xbf16>
    %cst_70 = arith.constant dense<0.000000e+00> : vector<64x128xf32>
    %79 = tpu.matmul %77, %78, %cst_70 {dimension_numbers = #tpu.dot_dimension_numbers<[1], [0], [0], [1], [0, 0, 1, 1], [], []>} : vector<64x64xbf16>, vector<64x128xbf16>, vector<64x128xf32> -> vector<64x128xf32>
    %80 = arith.addf %74, %79 : vector<64x128xf32>
    %c1_71 = arith.constant 1 : index
    %c1_72 = arith.constant 1 : index
    %c0_73 = arith.constant 0 : index
    %c0_74 = arith.constant 0 : index
    %81 = vector.load %arg10[%c1_71, %c1_72, %c0_73, %c0_74] : memref<4x9x9x64xbf16, #tpu.memory_space<vmem>>, vector<1x8x8x64xbf16>
    %82 = vector.shape_cast %81 : vector<1x8x8x64xbf16> to vector<8x8x64xbf16>
    %83 = vector.shape_cast %82 : vector<8x8x64xbf16> to vector<64x64xbf16>
    %c448 = arith.constant 448 : index
    %c0_75 = arith.constant 0 : index
    %84 = vector.load %arg3[%c448, %c0_75] : memref<576x128xbf16, #tpu.memory_space<vmem>>, vector<64x128xbf16>
    %cst_76 = arith.constant dense<0.000000e+00> : vector<64x128xf32>
    %85 = tpu.matmul %83, %84, %cst_76 {dimension_numbers = #tpu.dot_dimension_numbers<[1], [0], [0], [1], [0, 0, 1, 1], [], []>} : vector<64x64xbf16>, vector<64x128xbf16>, vector<64x128xf32> -> vector<64x128xf32>
    %86 = arith.addf %80, %85 : vector<64x128xf32>
    %c0_77 = arith.constant 0 : index
    %c1_78 = arith.constant 1 : index
    %c1_79 = arith.constant 1 : index
    %c0_80 = arith.constant 0 : index
    %87 = vector.load %arg10[%c0_77, %c1_78, %c1_79, %c0_80] : memref<4x9x9x64xbf16, #tpu.memory_space<vmem>>, vector<1x8x8x64xbf16>
    %88 = vector.shape_cast %87 : vector<1x8x8x64xbf16> to vector<8x8x64xbf16>
    %89 = vector.shape_cast %88 : vector<8x8x64xbf16> to vector<64x64xbf16>
    %c512 = arith.constant 512 : index
    %c0_81 = arith.constant 0 : index
    %90 = vector.load %arg3[%c512, %c0_81] : memref<576x128xbf16, #tpu.memory_space<vmem>>, vector<64x128xbf16>
    %cst_82 = arith.constant dense<0.000000e+00> : vector<64x128xf32>
    %91 = tpu.matmul %89, %90, %cst_82 {dimension_numbers = #tpu.dot_dimension_numbers<[1], [0], [0], [1], [0, 0, 1, 1], [], []>} : vector<64x64xbf16>, vector<64x128xbf16>, vector<64x128xf32> -> vector<64x128xf32>
    %92 = arith.addf %86, %91 : vector<64x128xf32>
    %c0_83 = arith.constant 0 : index
    %c0_84 = arith.constant 0 : index
    %93 = vector.load %arg6[%c0_83, %c0_84] : memref<1x128xf32, #tpu.memory_space<vmem>>, vector<1x128xf32>
    %94 = vector.broadcast %93 : vector<1x128xf32> to vector<64x128xf32>
    %95 = arith.addf %92, %94 : vector<64x128xf32>
    %cst_85 = arith.constant 0.000000e+00 : f32
    %96 = vector.broadcast %cst_85 : f32 to vector<64x128xf32>
    %97 = arith.subf %96, %95 : vector<64x128xf32>
    %98 = math.exp %97 : vector<64x128xf32>
    %cst_86 = arith.constant 1.000000e+00 : f32
    %99 = vector.broadcast %cst_86 : f32 to vector<64x128xf32>
    %100 = arith.addf %99, %98 : vector<64x128xf32>
    %cst_87 = arith.constant 1.000000e+00 : f32
    %101 = vector.broadcast %cst_87 : f32 to vector<64x128xf32>
    %102 = arith.divf %101, %100 : vector<64x128xf32>
    %103 = arith.mulf %95, %102 : vector<64x128xf32>
    %c0_88 = arith.constant 0 : index
    %c0_89 = arith.constant 0 : index
    %104 = vector.load %arg8[%c0_88, %c0_89] : memref<64x64xbf16, #tpu.memory_space<vmem>>, vector<64x64xbf16>
    %105 = arith.truncf %103 : vector<64x128xf32> to vector<64x128xbf16>
    %cst_90 = arith.constant dense<0.000000e+00> : vector<64x128xf32>
    %106 = tpu.matmul %104, %105, %cst_90 {dimension_numbers = #tpu.dot_dimension_numbers<[1], [0], [0], [1], [0, 0, 1, 1], [], []>} : vector<64x64xbf16>, vector<64x128xbf16>, vector<64x128xf32> -> vector<64x128xf32>
    %107 = arith.truncf %106 : vector<64x128xf32> to vector<64x128xbf16>
    %cst_91 = arith.constant 0.000000e+00 : bf16
    %108 = vector.broadcast %cst_91 : bf16 to vector<4x5x5x128xbf16>
    %c0_92 = arith.constant 0 : index
    %c0_93 = arith.constant 0 : index
    %c0_94 = arith.constant 0 : index
    %c0_95 = arith.constant 0 : index
    %109 = vector.load %arg11[%c0_92, %c0_93, %c0_94, %c0_95] : memref<4x5x5x128xbf16, #tpu.memory_space<vmem>>, vector<4x5x5x128xbf16>
    tpu.vector_store %arg11[%c0_92, %c0_93, %c0_94, %c0_95], %108 {strides = array<i32>} : memref<4x5x5x128xbf16, #tpu.memory_space<vmem>>, vector<4x5x5x128xbf16>,
    %110 = vector.extract_strided_slice %107 {offsets = [0, 0], sizes = [16, 128], strides = [1, 1]} : vector<64x128xbf16> to vector<16x128xbf16>
    %111 = vector.shape_cast %110 : vector<16x128xbf16> to vector<4x4x128xbf16>
    %c0_96 = arith.constant 0 : index
    %c1_97 = arith.constant 1 : index
    %c1_98 = arith.constant 1 : index
    %c0_99 = arith.constant 0 : index
    %112 = vector.load %arg11[%c0_96, %c1_97, %c1_98, %c0_99] : memref<4x5x5x128xbf16, #tpu.memory_space<vmem>>, vector<1x4x4x128xbf16>
    %113 = vector.shape_cast %112 : vector<1x4x4x128xbf16> to vector<4x4x128xbf16>
    %114 = vector.shape_cast %111 : vector<4x4x128xbf16> to vector<1x4x4x128xbf16>
    tpu.vector_store %arg11[%c0_96, %c1_97, %c1_98, %c0_99], %114 {strides = array<i32>} : memref<4x5x5x128xbf16, #tpu.memory_space<vmem>>, vector<1x4x4x128xbf16>,
    %115 = vector.extract_strided_slice %107 {offsets = [16, 0], sizes = [16, 128], strides = [1, 1]} : vector<64x128xbf16> to vector<16x128xbf16>
    %116 = vector.shape_cast %115 : vector<16x128xbf16> to vector<4x4x128xbf16>
    %c1_100 = arith.constant 1 : index
    %c1_101 = arith.constant 1 : index
    %c0_102 = arith.constant 0 : index
    %c0_103 = arith.constant 0 : index
    %117 = vector.load %arg11[%c1_100, %c1_101, %c0_102, %c0_103] : memref<4x5x5x128xbf16, #tpu.memory_space<vmem>>, vector<1x4x4x128xbf16>
    %118 = vector.shape_cast %117 : vector<1x4x4x128xbf16> to vector<4x4x128xbf16>
    %119 = vector.shape_cast %116 : vector<4x4x128xbf16> to vector<1x4x4x128xbf16>
    tpu.vector_store %arg11[%c1_100, %c1_101, %c0_102, %c0_103], %119 {strides = array<i32>} : memref<4x5x5x128xbf16, #tpu.memory_space<vmem>>, vector<1x4x4x128xbf16>,
    %120 = vector.extract_strided_slice %107 {offsets = [32, 0], sizes = [16, 128], strides = [1, 1]} : vector<64x128xbf16> to vector<16x128xbf16>
    %121 = vector.shape_cast %120 : vector<16x128xbf16> to vector<4x4x128xbf16>
    %c2_104 = arith.constant 2 : index
    %c0_105 = arith.constant 0 : index
    %c1_106 = arith.constant 1 : index
    %c0_107 = arith.constant 0 : index
    %122 = vector.load %arg11[%c2_104, %c0_105, %c1_106, %c0_107] : memref<4x5x5x128xbf16, #tpu.memory_space<vmem>>, vector<1x4x4x128xbf16>
    %123 = vector.shape_cast %122 : vector<1x4x4x128xbf16> to vector<4x4x128xbf16>
    %124 = vector.shape_cast %121 : vector<4x4x128xbf16> to vector<1x4x4x128xbf16>
    tpu.vector_store %arg11[%c2_104, %c0_105, %c1_106, %c0_107], %124 {strides = array<i32>} : memref<4x5x5x128xbf16, #tpu.memory_space<vmem>>, vector<1x4x4x128xbf16>,
    %125 = vector.extract_strided_slice %107 {offsets = [48, 0], sizes = [16, 128], strides = [1, 1]} : vector<64x128xbf16> to vector<16x128xbf16>
    %126 = vector.shape_cast %125 : vector<16x128xbf16> to vector<4x4x128xbf16>
    %c3_108 = arith.constant 3 : index
    %c0_109 = arith.constant 0 : index
    %c0_110 = arith.constant 0 : index
    %c0_111 = arith.constant 0 : index
    %127 = vector.load %arg11[%c3_108, %c0_109, %c0_110, %c0_111] : memref<4x5x5x128xbf16, #tpu.memory_space<vmem>>, vector<1x4x4x128xbf16>
    %128 = vector.shape_cast %127 : vector<1x4x4x128xbf16> to vector<4x4x128xbf16>
    %129 = vector.shape_cast %126 : vector<4x4x128xbf16> to vector<1x4x4x128xbf16>
    tpu.vector_store %arg11[%c3_108, %c0_109, %c0_110, %c0_111], %129 {strides = array<i32>} : memref<4x5x5x128xbf16, #tpu.memory_space<vmem>>, vector<1x4x4x128xbf16>,
    %cst_112 = arith.constant 0.000000e+00 : f32
    %130 = vector.broadcast %cst_112 : f32 to vector<16x256xf32>
    %c0_113 = arith.constant 0 : index
    %c0_114 = arith.constant 0 : index
    %c0_115 = arith.constant 0 : index
    %c0_116 = arith.constant 0 : index
    %131 = vector.load %arg11[%c0_113, %c0_114, %c0_115, %c0_116] : memref<4x5x5x128xbf16, #tpu.memory_space<vmem>>, vector<1x4x4x128xbf16>
    %132 = vector.shape_cast %131 : vector<1x4x4x128xbf16> to vector<4x4x128xbf16>
    %133 = vector.shape_cast %132 : vector<4x4x128xbf16> to vector<16x128xbf16>
    %c0_117 = arith.constant 0 : index
    %c0_118 = arith.constant 0 : index
    %134 = vector.load %arg4[%c0_117, %c0_118] : memref<1152x256xbf16, #tpu.memory_space<vmem>>, vector<128x256xbf16>
    %cst_119 = arith.constant dense<0.000000e+00> : vector<16x256xf32>
    %135 = tpu.matmul %133, %134, %cst_119 {dimension_numbers = #tpu.dot_dimension_numbers<[1], [0], [0], [1], [0, 0, 1, 1], [], []>} : vector<16x128xbf16>, vector<128x256xbf16>, vector<16x256xf32> -> vector<16x256xf32>
    %136 = arith.addf %130, %135 : vector<16x256xf32>
    %c1_120 = arith.constant 1 : index
    %c0_121 = arith.constant 0 : index
    %c0_122 = arith.constant 0 : index
    %c0_123 = arith.constant 0 : index
    %137 = vector.load %arg11[%c1_120, %c0_121, %c0_122, %c0_123] : memref<4x5x5x128xbf16, #tpu.memory_space<vmem>>, vector<1x4x4x128xbf16>
    %138 = vector.shape_cast %137 : vector<1x4x4x128xbf16> to vector<4x4x128xbf16>
    %139 = vector.shape_cast %138 : vector<4x4x128xbf16> to vector<16x128xbf16>
    %c128_124 = arith.constant 128 : index
    %c0_125 = arith.constant 0 : index
    %140 = vector.load %arg4[%c128_124, %c0_125] : memref<1152x256xbf16, #tpu.memory_space<vmem>>, vector<128x256xbf16>
    %cst_126 = arith.constant dense<0.000000e+00> : vector<16x256xf32>
    %141 = tpu.matmul %139, %140, %cst_126 {dimension_numbers = #tpu.dot_dimension_numbers<[1], [0], [0], [1], [0, 0, 1, 1], [], []>} : vector<16x128xbf16>, vector<128x256xbf16>, vector<16x256xf32> -> vector<16x256xf32>
    %142 = arith.addf %136, %141 : vector<16x256xf32>
    %c0_127 = arith.constant 0 : index
    %c0_128 = arith.constant 0 : index
    %c1_129 = arith.constant 1 : index
    %c0_130 = arith.constant 0 : index
    %143 = vector.load %arg11[%c0_127, %c0_128, %c1_129, %c0_130] : memref<4x5x5x128xbf16, #tpu.memory_space<vmem>>, vector<1x4x4x128xbf16>
    %144 = vector.shape_cast %143 : vector<1x4x4x128xbf16> to vector<4x4x128xbf16>
    %145 = vector.shape_cast %144 : vector<4x4x128xbf16> to vector<16x128xbf16>
    %c256_131 = arith.constant 256 : index
    %c0_132 = arith.constant 0 : index
    %146 = vector.load %arg4[%c256_131, %c0_132] : memref<1152x256xbf16, #tpu.memory_space<vmem>>, vector<128x256xbf16>
    %cst_133 = arith.constant dense<0.000000e+00> : vector<16x256xf32>
    %147 = tpu.matmul %145, %146, %cst_133 {dimension_numbers = #tpu.dot_dimension_numbers<[1], [0], [0], [1], [0, 0, 1, 1], [], []>} : vector<16x128xbf16>, vector<128x256xbf16>, vector<16x256xf32> -> vector<16x256xf32>
    %148 = arith.addf %142, %147 : vector<16x256xf32>
    %c2_134 = arith.constant 2 : index
    %c0_135 = arith.constant 0 : index
    %c0_136 = arith.constant 0 : index
    %c0_137 = arith.constant 0 : index
    %149 = vector.load %arg11[%c2_134, %c0_135, %c0_136, %c0_137] : memref<4x5x5x128xbf16, #tpu.memory_space<vmem>>, vector<1x4x4x128xbf16>
    %150 = vector.shape_cast %149 : vector<1x4x4x128xbf16> to vector<4x4x128xbf16>
    %151 = vector.shape_cast %150 : vector<4x4x128xbf16> to vector<16x128xbf16>
    %c384_138 = arith.constant 384 : index
    %c0_139 = arith.constant 0 : index
    %152 = vector.load %arg4[%c384_138, %c0_139] : memref<1152x256xbf16, #tpu.memory_space<vmem>>, vector<128x256xbf16>
    %cst_140 = arith.constant dense<0.000000e+00> : vector<16x256xf32>
    %153 = tpu.matmul %151, %152, %cst_140 {dimension_numbers = #tpu.dot_dimension_numbers<[1], [0], [0], [1], [0, 0, 1, 1], [], []>} : vector<16x128xbf16>, vector<128x256xbf16>, vector<16x256xf32> -> vector<16x256xf32>
    %154 = arith.addf %148, %153 : vector<16x256xf32>
    %c3_141 = arith.constant 3 : index
    %c0_142 = arith.constant 0 : index
    %c0_143 = arith.constant 0 : index
    %c0_144 = arith.constant 0 : index
    %155 = vector.load %arg11[%c3_141, %c0_142, %c0_143, %c0_144] : memref<4x5x5x128xbf16, #tpu.memory_space<vmem>>, vector<1x4x4x128xbf16>
    %156 = vector.shape_cast %155 : vector<1x4x4x128xbf16> to vector<4x4x128xbf16>
    %157 = vector.shape_cast %156 : vector<4x4x128xbf16> to vector<16x128xbf16>
    %c512_145 = arith.constant 512 : index
    %c0_146 = arith.constant 0 : index
    %158 = vector.load %arg4[%c512_145, %c0_146] : memref<1152x256xbf16, #tpu.memory_space<vmem>>, vector<128x256xbf16>
    %cst_147 = arith.constant dense<0.000000e+00> : vector<16x256xf32>
    %159 = tpu.matmul %157, %158, %cst_147 {dimension_numbers = #tpu.dot_dimension_numbers<[1], [0], [0], [1], [0, 0, 1, 1], [], []>} : vector<16x128xbf16>, vector<128x256xbf16>, vector<16x256xf32> -> vector<16x256xf32>
    %160 = arith.addf %154, %159 : vector<16x256xf32>
    %c2_148 = arith.constant 2 : index
    %c0_149 = arith.constant 0 : index
    %c1_150 = arith.constant 1 : index
    %c0_151 = arith.constant 0 : index
    %161 = vector.load %arg11[%c2_148, %c0_149, %c1_150, %c0_151] : memref<4x5x5x128xbf16, #tpu.memory_space<vmem>>, vector<1x4x4x128xbf16>
    %162 = vector.shape_cast %161 : vector<1x4x4x128xbf16> to vector<4x4x128xbf16>
    %163 = vector.shape_cast %162 : vector<4x4x128xbf16> to vector<16x128xbf16>
    %c640 = arith.constant 640 : index
    %c0_152 = arith.constant 0 : index
    %164 = vector.load %arg4[%c640, %c0_152] : memref<1152x256xbf16, #tpu.memory_space<vmem>>, vector<128x256xbf16>
    %cst_153 = arith.constant dense<0.000000e+00> : vector<16x256xf32>
    %165 = tpu.matmul %163, %164, %cst_153 {dimension_numbers = #tpu.dot_dimension_numbers<[1], [0], [0], [1], [0, 0, 1, 1], [], []>} : vector<16x128xbf16>, vector<128x256xbf16>, vector<16x256xf32> -> vector<16x256xf32>
    %166 = arith.addf %160, %165 : vector<16x256xf32>
    %c0_154 = arith.constant 0 : index
    %c1_155 = arith.constant 1 : index
    %c0_156 = arith.constant 0 : index
    %c0_157 = arith.constant 0 : index
    %167 = vector.load %arg11[%c0_154, %c1_155, %c0_156, %c0_157] : memref<4x5x5x128xbf16, #tpu.memory_space<vmem>>, vector<1x4x4x128xbf16>
    %168 = vector.shape_cast %167 : vector<1x4x4x128xbf16> to vector<4x4x128xbf16>
    %169 = vector.shape_cast %168 : vector<4x4x128xbf16> to vector<16x128xbf16>
    %c768 = arith.constant 768 : index
    %c0_158 = arith.constant 0 : index
    %170 = vector.load %arg4[%c768, %c0_158] : memref<1152x256xbf16, #tpu.memory_space<vmem>>, vector<128x256xbf16>
    %cst_159 = arith.constant dense<0.000000e+00> : vector<16x256xf32>
    %171 = tpu.matmul %169, %170, %cst_159 {dimension_numbers = #tpu.dot_dimension_numbers<[1], [0], [0], [1], [0, 0, 1, 1], [], []>} : vector<16x128xbf16>, vector<128x256xbf16>, vector<16x256xf32> -> vector<16x256xf32>
    %172 = arith.addf %166, %171 : vector<16x256xf32>
    %c1_160 = arith.constant 1 : index
    %c1_161 = arith.constant 1 : index
    %c0_162 = arith.constant 0 : index
    %c0_163 = arith.constant 0 : index
    %173 = vector.load %arg11[%c1_160, %c1_161, %c0_162, %c0_163] : memref<4x5x5x128xbf16, #tpu.memory_space<vmem>>, vector<1x4x4x128xbf16>
    %174 = vector.shape_cast %173 : vector<1x4x4x128xbf16> to vector<4x4x128xbf16>
    %175 = vector.shape_cast %174 : vector<4x4x128xbf16> to vector<16x128xbf16>
    %c896 = arith.constant 896 : index
    %c0_164 = arith.constant 0 : index
    %176 = vector.load %arg4[%c896, %c0_164] : memref<1152x256xbf16, #tpu.memory_space<vmem>>, vector<128x256xbf16>
    %cst_165 = arith.constant dense<0.000000e+00> : vector<16x256xf32>
    %177 = tpu.matmul %175, %176, %cst_165 {dimension_numbers = #tpu.dot_dimension_numbers<[1], [0], [0], [1], [0, 0, 1, 1], [], []>} : vector<16x128xbf16>, vector<128x256xbf16>, vector<16x256xf32> -> vector<16x256xf32>
    %178 = arith.addf %172, %177 : vector<16x256xf32>
    %c0_166 = arith.constant 0 : index
    %c1_167 = arith.constant 1 : index
    %c1_168 = arith.constant 1 : index
    %c0_169 = arith.constant 0 : index
    %179 = vector.load %arg11[%c0_166, %c1_167, %c1_168, %c0_169] : memref<4x5x5x128xbf16, #tpu.memory_space<vmem>>, vector<1x4x4x128xbf16>
    %180 = vector.shape_cast %179 : vector<1x4x4x128xbf16> to vector<4x4x128xbf16>
    %181 = vector.shape_cast %180 : vector<4x4x128xbf16> to vector<16x128xbf16>
    %c1024 = arith.constant 1024 : index
    %c0_170 = arith.constant 0 : index
    %182 = vector.load %arg4[%c1024, %c0_170] : memref<1152x256xbf16, #tpu.memory_space<vmem>>, vector<128x256xbf16>
    %cst_171 = arith.constant dense<0.000000e+00> : vector<16x256xf32>
    %183 = tpu.matmul %181, %182, %cst_171 {dimension_numbers = #tpu.dot_dimension_numbers<[1], [0], [0], [1], [0, 0, 1, 1], [], []>} : vector<16x128xbf16>, vector<128x256xbf16>, vector<16x256xf32> -> vector<16x256xf32>
    %184 = arith.addf %178, %183 : vector<16x256xf32>
    %c0_172 = arith.constant 0 : index
    %c0_173 = arith.constant 0 : index
    %185 = vector.load %arg7[%c0_172, %c0_173] : memref<1x256xf32, #tpu.memory_space<vmem>>, vector<1x256xf32>
    %186 = vector.broadcast %185 : vector<1x256xf32> to vector<16x256xf32>
    %187 = arith.addf %184, %186 : vector<16x256xf32>
    %cst_174 = arith.constant 0.000000e+00 : f32
    %188 = vector.broadcast %cst_174 : f32 to vector<16x256xf32>
    %189 = arith.subf %188, %187 : vector<16x256xf32>
    %190 = math.exp %189 : vector<16x256xf32>
    %cst_175 = arith.constant 1.000000e+00 : f32
    %191 = vector.broadcast %cst_175 : f32 to vector<16x256xf32>
    %192 = arith.addf %191, %190 : vector<16x256xf32>
    %cst_176 = arith.constant 1.000000e+00 : f32
    %193 = vector.broadcast %cst_176 : f32 to vector<16x256xf32>
    %194 = arith.divf %193, %192 : vector<16x256xf32>
    %195 = arith.mulf %187, %194 : vector<16x256xf32>
    %c0_177 = arith.constant 0 : index
    %c0_178 = arith.constant 0 : index
    %c0_179 = arith.constant 0 : index
    %196 = vector.load %arg9[%c0_177, %c0_178, %c0_179] : memref<1x16x256xf32, #tpu.memory_space<vmem>>, vector<1x16x256xf32>
    %197 = vector.shape_cast %196 : vector<1x16x256xf32> to vector<16x256xf32>
    %198 = vector.shape_cast %195 : vector<16x256xf32> to vector<1x16x256xf32>
    tpu.vector_store %arg9[%c0_177, %c0_178, %c0_179], %198 {strides = array<i32>} : memref<1x16x256xf32, #tpu.memory_space<vmem>>, vector<1x16x256xf32>,
    return
  }
  func.func @transform_0(%arg0: i32) -> (i32, i32, i32) {
    %c0_i32 = arith.constant 0 : i32
    %c0_i32_0 = arith.constant 0 : i32
    %c0_i32_1 = arith.constant 0 : i32
    return %arg0, %c0_i32, %c0_i32_0 : i32, i32, i32
  }
  func.func @transform_1(%arg0: i32) -> (i32, i32) {
    %c0_i32 = arith.constant 0 : i32
    %c0_i32_0 = arith.constant 0 : i32
    %c0_i32_1 = arith.constant 0 : i32
    return %c0_i32, %c0_i32_0 : i32, i32
  }
  func.func @transform_2(%arg0: i32) -> (i32, i32) {
    %c0_i32 = arith.constant 0 : i32
    %c0_i32_0 = arith.constant 0 : i32
    %c0_i32_1 = arith.constant 0 : i32
    return %c0_i32, %c0_i32_0 : i32, i32
  }
  func.func @transform_3(%arg0: i32) -> (i32, i32) {
    %c0_i32 = arith.constant 0 : i32
    %c0_i32_0 = arith.constant 0 : i32
    %c0_i32_1 = arith.constant 0 : i32
    return %c0_i32, %c0_i32_0 : i32, i32
  }
  func.func @transform_4(%arg0: i32) -> (i32, i32) {
    %c0_i32 = arith.constant 0 : i32
    %c0_i32_0 = arith.constant 0 : i32
    %c0_i32_1 = arith.constant 0 : i32
    return %c0_i32, %c0_i32_0 : i32, i32
  }
  func.func @transform_5(%arg0: i32) -> (i32, i32) {
    %c0_i32 = arith.constant 0 : i32
    %c0_i32_0 = arith.constant 0 : i32
    %c0_i32_1 = arith.constant 0 : i32
    return %c0_i32, %c0_i32_0 : i32, i32
  }
  func.func @transform_6(%arg0: i32) -> (i32, i32) {
    %c0_i32 = arith.constant 0 : i32
    %c0_i32_0 = arith.constant 0 : i32
    %c0_i32_1 = arith.constant 0 : i32
    return %c0_i32, %c0_i32_0 : i32, i32
  }
  func.func @transform_7(%arg0: i32) -> (i32, i32) {
    %c0_i32 = arith.constant 0 : i32
    %c0_i32_0 = arith.constant 0 : i32
    %c0_i32_1 = arith.constant 0 : i32
    return %c0_i32, %c0_i32_0 : i32, i32
  }
  func.func @transform_8(%arg0: i32) -> (i32, i32, i32) {
    %c0_i32 = arith.constant 0 : i32
    %c0_i32_0 = arith.constant 0 : i32
    %c0_i32_1 = arith.constant 0 : i32
    return %arg0, %c0_i32, %c0_i32_0 : i32, i32, i32
  }
}

</mosaic_0001>

<llo_original>
// kernel: subencoder_forward.1
$region0: #{subencoder_forward.1}
  #allocation0 [shape = 'u32[]', space=smem, size = 0x4, offset = 0x4, fixed_abs, tag = 'smem constant byte address 0x4 - core index']
  #allocation1 [shape = 'u32[144,128]{1,0:T(1,128)}', space=vmem, size = 0x12000, scoped, tag = 'internal scratch']
  #allocation2 [shape = 'bf16[4,9,9,64]{3,2,1,0:T(8,128)(2,1)}', space=vmem, size = 0x24000, scoped, tag = 'scratch operand']
  #allocation3 [shape = 'bf16[4,5,5,128]{3,2,1,0:T(8,128)(2,1)}', space=vmem, size = 0xa000, scoped, tag = 'scratch operand']
  %s0 = inlined_call_operand.vmem [shape: bf16[2,256,36], index: 0, kind: input, shape index: {}]
  %s1 = inlined_call_operand.vmem [shape: bf16[36,64], index: 1, kind: input, shape index: {}]
  %s2 = inlined_call_operand.vmem [shape: bf16[576,128], index: 2, kind: input, shape index: {}]
  %s3 = inlined_call_operand.vmem [shape: bf16[1152,256], index: 3, kind: input, shape index: {}]
  %s4 = inlined_call_operand.vmem [shape: f32[1,64], index: 4, kind: input, shape index: {}]
  %s5 = inlined_call_operand.vmem [shape: f32[1,128], index: 5, kind: input, shape index: {}]
  %s6 = inlined_call_operand.vmem [shape: f32[1,256], index: 6, kind: input, shape index: {}]
  %s7 = inlined_call_operand.vmem [shape: bf16[64,64], index: 7, kind: input, shape index: {}]
  %s8 = inlined_call_operand.vmem [shape: f32[2,16,256], index: 8, kind: output, shape index: {}]
  %s9 = sld [smem:[#allocation0]]
  $region65: #{subencoder_forward.1} parent=0
    _
  %s11 = ssub.s32 1, %s9
  %s12 = scalar_select 0, %s11, %s9
  loop: start=0, step=1, limit=4
  $region2: #{subencoder_forward.1} parent=0 // loop_pre_header
    _
  $region3: #{subencoder_forward.1} parent=0 // loop_header
    %s14 = sphi 0, %s18
    %p15 = scmp.ge.s32.totalorder %s14, 4
    %s24 = sphi 0, %s26
    %s27 = sphi 0, %s24
    %s28 = sphi 0, %s27
    %s44 = sphi 0, %s28
    %s48 = sphi 0, %s48
    %s50 = sphi 0, %s48
    %s51 = sphi 0, %s50
    %s65 = sphi 0, %s51
    %s69 = sphi 0, %s69
    %s71 = sphi 0, %s69
    %s72 = sphi 0, %s71
    %s86 = sphi 0, %s72
    %s90 = sphi 0, %s90
    %s92 = sphi 0, %s90
    %s93 = sphi 0, %s92
    %s107 = sphi 0, %s93
    %s111 = sphi 0, %s111
    %s113 = sphi 0, %s111
    %s114 = sphi 0, %s113
    %s128 = sphi 0, %s114
    %s132 = sphi 0, %s132
    %s134 = sphi 0, %s132
    %s135 = sphi 0, %s134
    %s149 = sphi 0, %s135
    %s153 = sphi 0, %s153
    %s155 = sphi 0, %s153
    %s156 = sphi 0, %s155
    %s170 = sphi 0, %s156
    %s174 = sphi 0, %s174
    %s176 = sphi 0, %s174
    %s177 = sphi 0, %s176
    %s191 = sphi 0, %s177
    %s197 = sphi 0, %s199
    %s200 = sphi 0, %s197
    %s201 = sphi 0, %s200
    %s217 = sphi 0, %s201
  $region4: #{subencoder_forward.1} parent=0 // loop_header_branch
    %17 = sbr.rel (%p15) target = $region8
  $region5: #{subencoder_forward.1} parent=0 // loop_body
    %s19 = ssub.s32 %s14, 1
    %s20 = ssub.s32 %s14, 2
    %s21 = sadd.s32 %s14, 1
    %s22 = ssub.s32 %s14, %s21
    %p23 = scmp.eq.s32.totalorder %s22, 0
    %s25 = sadd.s32 %s24, 1
    %s26 = scalar_select %p23, %s24, %s25
    %p29 = pneg %p23
    %p30 = scmp.eq.s32.totalorder %s14, 1
    %p31 = por %p29, %p30
    %p32 = scmp.ne.s32.totalorder %s24, %s27
    %p33 = scmp.eq.s32.totalorder %s14, 0
    %p34 = por %p32, %p33
    %p35 = scmp.ne.s32.totalorder %s24, %s27
    %p36 = scmp.eq.s32.totalorder %s19, 1
    %p37 = por %p35, %p36
    %p38 = scmp.ne.s32.totalorder %s27, %s28
    %p39 = scmp.eq.s32.totalorder %s19, 0
    %p40 = por %p38, %p39
    %p41 = scmp.ne.s32.totalorder %s27, %s28
    %p42 = scmp.eq.s32.totalorder %s20, 1
    %p43 = por %p41, %p42
    %p45 = scmp.ne.s32.totalorder %s28, %s44
    %p46 = scmp.eq.s32.totalorder %s20, 0
    %p47 = por %p45, %p46
    %s49 = sadd.s32 %s48, 1
    %p52 = scmp.eq.s32.totalorder %s14, 1
    %p53 = scmp.ne.s32.totalorder %s48, %s50
    %p54 = scmp.eq.s32.totalorder %s14, 0
    %p55 = por %p53, %p54
    %p56 = scmp.ne.s32.totalorder %s48, %s50
    %p57 = scmp.eq.s32.totalorder %s19, 1
    %p58 = por %p56, %p57
    %p59 = scmp.ne.s32.totalorder %s50, %s51
    %p60 = scmp.eq.s32.totalorder %s19, 0
    %p61 = por %p59, %p60
    %p62 = scmp.ne.s32.totalorder %s50, %s51
    %p63 = scmp.eq.s32.totalorder %s20, 1
    %p64 = por %p62, %p63
    %p66 = scmp.ne.s32.totalorder %s51, %s65
    %p67 = scmp.eq.s32.totalorder %s20, 0
    %p68 = por %p66, %p67
    %s70 = sadd.s32 %s69, 1
    %p73 = scmp.eq.s32.totalorder %s14, 1
    %p74 = scmp.ne.s32.totalorder %s69, %s71
    %p75 = scmp.eq.s32.totalorder %s14, 0
    %p76 = por %p74, %p75
    %p77 = scmp.ne.s32.totalorder %s69, %s71
    %p78 = scmp.eq.s32.totalorder %s19, 1
    %p79 = por %p77, %p78
    %p80 = scmp.ne.s32.totalorder %s71, %s72
    %p81 = scmp.eq.s32.totalorder %s19, 0
    %p82 = por %p80, %p81
    %p83 = scmp.ne.s32.totalorder %s71, %s72
    %p84 = scmp.eq.s32.totalorder %s20, 1
    %p85 = por %p83, %p84
    %p87 = scmp.ne.s32.totalorder %s72, %s86
    %p88 = scmp.eq.s32.totalorder %s20, 0
    %p89 = por %p87, %p88
    %s91 = sadd.s32 %s90, 1
    %p94 = scmp.eq.s32.totalorder %s14, 1
    %p95 = scmp.ne.s32.totalorder %s90, %s92
    %p96 = scmp.eq.s32.totalorder %s14, 0
    %p97 = por %p95, %p96
    %p98 = scmp.ne.s32.totalorder %s90, %s92
    %p99 = scmp.eq.s32.totalorder %s19, 1
    %p100 = por %p98, %p99
    %p101 = scmp.ne.s32.totalorder %s92, %s93
    %p102 = scmp.eq.s32.totalorder %s19, 0
    %p103 = por %p101, %p102
    %p104 = scmp.ne.s32.totalorder %s92, %s93
    %p105 = scmp.eq.s32.totalorder %s20, 1
    %p106 = por %p104, %p105
    %p108 = scmp.ne.s32.totalorder %s93, %s107
    %p109 = scmp.eq.s32.totalorder %s20, 0
    %p110 = por %p108, %p109
    %s112 = sadd.s32 %s111, 1
    %p115 = scmp.eq.s32.totalorder %s14, 1
    %p116 = scmp.ne.s32.totalorder %s111, %s113
    %p117 = scmp.eq.s32.totalorder %s14, 0
    %p118 = por %p116, %p117
    %p119 = scmp.ne.s32.totalorder %s111, %s113
    %p120 = scmp.eq.s32.totalorder %s19, 1
    %p121 = por %p119, %p120
    %p122 = scmp.ne.s32.totalorder %s113, %s114
    %p123 = scmp.eq.s32.totalorder %s19, 0
    %p124 = por %p122, %p123
    %p125 = scmp.ne.s32.totalorder %s113, %s114
    %p126 = scmp.eq.s32.totalorder %s20, 1
    %p127 = por %p125, %p126
    %p129 = scmp.ne.s32.totalorder %s114, %s128
    %p130 = scmp.eq.s32.totalorder %s20, 0
    %p131 = por %p129, %p130
    %s133 = sadd.s32 %s132, 1
    %p136 = scmp.eq.s32.totalorder %s14, 1
    %p137 = scmp.ne.s32.totalorder %s132, %s134
    %p138 = scmp.eq.s32.totalorder %s14, 0
    %p139 = por %p137, %p138
    %p140 = scmp.ne.s32.totalorder %s132, %s134
    %p141 = scmp.eq.s32.totalorder %s19, 1
    %p142 = por %p140, %p141
    %p143 = scmp.ne.s32.totalorder %s134, %s135
    %p144 = scmp.eq.s32.totalorder %s19, 0
    %p145 = por %p143, %p144
    %p146 = scmp.ne.s32.totalorder %s134, %s135
    %p147 = scmp.eq.s32.totalorder %s20, 1
    %p148 = por %p146, %p147
    %p150 = scmp.ne.s32.totalorder %s135, %s149
    %p151 = scmp.eq.s32.totalorder %s20, 0
    %p152 = por %p150, %p151
    %s154 = sadd.s32 %s153, 1
    %p157 = scmp.eq.s32.totalorder %s14, 1
    %p158 = scmp.ne.s32.totalorder %s153, %s155
    %p159 = scmp.eq.s32.totalorder %s14, 0
    %p160 = por %p158, %p159
    %p161 = scmp.ne.s32.totalorder %s153, %s155
    %p162 = scmp.eq.s32.totalorder %s19, 1
    %p163 = por %p161, %p162
    %p164 = scmp.ne.s32.totalorder %s155, %s156
    %p165 = scmp.eq.s32.totalorder %s19, 0
    %p166 = por %p164, %p165
    %p167 = scmp.ne.s32.totalorder %s155, %s156
    %p168 = scmp.eq.s32.totalorder %s20, 1
    %p169 = por %p167, %p168
    %p171 = scmp.ne.s32.totalorder %s156, %s170
    %p172 = scmp.eq.s32.totalorder %s20, 0
    %p173 = por %p171, %p172
    %s175 = sadd.s32 %s174, 1
    %p178 = scmp.eq.s32.totalorder %s14, 1
    %p179 = scmp.ne.s32.totalorder %s174, %s176
    %p180 = scmp.eq.s32.totalorder %s14, 0
    %p181 = por %p179, %p180
    %p182 = scmp.ne.s32.totalorder %s174, %s176
    %p183 = scmp.eq.s32.totalorder %s19, 1
    %p184 = por %p182, %p183
    %p185 = scmp.ne.s32.totalorder %s176, %s177
    %p186 = scmp.eq.s32.totalorder %s19, 0
    %p187 = por %p185, %p186
    %p188 = scmp.ne.s32.totalorder %s176, %s177
    %p189 = scmp.eq.s32.totalorder %s20, 1
    %p190 = por %p188, %p189
    %p192 = scmp.ne.s32.totalorder %s177, %s191
    %p193 = scmp.eq.s32.totalorder %s20, 0
    %p194 = por %p192, %p193
    %s195 = ssub.s32 %s14, %s21
    %p196 = scmp.eq.s32.totalorder %s195, 0
    %s198 = sadd.s32 %s197, 1
    %s199 = scalar_select %p196, %s197, %s198
    %p202 = pneg %p196
    %p203 = scmp.eq.s32.totalorder %s14, 1
    %p204 = por %p202, %p203
    %p205 = scmp.ne.s32.totalorder %s197, %s200
    %p206 = scmp.eq.s32.totalorder %s14, 0
    %p207 = por %p205, %p206
    %p208 = scmp.ne.s32.totalorder %s197, %s200
    %p209 = scmp.eq.s32.totalorder %s19, 1
    %p210 = por %p208, %p209
    %p211 = scmp.ne.s32.totalorder %s200, %s201
    %p212 = scmp.eq.s32.totalorder %s19, 0
    %p213 = por %p211, %p212
    %p214 = scmp.ne.s32.totalorder %s200, %s201
    %p215 = scmp.eq.s32.totalorder %s20, 1
    %p216 = por %p214, %p215
    %p218 = scmp.ne.s32.totalorder %s201, %s217
    %p219 = scmp.eq.s32.totalorder %s20, 0
    %p220 = por %p218, %p219
    %p221 = scmp.le.s32.totalorder 1, %s14
    %p222 = scmp.lt.s32.totalorder %s14, 3
    %p223 = pnand %p221, %p222
    %p224 = pneg %p223
    // Predicated region
    $region9: #{subencoder_forward.1} parent=5 // pred_check
      _
    $region10: #{subencoder_forward.1} parent=5 // pred_check_branch
      %226 = sbr.rel (%p223) target = $region12
    $region11: #{subencoder_forward.1} parent=5 // pred_region
      %s227 = ssub.s32 %s14, 1
      // Predicated region
      $region13: #{subencoder_forward.1} parent=11 // pred_check
        %p228 = pneg %p61
      $region14: #{subencoder_forward.1} parent=11 // pred_check_branch
        %230 = sbr.rel (%p228) target = $region16
      $region15: #{subencoder_forward.1} parent=11 // pred_region
        _
      $region16: #{subencoder_forward.1} parent=11 // pred_fallthru
        _
      // Predicated region
      $region17: #{subencoder_forward.1} parent=11 // pred_check
        %p231 = pneg %p82
      $region18: #{subencoder_forward.1} parent=11 // pred_check_branch
        %233 = sbr.rel (%p231) target = $region20
      $region19: #{subencoder_forward.1} parent=11 // pred_region
        _
      $region20: #{subencoder_forward.1} parent=11 // pred_fallthru
        _
      // Predicated region
      $region21: #{subencoder_forward.1} parent=11 // pred_check
        %p234 = pneg %p103
      $region22: #{subencoder_forward.1} parent=11 // pred_check_branch
        %236 = sbr.rel (%p234) target = $region24
      $region23: #{subencoder_forward.1} parent=11 // pred_region
        _
      $region24: #{subencoder_forward.1} parent=11 // pred_fallthru
        _
      // Predicated region
      $region25: #{subencoder_forward.1} parent=11 // pred_check
        %p237 = pneg %p124
      $region26: #{subencoder_forward.1} parent=11 // pred_check_branch
        %239 = sbr.rel (%p237) target = $region28
      $region27: #{subencoder_forward.1} parent=11 // pred_region
        _
      $region28: #{subencoder_forward.1} parent=11 // pred_fallthru
        _
      // Predicated region
      $region29: #{subencoder_forward.1} parent=11 // pred_check
        %p240 = pneg %p145
      $region30: #{subencoder_forward.1} parent=11 // pred_check_branch
        %242 = sbr.rel (%p240) target = $region32
      $region31: #{subencoder_forward.1} parent=11 // pred_region
        _
      $region32: #{subencoder_forward.1} parent=11 // pred_fallthru
        _
      // Predicated region
      $region33: #{subencoder_forward.1} parent=11 // pred_check
        %p243 = pneg %p166
      $region34: #{subencoder_forward.1} parent=11 // pred_check_branch
        %245 = sbr.rel (%p243) target = $region36
      $region35: #{subencoder_forward.1} parent=11 // pred_region
        _
      $region36: #{subencoder_forward.1} parent=11 // pred_fallthru
        _
      // Predicated region
      $region37: #{subencoder_forward.1} parent=11 // pred_check
        %p246 = pneg %p187
      $region38: #{subencoder_forward.1} parent=11 // pred_check_branch
        %248 = sbr.rel (%p246) target = $region40
      $region39: #{subencoder_forward.1} parent=11 // pred_region
        _
      $region40: #{subencoder_forward.1} parent=11 // pred_fallthru
        _
    $region12: #{subencoder_forward.1} parent=5 // pred_fallthru
      _
    %p249 = scmp.lt.s32.totalorder %s14, 2
    // Predicated region
    $region41: #{subencoder_forward.1} parent=5 // pred_check
      %p250 = pneg %p249
    $region42: #{subencoder_forward.1} parent=5 // pred_check_branch
      %252 = sbr.rel (%p250) target = $region44
    $region43: #{subencoder_forward.1} parent=5 // pred_region
      // Predicated region
      $region45: #{subencoder_forward.1} parent=43 // pred_check
        %p253 = pneg %p34
      $region46: #{subencoder_forward.1} parent=43 // pred_check_branch
        %255 = sbr.rel (%p253) target = $region48
      $region47: #{subencoder_forward.1} parent=43 // pred_region
        %p256 = scmp.lt.s32.totalorder %s14, 1
        %s257 = scalar_select %p256, %s14, 1
        %s258 = smul.addr %s257, 32
        %s259 = smul.addr %s258, 4
        %s260 = scalar_lea.vmem %s0, %s259
      $region48: #{subencoder_forward.1} parent=43 // pred_fallthru
        _
    $region44: #{subencoder_forward.1} parent=5 // pred_fallthru
      _
    %p261 = scmp.le.s32.totalorder 1, %s14
    %p262 = scmp.lt.s32.totalorder %s14, 3
    %p263 = pnand %p261, %p262
    %p264 = pneg %p263
    // Predicated region
    $region49: #{subencoder_forward.1} parent=5 // pred_check
      _
    $region50: #{subencoder_forward.1} parent=5 // pred_check_branch
      %266 = sbr.rel (%p263) target = $region52
    $region51: #{subencoder_forward.1} parent=5 // pred_region
      %s267 = ssub.s32 %s14, 1
      %p268 = scmp.lt.s32.totalorder %s19, 1
      %s269 = scalar_select %p268, %s19, 1
      %s270 = smul.addr %s269, 32
      %s271 = smul.addr %s270, 4
      %s272 = scalar_lea.vmem %s0, %s271
      %p273 = pneg %p40
      %p274 = pneg %p37
      %p275 = pneg %p61
      %p276 = pneg %p58
      %p277 = pneg %p82
      %p278 = pneg %p79
      %p279 = pneg %p103
      %p280 = pneg %p100
      %p281 = pneg %p124
      %p282 = pneg %p121
      %p283 = pneg %p145
      %p284 = pneg %p142
      %p285 = pneg %p166
      %p286 = pneg %p163
      %p287 = pneg %p187
      %p288 = pneg %p184
      %p289 = pneg %p213
      %p290 = pneg %p210
      %p291 = scmp.lt.s32.totalorder %s19, 1
      %s292 = scalar_select %p291, %s19, 1
      %s293 = smul.addr %s292, 4
      %s294 = smul.addr %s293, 8
      %s295 = scalar_lea.vmem %s8, %s294
      %p296 = scmp.lt.s32.totalorder %s19, 1
      %s297 = scalar_select %p296, %s19, 1
      %s298 = smul.addr %s297, 32
      %s299 = smul.addr %s298, 4
      %s300 = scalar_lea.vmem %s0, %s299
      %p301 = scmp.lt.s32.totalorder %s19, 1
      %s302 = scalar_select %p301, %s19, 1
      %s303 = smul.addr %s302, 4
      %s304 = smul.addr %s303, 8
      %s305 = scalar_lea.vmem %s8, %s304
      %v307 = vld [vmem:[%s300] sm:$0xf]
      %v308 = vld [vmem:[%s300 + $0x4] sm:$0xf]
      %v309 = vld [vmem:[%s300 + $0x8] sm:$0xf]
      %v310 = vld [vmem:[%s300 + $0xc] sm:$0xf]
      %v311 = vld [vmem:[%s300 + $0x10] sm:$0xf]
      %v312 = vld [vmem:[%s300 + $0x14] sm:$0xf]
      %v313 = vld [vmem:[%s300 + $0x18] sm:$0xf]
      %v314 = vld [vmem:[%s300 + $0x1c] sm:$0xf]
      %v315 = vld [vmem:[%s300 + $0x20] sm:$0xf]
      %v316 = vld [vmem:[%s300 + $0x24] sm:$0xf]
      %v317 = vld [vmem:[%s300 + $0x28] sm:$0xf]
      %v318 = vld [vmem:[%s300 + $0x2c] sm:$0xf]
      %v319 = vld [vmem:[%s300 + $0x30] sm:$0xf]
      %v320 = vld [vmem:[%s300 + $0x34] sm:$0xf]
      %v321 = vld [vmem:[%s300 + $0x38] sm:$0xf]
      %v322 = vld [vmem:[%s300 + $0x3c] sm:$0xf]
      %v323 = vld [vmem:[%s300 + $0x40] sm:$0xf]
      %v324 = vld [vmem:[%s300 + $0x44] sm:$0xf]
      %v325 = vld [vmem:[%s300 + $0x48] sm:$0xf]
      %v326 = vld [vmem:[%s300 + $0x4c] sm:$0xf]
      %v327 = vld [vmem:[%s300 + $0x50] sm:$0xf]
      %v328 = vld [vmem:[%s300 + $0x54] sm:$0xf]
      %v329 = vld [vmem:[%s300 + $0x58] sm:$0xf]
      %v330 = vld [vmem:[%s300 + $0x5c] sm:$0xf]
      %v331 = vld [vmem:[%s300 + $0x60] sm:$0xf]
      %v332 = vld [vmem:[%s300 + $0x64] sm:$0xf]
      %v333 = vld [vmem:[%s300 + $0x68] sm:$0xf]
      %v334 = vld [vmem:[%s300 + $0x6c] sm:$0xf]
      %v335 = vld [vmem:[%s300 + $0x70] sm:$0xf]
      %v336 = vld [vmem:[%s300 + $0x74] sm:$0xf]
      %v337 = vld [vmem:[%s300 + $0x78] sm:$0xf]
      %v338 = vld [vmem:[%s300 + $0x7c] sm:$0xf]
      %v339 = vld [vmem:[%s1] sm:$0xf]
      %v340 = vld [vmem:[%s1 + $0x4] sm:$0xf]
      %v341 = vld [vmem:[%s1 + $0x8] sm:$0xf]
      %v342 = vld [vmem:[%s1 + $0xc] sm:$0xf]
      %v343 = vld [vmem:[%s1 + $0x10] sm:$0x3]
      %v344 = vld [vmem:[%s4] sm:$0x1]
      %v346 = vlaneseq
      %v347 = vshrl.u32 %v346, 7
      %v348 = vsub.s32 0, %v347
      %v349 = vrot.slane %v344, %v348
      %v383 = vunpack.c.l.b16 %v307
      %v384 = vunpack.c.l.b16 %v308
      %v385 = vunpack.c.l.b16 %v309
      %v386 = vunpack.c.l.b16 %v310
      %v387 = vunpack.c.l.b16 %v311
      %v388 = vunpack.c.l.b16 %v312
      %v389 = vunpack.c.l.b16 %v313
      %v390 = vunpack.c.l.b16 %v314
      %v391 = vunpack.c.l.b16 %v315
      %v392 = vunpack.c.l.b16 %v316
      %v393 = vunpack.c.l.b16 %v317
      %v394 = vunpack.c.l.b16 %v318
      %v395 = vunpack.c.l.b16 %v319
      %v396 = vunpack.c.l.b16 %v320
      %v397 = vunpack.c.l.b16 %v321
      %v398 = vunpack.c.l.b16 %v322
      %v399 = vunpack.c.l.b16 %v323
      %v400 = vunpack.c.l.b16 %v324
      %v401 = vunpack.c.l.b16 %v325
      %v402 = vunpack.c.l.b16 %v326
      %v403 = vunpack.c.l.b16 %v327
      %v404 = vunpack.c.l.b16 %v328
      %v405 = vunpack.c.l.b16 %v329
      %v406 = vunpack.c.l.b16 %v330
      %v407 = vunpack.c.l.b16 %v331
      %v408 = vunpack.c.l.b16 %v332
      %v409 = vunpack.c.l.b16 %v333
      %v410 = vunpack.c.l.b16 %v334
      %v411 = vunpack.c.l.b16 %v335
      %v412 = vunpack.c.l.b16 %v336
      %v413 = vunpack.c.l.b16 %v337
      %v414 = vunpack.c.l.b16 %v338
      %v415 = vpack.c.b16 %v384, %v383
      %v416 = vpack.c.b16 %v386, %v385
      %v417 = vpack.c.b16 %v388, %v387
      %v418 = vpack.c.b16 %v390, %v389
      %v419 = vpack.c.b16 %v392, %v391
      %v420 = vpack.c.b16 %v394, %v393
      %v421 = vpack.c.b16 %v396, %v395
      %v422 = vpack.c.b16 %v398, %v397
      %v423 = vpack.c.b16 %v400, %v399
      %v424 = vpack.c.b16 %v402, %v401
      %v425 = vpack.c.b16 %v404, %v403
      %v426 = vpack.c.b16 %v406, %v405
      %v427 = vpack.c.b16 %v408, %v407
      %v428 = vpack.c.b16 %v410, %v409
      %v429 = vpack.c.b16 %v412, %v411
      %v430 = vpack.c.b16 %v414, %v413
      %v436 = vunpack.c.l.b16 %v339
      %v437 = vunpack.c.l.b16 %v340
      %v438 = vunpack.c.l.b16 %v341
      %v439 = vunpack.c.l.b16 %v342
      %v440 = vunpack.c.l.b16 %v343
      %v441 = vpack.c.b16 %v437, %v436
      %v442 = vpack.c.b16 %v439, %v438
      %v443 = vpack.c.b16 %v440, %v440
      %vm446 = vcmask 293888
      %v448 = vsel %vm446, %v415, 0
      %v451 = vsel %vm446, %v416, 0
      %v454 = vsel %vm446, %v417, 0
      %v457 = vsel %vm446, %v418, 0
      %v460 = vsel %vm446, %v419, 0
      %v463 = vsel %vm446, %v420, 0
      %v466 = vsel %vm446, %v421, 0
      %v469 = vsel %vm446, %v422, 0
      %v472 = vsel %vm446, %v423, 0
      %v475 = vsel %vm446, %v424, 0
      %v478 = vsel %vm446, %v425, 0
      %v481 = vsel %vm446, %v426, 0
      %v484 = vsel %vm446, %v427, 0
      %v487 = vsel %vm446, %v428, 0
      %v490 = vsel %vm446, %v429, 0
      %v493 = vsel %vm446, %v430, 0
      %vm495 = vcmask 1041408
      %v497 = vsel %vm495, %v443, 0
      %499 = vmatprep.subr.bf16.mxu0 0
      %500 = vmatpush1.bf16.msra.mxu0 %v441
      %501 = vmatprep.subr.bf16.mxu0 0
      %502 = vmatpush1.bf16.msra.mxu0 %v442
      %503 = vmatprep.subr.bf16.mxu0 0
      %504 = vmatpush1.bf16.msra.mxu0 %v497
      %505 = vmatprep.subr.bf16.mxu0 0
      %506 = vmatpush1.bf16.msra.mxu0 0
      %507 = vmatprep.subr.bf16.mxu0 0
      %508 = vmatpush1.bf16.msra.mxu0 0
      %509 = vmatprep.subr.bf16.mxu0 0
      %510 = vmatpush1.bf16.msra.mxu0 0
      %511 = vmatprep.subr.bf16.mxu0 0
      %512 = vmatpush1.bf16.msra.mxu0 0
      %513 = vmatprep.subr.bf16.mxu0 0
      %514 = vmatpush1.bf16.msra.mxu0 0
      %515 = vmatprep.subr.bf16.mxu0 0
      %516 = vmatpush1.bf16.msra.mxu0 0
      %517 = vmatprep.subr.bf16.mxu0 0
      %518 = vmatpush1.bf16.msra.mxu0 0
      %519 = vmatprep.subr.bf16.mxu0 0
      %520 = vmatpush1.bf16.msra.mxu0 0
      %521 = vmatprep.subr.bf16.mxu0 0
      %522 = vmatpush1.bf16.msra.mxu0 0
      %523 = vmatprep.subr.bf16.mxu0 0
      %524 = vmatpush1.bf16.msra.mxu0 0
      %525 = vmatprep.subr.bf16.mxu0 0
      %526 = vmatpush1.bf16.msra.mxu0 0
      %527 = vmatprep.subr.bf16.mxu0 0
      %528 = vmatpush1.bf16.msra.mxu0 0
      %529 = vmatprep.subr.bf16.mxu0 0
      %530 = vmatpush1.bf16.msra.mxu0 0
      %531 = vmatprep.mubr.bf16.mxu0 0
      %532 = vmatmul.mubr.bf16.gmra.mrb[0].mxu0 %v448
      %v533 = vpop.f32.mrb[0].mxu0
      %v534 = vadd.f32 %v349, %v533
      %v535 = vpop.f32.mrb[0].mxu0
      %v536 = vpop.f32.mrb[0].mxu0
      %v537 = vadd.f32 %v349, %v536
      %v538 = vpop.f32.mrb[0].mxu0
      %539 = vmatprep.mubr.bf16.mxu0 0
      %540 = vmatmul.mubr.bf16.gmra.mrb[0].mxu0 %v451
      %v541 = vpop.f32.mrb[0].mxu0
      %v542 = vadd.f32 %v349, %v541
      %v543 = vpop.f32.mrb[0].mxu0
      %v544 = vpop.f32.mrb[0].mxu0
      %v545 = vadd.f32 %v349, %v544
      %v546 = vpop.f32.mrb[0].mxu0
      %547 = vmatprep.mubr.bf16.mxu0 0
      %548 = vmatmul.mubr.bf16.gmra.mrb[0].mxu0 %v454
      %v549 = vpop.f32.mrb[0].mxu0
      %v550 = vadd.f32 %v349, %v549
      %v551 = vpop.f32.mrb[0].mxu0
      %v552 = vpop.f32.mrb[0].mxu0
      %v553 = vadd.f32 %v349, %v552
      %v554 = vpop.f32.mrb[0].mxu0
      %555 = vmatprep.mubr.bf16.mxu0 0
      %556 = vmatmul.mubr.bf16.gmra.mrb[0].mxu0 %v457
      %v557 = vpop.f32.mrb[0].mxu0
      %v558 = vadd.f32 %v349, %v557
      %v559 = vpop.f32.mrb[0].mxu0
      %v560 = vpop.f32.mrb[0].mxu0
      %v561 = vadd.f32 %v349, %v560
      %v562 = vpop.f32.mrb[0].mxu0
      %563 = vmatprep.mubr.bf16.mxu0 0
      %564 = vmatmul.mubr.bf16.gmra.mrb[0].mxu0 %v460
      %v565 = vpop.f32.mrb[0].mxu0
      %v566 = vadd.f32 %v349, %v565
      %v567 = vpop.f32.mrb[0].mxu0
      %v568 = vpop.f32.mrb[0].mxu0
      %v569 = vadd.f32 %v349, %v568
      %v570 = vpop.f32.mrb[0].mxu0
      %571 = vmatprep.mubr.bf16.mxu0 0
      %572 = vmatmul.mubr.bf16.gmra.mrb[0].mxu0 %v463
      %v573 = vpop.f32.mrb[0].mxu0
      %v574 = vadd.f32 %v349, %v573
      %v575 = vpop.f32.mrb[0].mxu0
      %v576 = vpop.f32.mrb[0].mxu0
      %v577 = vadd.f32 %v349, %v576
      %v578 = vpop.f32.mrb[0].mxu0
      %579 = vmatprep.mubr.bf16.mxu0 0
      %580 = vmatmul.mubr.bf16.gmra.mrb[0].mxu0 %v466
      %v581 = vpop.f32.mrb[0].mxu0
      %v582 = vadd.f32 %v349, %v581
      %v583 = vpop.f32.mrb[0].mxu0
      %v584 = vpop.f32.mrb[0].mxu0
      %v585 = vadd.f32 %v349, %v584
      %v586 = vpop.f32.mrb[0].mxu0
      %587 = vmatprep.mubr.bf16.mxu0 0
      %588 = vmatmul.mubr.bf16.gmra.mrb[0].mxu0 %v469
      %v589 = vpop.f32.mrb[0].mxu0
      %v590 = vadd.f32 %v349, %v589
      %v591 = vpop.f32.mrb[0].mxu0
      %v592 = vpop.f32.mrb[0].mxu0
      %v593 = vadd.f32 %v349, %v592
      %v594 = vpop.f32.mrb[0].mxu0
      %595 = vmatprep.mubr.bf16.mxu0 0
      %596 = vmatmul.mubr.bf16.gmra.mrb[0].mxu0 %v472
      %v597 = vpop.f32.mrb[0].mxu0
      %v598 = vadd.f32 %v349, %v597
      %v599 = vpop.f32.mrb[0].mxu0
      %v600 = vpop.f32.mrb[0].mxu0
      %v601 = vadd.f32 %v349, %v600
      %v602 = vpop.f32.mrb[0].mxu0
      %603 = vmatprep.mubr.bf16.mxu0 0
      %604 = vmatmul.mubr.bf16.gmra.mrb[0].mxu0 %v475
      %v605 = vpop.f32.mrb[0].mxu0
      %v606 = vadd.f32 %v349, %v605
      %v607 = vpop.f32.mrb[0].mxu0
      %v608 = vpop.f32.mrb[0].mxu0
      %v609 = vadd.f32 %v349, %v608
      %v610 = vpop.f32.mrb[0].mxu0
      %611 = vmatprep.mubr.bf16.mxu0 0
      %612 = vmatmul.mubr.bf16.gmra.mrb[0].mxu0 %v478
      %v613 = vpop.f32.mrb[0].mxu0
      %v614 = vadd.f32 %v349, %v613
      %v615 = vpop.f32.mrb[0].mxu0
      %v616 = vpop.f32.mrb[0].mxu0
      %v617 = vadd.f32 %v349, %v616
      %v618 = vpop.f32.mrb[0].mxu0
      %619 = vmatprep.mubr.bf16.mxu0 0
      %620 = vmatmul.mubr.bf16.gmra.mrb[0].mxu0 %v481
      %v621 = vpop.f32.mrb[0].mxu0
      %v622 = vadd.f32 %v349, %v621
      %v623 = vpop.f32.mrb[0].mxu0
      %v624 = vpop.f32.mrb[0].mxu0
      %v625 = vadd.f32 %v349, %v624
      %v626 = vpop.f32.mrb[0].mxu0
      %627 = vmatprep.mubr.bf16.mxu0 0
      %628 = vmatmul.mubr.bf16.gmra.mrb[0].mxu0 %v484
      %v629 = vpop.f32.mrb[0].mxu0
      %v630 = vadd.f32 %v349, %v629
      %v631 = vpop.f32.mrb[0].mxu0
      %v632 = vpop.f32.mrb[0].mxu0
      %v633 = vadd.f32 %v349, %v632
      %v634 = vpop.f32.mrb[0].mxu0
      %635 = vmatprep.mubr.bf16.mxu0 0
      %636 = vmatmul.mubr.bf16.gmra.mrb[0].mxu0 %v487
      %v637 = vpop.f32.mrb[0].mxu0
      %v638 = vadd.f32 %v349, %v637
      %v639 = vpop.f32.mrb[0].mxu0
      %v640 = vpop.f32.mrb[0].mxu0
      %v641 = vadd.f32 %v349, %v640
      %v642 = vpop.f32.mrb[0].mxu0
      %643 = vmatprep.mubr.bf16.mxu0 0
      %644 = vmatmul.mubr.bf16.gmra.mrb[0].mxu0 %v490
      %v645 = vpop.f32.mrb[0].mxu0
      %v646 = vadd.f32 %v349, %v645
      %v647 = vpop.f32.mrb[0].mxu0
      %v648 = vpop.f32.mrb[0].mxu0
      %v649 = vadd.f32 %v349, %v648
      %v650 = vpop.f32.mrb[0].mxu0
      %651 = vmatprep.mubr.bf16.mxu0 0
      %652 = vmatmul.mubr.bf16.gmra.mrb[0].mxu0 %v493
      %v653 = vpop.f32.mrb[0].mxu0
      %v654 = vadd.f32 %v349, %v653
      %v655 = vpop.f32.mrb[0].mxu0
      %v656 = vpop.f32.mrb[0].mxu0
      %v657 = vadd.f32 %v349, %v656
      %v658 = vpop.f32.mrb[0].mxu0
      %659 = vdwg.mxu0
      %v660 = vsub.f32 0.0, %v534
      %v661 = vsub.f32 0.0, %v537
      %v662 = vsub.f32 0.0, %v542
      %v663 = vsub.f32 0.0, %v545
      %v664 = vsub.f32 0.0, %v550
      %v665 = vsub.f32 0.0, %v553
      %v666 = vsub.f32 0.0, %v558
      %v667 = vsub.f32 0.0, %v561
      %v668 = vsub.f32 0.0, %v566
      %v669 = vsub.f32 0.0, %v569
      %v670 = vsub.f32 0.0, %v574
      %v671 = vsub.f32 0.0, %v577
      %v672 = vsub.f32 0.0, %v582
      %v673 = vsub.f32 0.0, %v585
      %v674 = vsub.f32 0.0, %v590
      %v675 = vsub.f32 0.0, %v593
      %v676 = vsub.f32 0.0, %v598
      %v677 = vsub.f32 0.0, %v601
      %v678 = vsub.f32 0.0, %v606
      %v679 = vsub.f32 0.0, %v609
      %v680 = vsub.f32 0.0, %v614
      %v681 = vsub.f32 0.0, %v617
      %v682 = vsub.f32 0.0, %v622
      %v683 = vsub.f32 0.0, %v625
      %v684 = vsub.f32 0.0, %v630
      %v685 = vsub.f32 0.0, %v633
      %v686 = vsub.f32 0.0, %v638
      %v687 = vsub.f32 0.0, %v641
      %v688 = vsub.f32 0.0, %v646
      %v689 = vsub.f32 0.0, %v649
      %v690 = vsub.f32 0.0, %v654
      %v691 = vsub.f32 0.0, %v657
      %v692 = vmul.f32 %v660, 1.442695
      %v693 = vpow.pop %v692
      %v694 = vmul.f32 %v661, 1.442695
      %v695 = vpow.pop %v694
      %v696 = vmul.f32 %v662, 1.442695
      %v697 = vpow.pop %v696
      %v698 = vmul.f32 %v663, 1.442695
      %v699 = vpow.pop %v698
      %v700 = vmul.f32 %v664, 1.442695
      %v701 = vpow.pop %v700
      %v702 = vmul.f32 %v665, 1.442695
      %v703 = vpow.pop %v702
      %v704 = vmul.f32 %v666, 1.442695
      %v705 = vpow.pop %v704
      %v706 = vmul.f32 %v667, 1.442695
      %v707 = vpow.pop %v706
      %v708 = vmul.f32 %v668, 1.442695
      %v709 = vpow.pop %v708
      %v710 = vmul.f32 %v669, 1.442695
      %v711 = vpow.pop %v710
      %v712 = vmul.f32 %v670, 1.442695
      %v713 = vpow.pop %v712
      %v714 = vmul.f32 %v671, 1.442695
      %v715 = vpow.pop %v714
      %v716 = vmul.f32 %v672, 1.442695
      %v717 = vpow.pop %v716
      %v718 = vmul.f32 %v673, 1.442695
      %v719 = vpow.pop %v718
      %v720 = vmul.f32 %v674, 1.442695
      %v721 = vpow.pop %v720
      %v722 = vmul.f32 %v675, 1.442695
      %v723 = vpow.pop %v722
      %v724 = vmul.f32 %v676, 1.442695
      %v725 = vpow.pop %v724
      %v726 = vmul.f32 %v677, 1.442695
      %v727 = vpow.pop %v726
      %v728 = vmul.f32 %v678, 1.442695
      %v729 = vpow.pop %v728
      %v730 = vmul.f32 %v679, 1.442695
      %v731 = vpow.pop %v730
      %v732 = vmul.f32 %v680, 1.442695
      %v733 = vpow.pop %v732
      %v734 = vmul.f32 %v681, 1.442695
      %v735 = vpow.pop %v734
      %v736 = vmul.f32 %v682, 1.442695
      %v737 = vpow.pop %v736
      %v738 = vmul.f32 %v683, 1.442695
      %v739 = vpow.pop %v738
      %v740 = vmul.f32 %v684, 1.442695
      %v741 = vpow.pop %v740
      %v742 = vmul.f32 %v685, 1.442695
      %v743 = vpow.pop %v742
      %v744 = vmul.f32 %v686, 1.442695
      %v745 = vpow.pop %v744
      %v746 = vmul.f32 %v687, 1.442695
      %v747 = vpow.pop %v746
      %v748 = vmul.f32 %v688, 1.442695
      %v749 = vpow.pop %v748
      %v750 = vmul.f32 %v689, 1.442695
      %v751 = vpow.pop %v750
      %v752 = vmul.f32 %v690, 1.442695
      %v753 = vpow.pop %v752
      %v754 = vmul.f32 %v691, 1.442695
      %v755 = vpow.pop %v754
      %v756 = vadd.f32 %v693, 1.0
      %v757 = vadd.f32 %v695, 1.0
      %v758 = vadd.f32 %v697, 1.0
      %v759 = vadd.f32 %v699, 1.0
      %v760 = vadd.f32 %v701, 1.0
      %v761 = vadd.f32 %v703, 1.0
      %v762 = vadd.f32 %v705, 1.0
      %v763 = vadd.f32 %v707, 1.0
      %v764 = vadd.f32 %v709, 1.0
      %v765 = vadd.f32 %v711, 1.0
      %v766 = vadd.f32 %v713, 1.0
      %v767 = vadd.f32 %v715, 1.0
      %v768 = vadd.f32 %v717, 1.0
      %v769 = vadd.f32 %v719, 1.0
      %v770 = vadd.f32 %v721, 1.0
      %v771 = vadd.f32 %v723, 1.0
      %v772 = vadd.f32 %v725, 1.0
      %v773 = vadd.f32 %v727, 1.0
      %v774 = vadd.f32 %v729, 1.0
      %v775 = vadd.f32 %v731, 1.0
      %v776 = vadd.f32 %v733, 1.0
      %v777 = vadd.f32 %v735, 1.0
      %v778 = vadd.f32 %v737, 1.0
      %v779 = vadd.f32 %v739, 1.0
      %v780 = vadd.f32 %v741, 1.0
      %v781 = vadd.f32 %v743, 1.0
      %v782 = vadd.f32 %v745, 1.0
      %v783 = vadd.f32 %v747, 1.0
      %v784 = vadd.f32 %v749, 1.0
      %v785 = vadd.f32 %v751, 1.0
      %v786 = vadd.f32 %v753, 1.0
      %v787 = vadd.f32 %v755, 1.0
      %v788 = vrcp.pop %v756
      %v789 = vmul.f32 1.0, %v788
      %v790 = vrcp.pop %v757
      %v791 = vmul.f32 1.0, %v790
      %v792 = vrcp.pop %v758
      %v793 = vmul.f32 1.0, %v792
      %v794 = vrcp.pop %v759
      %v795 = vmul.f32 1.0, %v794
      %v796 = vrcp.pop %v760
      %v797 = vmul.f32 1.0, %v796
      %v798 = vrcp.pop %v761
      %v799 = vmul.f32 1.0, %v798
      %v800 = vrcp.pop %v762
      %v801 = vmul.f32 1.0, %v800
      %v802 = vrcp.pop %v763
      %v803 = vmul.f32 1.0, %v802
      %v804 = vrcp.pop %v764
      %v805 = vmul.f32 1.0, %v804
      %v806 = vrcp.pop %v765
      %v807 = vmul.f32 1.0, %v806
      %v808 = vrcp.pop %v766
      %v809 = vmul.f32 1.0, %v808
      %v810 = vrcp.pop %v767
      %v811 = vmul.f32 1.0, %v810
      %v812 = vrcp.pop %v768
      %v813 = vmul.f32 1.0, %v812
      %v814 = vrcp.pop %v769
      %v815 = vmul.f32 1.0, %v814
      %v816 = vrcp.pop %v770
      %v817 = vmul.f32 1.0, %v816
      %v818 = vrcp.pop %v771
      %v819 = vmul.f32 1.0, %v818
      %v820 = vrcp.pop %v772
      %v821 = vmul.f32 1.0, %v820
      %v822 = vrcp.pop %v773
      %v823 = vmul.f32 1.0, %v822
      %v824 = vrcp.pop %v774
      %v825 = vmul.f32 1.0, %v824
      %v826 = vrcp.pop %v775
      %v827 = vmul.f32 1.0, %v826
      %v828 = vrcp.pop %v776
      %v829 = vmul.f32 1.0, %v828
      %v830 = vrcp.pop %v777
      %v831 = vmul.f32 1.0, %v830
      %v832 = vrcp.pop %v778
      %v833 = vmul.f32 1.0, %v832
      %v834 = vrcp.pop %v779
      %v835 = vmul.f32 1.0, %v834
      %v836 = vrcp.pop %v780
      %v837 = vmul.f32 1.0, %v836
      %v838 = vrcp.pop %v781
      %v839 = vmul.f32 1.0, %v838
      %v840 = vrcp.pop %v782
      %v841 = vmul.f32 1.0, %v840
      %v842 = vrcp.pop %v783
      %v843 = vmul.f32 1.0, %v842
      %v844 = vrcp.pop %v784
      %v845 = vmul.f32 1.0, %v844
      %v846 = vrcp.pop %v785
      %v847 = vmul.f32 1.0, %v846
      %v848 = vrcp.pop %v786
      %v849 = vmul.f32 1.0, %v848
      %v850 = vrcp.pop %v787
      %v851 = vmul.f32 1.0, %v850
      %v852 = vmul.f32 %v534, %v789
      %v853 = vmul.f32 %v537, %v791
      %v854 = vmul.f32 %v542, %v793
      %v855 = vmul.f32 %v545, %v795
      %v856 = vmul.f32 %v550, %v797
      %v857 = vmul.f32 %v553, %v799
      %v858 = vmul.f32 %v558, %v801
      %v859 = vmul.f32 %v561, %v803
      %v860 = vmul.f32 %v566, %v805
      %v861 = vmul.f32 %v569, %v807
      %v862 = vmul.f32 %v574, %v809
      %v863 = vmul.f32 %v577, %v811
      %v864 = vmul.f32 %v582, %v813
      %v865 = vmul.f32 %v585, %v815
      %v866 = vmul.f32 %v590, %v817
      %v867 = vmul.f32 %v593, %v819
      %v868 = vmul.f32 %v598, %v821
      %v869 = vmul.f32 %v601, %v823
      %v870 = vmul.f32 %v606, %v825
      %v871 = vmul.f32 %v609, %v827
      %v872 = vmul.f32 %v614, %v829
      %v873 = vmul.f32 %v617, %v831
      %v874 = vmul.f32 %v622, %v833
      %v875 = vmul.f32 %v625, %v835
      %v876 = vmul.f32 %v630, %v837
      %v877 = vmul.f32 %v633, %v839
      %v878 = vmul.f32 %v638, %v841
      %v879 = vmul.f32 %v641, %v843
      %v880 = vmul.f32 %v646, %v845
      %v881 = vmul.f32 %v649, %v847
      %v882 = vmul.f32 %v654, %v849
      %v883 = vmul.f32 %v657, %v851
      %v884 = vpack.c.bf16 %v853, %v852
      %v885 = vpack.c.bf16 %v855, %v854
      %v886 = vpack.c.bf16 %v857, %v856
      %v887 = vpack.c.bf16 %v859, %v858
      %v888 = vpack.c.bf16 %v861, %v860
      %v889 = vpack.c.bf16 %v863, %v862
      %v890 = vpack.c.bf16 %v865, %v864
      %v891 = vpack.c.bf16 %v867, %v866
      %v892 = vpack.c.bf16 %v869, %v868
      %v893 = vpack.c.bf16 %v871, %v870
      %v894 = vpack.c.bf16 %v873, %v872
      %v895 = vpack.c.bf16 %v875, %v874
      %v896 = vpack.c.bf16 %v877, %v876
      %v897 = vpack.c.bf16 %v879, %v878
      %v898 = vpack.c.bf16 %v881, %v880
      %v899 = vpack.c.bf16 %v883, %v882
      %vm900 = vcmask 519168
      %901 = vst.msk [vmem:[#allocation2] sm:$0xf] %vm900, 0
      %vm902 = vcmask 516096
      %vm903 = vsmask.f32 256
      %vm904 = vmand %vm902, %vm903
      %v905 = vld [vmem:[#allocation2 + $0x4] sm:$0x1]
      %v906 = vsel %vm904, 0, %v905
      %907 = vst [vmem:[#allocation2 + $0x4] sm:$0x1] %v906
      %908 = vst.msk [vmem:[#allocation2 + $0x8] sm:$0xf] %vm900, 0
      %v909 = vld [vmem:[#allocation2 + $0xc] sm:$0x1]
      %v910 = vsel %vm904, 0, %v909
      %911 = vst [vmem:[#allocation2 + $0xc] sm:$0x1] %v910
      %912 = vst.msk [vmem:[#allocation2 + $0x10] sm:$0xf] %vm900, 0
      %v913 = vld [vmem:[#allocation2 + $0x14] sm:$0x1]
      %v914 = vsel %vm904, 0, %v913
      %915 = vst [vmem:[#allocation2 + $0x14] sm:$0x1] %v914
      %916 = vst.msk [vmem:[#allocation2 + $0x18] sm:$0xf] %vm900, 0
      %v917 = vld [vmem:[#allocation2 + $0x1c] sm:$0x1]
      %v918 = vsel %vm904, 0, %v917
      %919 = vst [vmem:[#allocation2 + $0x1c] sm:$0x1] %v918
      %920 = vst.msk [vmem:[#allocation2 + $0x20] sm:$0xf] %vm900, 0
      %v921 = vld [vmem:[#allocation2 + $0x24] sm:$0x1]
      %v922 = vsel %vm904, 0, %v921
      %923 = vst [vmem:[#allocation2 + $0x24] sm:$0x1] %v922
      %924 = vst.msk [vmem:[#allocation2 + $0x28] sm:$0xf] %vm900, 0
      %v925 = vld [vmem:[#allocation2 + $0x2c] sm:$0x1]
      %v926 = vsel %vm904, 0, %v925
      %927 = vst [vmem:[#allocation2 + $0x2c] sm:$0x1] %v926
      %928 = vst.msk [vmem:[#allocation2 + $0x30] sm:$0xf] %vm900, 0
      %v929 = vld [vmem:[#allocation2 + $0x34] sm:$0x1]
      %v930 = vsel %vm904, 0, %v929
      %931 = vst [vmem:[#allocation2 + $0x34] sm:$0x1] %v930
      %932 = vst.msk [vmem:[#allocation2 + $0x38] sm:$0xf] %vm900, 0
      %v933 = vld [vmem:[#allocation2 + $0x3c] sm:$0x1]
      %v934 = vsel %vm904, 0, %v933
      %935 = vst [vmem:[#allocation2 + $0x3c] sm:$0x1] %v934
      %936 = vst.msk [vmem:[#allocation2 + $0x40] sm:$0xf] %vm900, 0
      %v937 = vld [vmem:[#allocation2 + $0x44] sm:$0x1]
      %v938 = vsel %vm904, 0, %v937
      %939 = vst [vmem:[#allocation2 + $0x44] sm:$0x1] %v938
      %940 = vst.msk [vmem:[#allocation2 + $0x48] sm:$0xf] %vm900, 0
      %v941 = vld [vmem:[#allocation2 + $0x4c] sm:$0x1]
      %v942 = vsel %vm904, 0, %v941
      %943 = vst [vmem:[#allocation2 + $0x4c] sm:$0x1] %v942
      %944 = vst.msk [vmem:[#allocation2 + $0x50] sm:$0xf] %vm900, 0
      %v945 = vld [vmem:[#allocation2 + $0x54] sm:$0x1]
      %v946 = vsel %vm904, 0, %v945
      %947 = vst [vmem:[#allocation2 + $0x54] sm:$0x1] %v946
      %948 = vst.msk [vmem:[#allocation2 + $0x58] sm:$0xf] %vm900, 0
      %v949 = vld [vmem:[#allocation2 + $0x5c] sm:$0x1]
      %v950 = vsel %vm904, 0, %v949
      %951 = vst [vmem:[#allocation2 + $0x5c] sm:$0x1] %v950
      %952 = vst.msk [vmem:[#allocation2 + $0x60] sm:$0xf] %vm900, 0
      %v953 = vld [vmem:[#allocation2 + $0x64] sm:$0x1]
      %v954 = vsel %vm904, 0, %v953
      %955 = vst [vmem:[#allocation2 + $0x64] sm:$0x1] %v954
      %956 = vst.msk [vmem:[#allocation2 + $0x68] sm:$0xf] %vm900, 0
      %v957 = vld [vmem:[#allocation2 + $0x6c] sm:$0x1]
      %v958 = vsel %vm904, 0, %v957
      %959 = vst [vmem:[#allocation2 + $0x6c] sm:$0x1] %v958
      %960 = vst.msk [vmem:[#allocation2 + $0x70] sm:$0xf] %vm900, 0
      %v961 = vld [vmem:[#allocation2 + $0x74] sm:$0x1]
      %v962 = vsel %vm904, 0, %v961
      %963 = vst [vmem:[#allocation2 + $0x74] sm:$0x1] %v962
      %964 = vst.msk [vmem:[#allocation2 + $0x78] sm:$0xf] %vm900, 0
      %v965 = vld [vmem:[#allocation2 + $0x7c] sm:$0x1]
      %v966 = vsel %vm904, 0, %v965
      %967 = vst [vmem:[#allocation2 + $0x7c] sm:$0x1] %v966
      %968 = vst.msk [vmem:[#allocation2 + $0x80] sm:$0xf] %vm900, 0
      %v969 = vld [vmem:[#allocation2 + $0x84] sm:$0x1]
      %v970 = vsel %vm904, 0, %v969
      %971 = vst [vmem:[#allocation2 + $0x84] sm:$0x1] %v970
      %972 = vst.msk [vmem:[#allocation2 + $0x88] sm:$0xf] %vm900, 0
      %v973 = vld [vmem:[#allocation2 + $0x8c] sm:$0x1]
      %v974 = vsel %vm904, 0, %v973
      %975 = vst [vmem:[#allocation2 + $0x8c] sm:$0x1] %v974
      %976 = vst.msk [vmem:[#allocation2 + $0x90] sm:$0xf] %vm900, 0
      %v977 = vld [vmem:[#allocation2 + $0x94] sm:$0x1]
      %v978 = vsel %vm904, 0, %v977
      %979 = vst [vmem:[#allocation2 + $0x94] sm:$0x1] %v978
      %980 = vst.msk [vmem:[#allocation2 + $0x98] sm:$0xf] %vm900, 0
      %v981 = vld [vmem:[#allocation2 + $0x9c] sm:$0x1]
      %v982 = vsel %vm904, 0, %v981
      %983 = vst [vmem:[#allocation2 + $0x9c] sm:$0x1] %v982
      %984 = vst.msk [vmem:[#allocation2 + $0xa0] sm:$0xf] %vm900, 0
      %v985 = vld [vmem:[#allocation2 + $0xa4] sm:$0x1]
      %v986 = vsel %vm904, 0, %v985
      %987 = vst [vmem:[#allocation2 + $0xa4] sm:$0x1] %v986
      %988 = vst.msk [vmem:[#allocation2 + $0xa8] sm:$0xf] %vm900, 0
      %v989 = vld [vmem:[#allocation2 + $0xac] sm:$0x1]
      %v990 = vsel %vm904, 0, %v989
      %991 = vst [vmem:[#allocation2 + $0xac] sm:$0x1] %v990
      %992 = vst.msk [vmem:[#allocation2 + $0xb0] sm:$0xf] %vm900, 0
      %v993 = vld [vmem:[#allocation2 + $0xb4] sm:$0x1]
      %v994 = vsel %vm904, 0, %v993
      %995 = vst [vmem:[#allocation2 + $0xb4] sm:$0x1] %v994
      %996 = vst.msk [vmem:[#allocation2 + $0xb8] sm:$0xf] %vm900, 0
      %v997 = vld [vmem:[#allocation2 + $0xbc] sm:$0x1]
      %v998 = vsel %vm904, 0, %v997
      %999 = vst [vmem:[#allocation2 + $0xbc] sm:$0x1] %v998
      %1000 = vst.msk [vmem:[#allocation2 + $0xc0] sm:$0xf] %vm900, 0
      %v1001 = vld [vmem:[#allocation2 + $0xc4] sm:$0x1]
      %v1002 = vsel %vm904, 0, %v1001
      %1003 = vst [vmem:[#allocation2 + $0xc4] sm:$0x1] %v1002
      %1004 = vst.msk [vmem:[#allocation2 + $0xc8] sm:$0xf] %vm900, 0
      %v1005 = vld [vmem:[#allocation2 + $0xcc] sm:$0x1]
      %v1006 = vsel %vm904, 0, %v1005
      %1007 = vst [vmem:[#allocation2 + $0xcc] sm:$0x1] %v1006
      %1008 = vst.msk [vmem:[#allocation2 + $0xd0] sm:$0xf] %vm900, 0
      %v1009 = vld [vmem:[#allocation2 + $0xd4] sm:$0x1]
      %v1010 = vsel %vm904, 0, %v1009
      %1011 = vst [vmem:[#allocation2 + $0xd4] sm:$0x1] %v1010
      %1012 = vst.msk [vmem:[#allocation2 + $0xd8] sm:$0xf] %vm900, 0
      %v1013 = vld [vmem:[#allocation2 + $0xdc] sm:$0x1]
      %v1014 = vsel %vm904, 0, %v1013
      %1015 = vst [vmem:[#allocation2 + $0xdc] sm:$0x1] %v1014
      %1016 = vst.msk [vmem:[#allocation2 + $0xe0] sm:$0xf] %vm900, 0
      %v1017 = vld [vmem:[#allocation2 + $0xe4] sm:$0x1]
      %v1018 = vsel %vm904, 0, %v1017
      %1019 = vst [vmem:[#allocation2 + $0xe4] sm:$0x1] %v1018
      %1020 = vst.msk [vmem:[#allocation2 + $0xe8] sm:$0xf] %vm900, 0
      %v1021 = vld [vmem:[#allocation2 + $0xec] sm:$0x1]
      %v1022 = vsel %vm904, 0, %v1021
      %1023 = vst [vmem:[#allocation2 + $0xec] sm:$0x1] %v1022
      %1024 = vst.msk [vmem:[#allocation2 + $0xf0] sm:$0xf] %vm900, 0
      %v1025 = vld [vmem:[#allocation2 + $0xf4] sm:$0x1]
      %v1026 = vsel %vm904, 0, %v1025
      %1027 = vst [vmem:[#allocation2 + $0xf4] sm:$0x1] %v1026
      %1028 = vst.msk [vmem:[#allocation2 + $0xf8] sm:$0xf] %vm900, 0
      %v1029 = vld [vmem:[#allocation2 + $0xfc] sm:$0x1]
      %v1030 = vsel %vm904, 0, %v1029
      %1031 = vst [vmem:[#allocation2 + $0xfc] sm:$0x1] %v1030
      %1032 = vst.msk [vmem:[#allocation2 + $0x100] sm:$0xf] %vm900, 0
      %v1033 = vld [vmem:[#allocation2 + $0x104] sm:$0x1]
      %v1034 = vsel %vm904, 0, %v1033
      %1035 = vst [vmem:[#allocation2 + $0x104] sm:$0x1] %v1034
      %1036 = vst.msk [vmem:[#allocation2 + $0x108] sm:$0xf] %vm900, 0
      %v1037 = vld [vmem:[#allocation2 + $0x10c] sm:$0x1]
      %v1038 = vsel %vm904, 0, %v1037
      %1039 = vst [vmem:[#allocation2 + $0x10c] sm:$0x1] %v1038
      %1040 = vst.msk [vmem:[#allocation2 + $0x110] sm:$0xf] %vm900, 0
      %v1041 = vld [vmem:[#allocation2 + $0x114] sm:$0x1]
      %v1042 = vsel %vm904, 0, %v1041
      %1043 = vst [vmem:[#allocation2 + $0x114] sm:$0x1] %v1042
      %1044 = vst.msk [vmem:[#allocation2 + $0x118] sm:$0xf] %vm900, 0
      %v1045 = vld [vmem:[#allocation2 + $0x11c] sm:$0x1]
      %v1046 = vsel %vm904, 0, %v1045
      %1047 = vst [vmem:[#allocation2 + $0x11c] sm:$0x1] %v1046
      %v1052 = vunpack.c.l.b16 %v884
      %v1053 = vunpack.c.h.b16 %v884
      %v1054 = vunpack.c.l.b16 %v885
      %v1055 = vunpack.c.h.b16 %v885
      %v1056 = vunpack.c.l.b16 %v886
      %v1057 = vunpack.c.h.b16 %v886
      %v1058 = vunpack.c.l.b16 %v887
      %v1059 = vunpack.c.h.b16 %v887
      %v1060 = vpack.c.b16 %v1052, %v1052
      %v1061 = vpack.c.b16 %v1053, %v1053
      %v1062 = vpack.c.b16 %v1054, %v1054
      %v1063 = vpack.c.b16 %v1055, %v1055
      %v1064 = vpack.c.b16 %v1056, %v1056
      %v1065 = vpack.c.b16 %v1057, %v1057
      %v1066 = vpack.c.b16 %v1058, %v1058
      %v1067 = vpack.c.b16 %v1059, %v1059
      %v1069 = vshrl.u32 %v1060, 16
      %v1071 = vrot.slane %v1069, 7
      %v1072 = vshll.u32 %v1060, 16
      %v1074 = vor.u32 %v1071, %v1072
      %v1075 = vrot.slane %v1071, 4
      %v1077 = vshrl.u32 %v1061, 16
      %v1079 = vrot.slane %v1077, 7
      %v1080 = vshll.u32 %v1061, 16
      %v1082 = vor.u32 %v1079, %v1080
      %v1083 = vrot.slane %v1079, 4
      %v1085 = vshrl.u32 %v1062, 16
      %v1087 = vrot.slane %v1085, 7
      %v1088 = vshll.u32 %v1062, 16
      %v1090 = vor.u32 %v1087, %v1088
      %v1091 = vrot.slane %v1087, 4
      %v1093 = vshrl.u32 %v1063, 16
      %v1095 = vrot.slane %v1093, 7
      %v1096 = vshll.u32 %v1063, 16
      %v1098 = vor.u32 %v1095, %v1096
      %v1099 = vrot.slane %v1095, 4
      %v1101 = vshrl.u32 %v1064, 16
      %v1103 = vrot.slane %v1101, 7
      %v1104 = vshll.u32 %v1064, 16
      %v1106 = vor.u32 %v1103, %v1104
      %v1107 = vrot.slane %v1103, 4
      %v1109 = vshrl.u32 %v1065, 16
      %v1111 = vrot.slane %v1109, 7
      %v1112 = vshll.u32 %v1065, 16
      %v1114 = vor.u32 %v1111, %v1112
      %v1115 = vrot.slane %v1111, 4
      %v1117 = vshrl.u32 %v1066, 16
      %v1119 = vrot.slane %v1117, 7
      %v1120 = vshll.u32 %v1066, 16
      %v1122 = vor.u32 %v1119, %v1120
      %v1123 = vrot.slane %v1119, 4
      %v1125 = vshrl.u32 %v1067, 16
      %v1127 = vrot.slane %v1125, 7
      %v1128 = vshll.u32 %v1067, 16
      %v1130 = vor.u32 %v1127, %v1128
      %v1131 = vrot.slane %v1127, 4
      %s1148 = scalar_lea.vmem [#allocation2], 8
      %vm1149 = vcmask 519168
      %vm1150 = vsmask.f32 7938
      %vm1151 = vmand %vm1149, %vm1150
      %v1152 = vld [vmem:[%s1148] sm:$0xf]
      %v1153 = vsel %vm1151, %v1074, %v1152
      %1154 = vst [vmem:[%s1148] sm:$0xf] %v1153
      %v1155 = vld [vmem:[%s1148 + $0x4] sm:$0x1]
      %v1156 = vsel %vm904, %v1075, %v1155
      %1157 = vst [vmem:[%s1148 + $0x4] sm:$0x1] %v1156
      %v1158 = vld [vmem:[%s1148 + $0x8] sm:$0xf]
      %v1159 = vsel %vm1151, %v1082, %v1158
      %1160 = vst [vmem:[%s1148 + $0x8] sm:$0xf] %v1159
      %v1161 = vld [vmem:[%s1148 + $0xc] sm:$0x1]
      %v1162 = vsel %vm904, %v1083, %v1161
      %1163 = vst [vmem:[%s1148 + $0xc] sm:$0x1] %v1162
      %v1164 = vld [vmem:[%s1148 + $0x10] sm:$0xf]
      %v1165 = vsel %vm1151, %v1090, %v1164
      %1166 = vst [vmem:[%s1148 + $0x10] sm:$0xf] %v1165
      %v1167 = vld [vmem:[%s1148 + $0x14] sm:$0x1]
      %v1168 = vsel %vm904, %v1091, %v1167
      %1169 = vst [vmem:[%s1148 + $0x14] sm:$0x1] %v1168
      %v1170 = vld [vmem:[%s1148 + $0x18] sm:$0xf]
      %v1171 = vsel %vm1151, %v1098, %v1170
      %1172 = vst [vmem:[%s1148 + $0x18] sm:$0xf] %v1171
      %v1173 = vld [vmem:[%s1148 + $0x1c] sm:$0x1]
      %v1174 = vsel %vm904, %v1099, %v1173
      %1175 = vst [vmem:[%s1148 + $0x1c] sm:$0x1] %v1174
      %v1176 = vld [vmem:[%s1148 + $0x20] sm:$0xf]
      %v1177 = vsel %vm1151, %v1106, %v1176
      %1178 = vst [vmem:[%s1148 + $0x20] sm:$0xf] %v1177
      %v1179 = vld [vmem:[%s1148 + $0x24] sm:$0x1]
      %v1180 = vsel %vm904, %v1107, %v1179
      %1181 = vst [vmem:[%s1148 + $0x24] sm:$0x1] %v1180
      %v1182 = vld [vmem:[%s1148 + $0x28] sm:$0xf]
      %v1183 = vsel %vm1151, %v1114, %v1182
      %1184 = vst [vmem:[%s1148 + $0x28] sm:$0xf] %v1183
      %v1185 = vld [vmem:[%s1148 + $0x2c] sm:$0x1]
      %v1186 = vsel %vm904, %v1115, %v1185
      %1187 = vst [vmem:[%s1148 + $0x2c] sm:$0x1] %v1186
      %v1188 = vld [vmem:[%s1148 + $0x30] sm:$0xf]
      %v1189 = vsel %vm1151, %v1122, %v1188
      %1190 = vst [vmem:[%s1148 + $0x30] sm:$0xf] %v1189
      %v1191 = vld [vmem:[%s1148 + $0x34] sm:$0x1]
      %v1192 = vsel %vm904, %v1123, %v1191
      %1193 = vst [vmem:[%s1148 + $0x34] sm:$0x1] %v1192
      %v1194 = vld [vmem:[%s1148 + $0x38] sm:$0xf]
      %v1195 = vsel %vm1151, %v1130, %v1194
      %1196 = vst [vmem:[%s1148 + $0x38] sm:$0xf] %v1195
      %v1197 = vld [vmem:[%s1148 + $0x3c] sm:$0x1]
      %v1198 = vsel %vm904, %v1131, %v1197
      %1199 = vst [vmem:[%s1148 + $0x3c] sm:$0x1] %v1198
      %v1204 = vunpack.c.l.b16 %v888
      %v1205 = vunpack.c.h.b16 %v888
      %v1206 = vunpack.c.l.b16 %v889
      %v1207 = vunpack.c.h.b16 %v889
      %v1208 = vunpack.c.l.b16 %v890
      %v1209 = vunpack.c.h.b16 %v890
      %v1210 = vunpack.c.l.b16 %v891
      %v1211 = vunpack.c.h.b16 %v891
      %v1212 = vpack.c.b16 %v1204, %v1204
      %v1213 = vpack.c.b16 %v1205, %v1205
      %v1214 = vpack.c.b16 %v1206, %v1206
      %v1215 = vpack.c.b16 %v1207, %v1207
      %v1216 = vpack.c.b16 %v1208, %v1208
      %v1217 = vpack.c.b16 %v1209, %v1209
      %v1218 = vpack.c.b16 %v1210, %v1210
      %v1219 = vpack.c.b16 %v1211, %v1211
      %s1228 = scalar_lea.vmem [#allocation2], 80
      %1229 = vst.msk [vmem:[%s1228] sm:$0xf] %vm900, %v1212
      %1230 = vst.msk [vmem:[%s1228 + $0x8] sm:$0xf] %vm900, %v1213
      %1231 = vst.msk [vmem:[%s1228 + $0x10] sm:$0xf] %vm900, %v1214
      %1232 = vst.msk [vmem:[%s1228 + $0x18] sm:$0xf] %vm900, %v1215
      %1233 = vst.msk [vmem:[%s1228 + $0x20] sm:$0xf] %vm900, %v1216
      %1234 = vst.msk [vmem:[%s1228 + $0x28] sm:$0xf] %vm900, %v1217
      %1235 = vst.msk [vmem:[%s1228 + $0x30] sm:$0xf] %vm900, %v1218
      %1236 = vst.msk [vmem:[%s1228 + $0x38] sm:$0xf] %vm900, %v1219
      %v1241 = vunpack.c.l.b16 %v892
      %v1242 = vunpack.c.h.b16 %v892
      %v1243 = vunpack.c.l.b16 %v893
      %v1244 = vunpack.c.h.b16 %v893
      %v1245 = vunpack.c.l.b16 %v894
      %v1246 = vunpack.c.h.b16 %v894
      %v1247 = vunpack.c.l.b16 %v895
      %v1248 = vunpack.c.h.b16 %v895
      %v1249 = vpack.c.b16 %v1241, %v1241
      %v1250 = vpack.c.b16 %v1242, %v1242
      %v1251 = vpack.c.b16 %v1243, %v1243
      %v1252 = vpack.c.b16 %v1244, %v1244
      %v1253 = vpack.c.b16 %v1245, %v1245
      %v1254 = vpack.c.b16 %v1246, %v1246
      %v1255 = vpack.c.b16 %v1247, %v1247
      %v1256 = vpack.c.b16 %v1248, %v1248
      %v1258 = vshrl.u32 %v1249, 16
      %v1260 = vrot.slane %v1258, 7
      %v1261 = vshll.u32 %v1249, 16
      %v1263 = vor.u32 %v1260, %v1261
      %v1264 = vrot.slane %v1260, 4
      %v1266 = vshrl.u32 %v1250, 16
      %v1268 = vrot.slane %v1266, 7
      %v1269 = vshll.u32 %v1250, 16
      %v1271 = vor.u32 %v1268, %v1269
      %v1272 = vrot.slane %v1268, 4
      %v1274 = vshrl.u32 %v1251, 16
      %v1276 = vrot.slane %v1274, 7
      %v1277 = vshll.u32 %v1251, 16
      %v1279 = vor.u32 %v1276, %v1277
      %v1280 = vrot.slane %v1276, 4
      %v1282 = vshrl.u32 %v1252, 16
      %v1284 = vrot.slane %v1282, 7
      %v1285 = vshll.u32 %v1252, 16
      %v1287 = vor.u32 %v1284, %v1285
      %v1288 = vrot.slane %v1284, 4
      %v1290 = vshrl.u32 %v1253, 16
      %v1292 = vrot.slane %v1290, 7
      %v1293 = vshll.u32 %v1253, 16
      %v1295 = vor.u32 %v1292, %v1293
      %v1296 = vrot.slane %v1292, 4
      %v1298 = vshrl.u32 %v1254, 16
      %v1300 = vrot.slane %v1298, 7
      %v1301 = vshll.u32 %v1254, 16
      %v1303 = vor.u32 %v1300, %v1301
      %v1304 = vrot.slane %v1300, 4
      %v1306 = vshrl.u32 %v1255, 16
      %v1308 = vrot.slane %v1306, 7
      %v1309 = vshll.u32 %v1255, 16
      %v1311 = vor.u32 %v1308, %v1309
      %v1312 = vrot.slane %v1308, 4
      %v1314 = vshrl.u32 %v1256, 16
      %v1316 = vrot.slane %v1314, 7
      %v1317 = vshll.u32 %v1256, 16
      %v1319 = vor.u32 %v1316, %v1317
      %v1320 = vrot.slane %v1316, 4
      %s1337 = scalar_lea.vmem [#allocation2], 144
      %v1338 = vld [vmem:[%s1337] sm:$0xf]
      %v1339 = vsel %vm1151, %v1263, %v1338
      %1340 = vst [vmem:[%s1337] sm:$0xf] %v1339
      %v1341 = vld [vmem:[%s1337 + $0x4] sm:$0x1]
      %v1342 = vsel %vm904, %v1264, %v1341
      %1343 = vst [vmem:[%s1337 + $0x4] sm:$0x1] %v1342
      %v1344 = vld [vmem:[%s1337 + $0x8] sm:$0xf]
      %v1345 = vsel %vm1151, %v1271, %v1344
      %1346 = vst [vmem:[%s1337 + $0x8] sm:$0xf] %v1345
      %v1347 = vld [vmem:[%s1337 + $0xc] sm:$0x1]
      %v1348 = vsel %vm904, %v1272, %v1347
      %1349 = vst [vmem:[%s1337 + $0xc] sm:$0x1] %v1348
      %v1350 = vld [vmem:[%s1337 + $0x10] sm:$0xf]
      %v1351 = vsel %vm1151, %v1279, %v1350
      %1352 = vst [vmem:[%s1337 + $0x10] sm:$0xf] %v1351
      %v1353 = vld [vmem:[%s1337 + $0x14] sm:$0x1]
      %v1354 = vsel %vm904, %v1280, %v1353
      %1355 = vst [vmem:[%s1337 + $0x14] sm:$0x1] %v1354
      %v1356 = vld [vmem:[%s1337 + $0x18] sm:$0xf]
      %v1357 = vsel %vm1151, %v1287, %v1356
      %1358 = vst [vmem:[%s1337 + $0x18] sm:$0xf] %v1357
      %v1359 = vld [vmem:[%s1337 + $0x1c] sm:$0x1]
      %v1360 = vsel %vm904, %v1288, %v1359
      %1361 = vst [vmem:[%s1337 + $0x1c] sm:$0x1] %v1360
      %v1362 = vld [vmem:[%s1337 + $0x20] sm:$0xf]
      %v1363 = vsel %vm1151, %v1295, %v1362
      %1364 = vst [vmem:[%s1337 + $0x20] sm:$0xf] %v1363
      %v1365 = vld [vmem:[%s1337 + $0x24] sm:$0x1]
      %v1366 = vsel %vm904, %v1296, %v1365
      %1367 = vst [vmem:[%s1337 + $0x24] sm:$0x1] %v1366
      %v1368 = vld [vmem:[%s1337 + $0x28] sm:$0xf]
      %v1369 = vsel %vm1151, %v1303, %v1368
      %1370 = vst [vmem:[%s1337 + $0x28] sm:$0xf] %v1369
      %v1371 = vld [vmem:[%s1337 + $0x2c] sm:$0x1]
      %v1372 = vsel %vm904, %v1304, %v1371
      %1373 = vst [vmem:[%s1337 + $0x2c] sm:$0x1] %v1372
      %v1374 = vld [vmem:[%s1337 + $0x30] sm:$0xf]
      %v1375 = vsel %vm1151, %v1311, %v1374
      %1376 = vst [vmem:[%s1337 + $0x30] sm:$0xf] %v1375
      %v1377 = vld [vmem:[%s1337 + $0x34] sm:$0x1]
      %v1378 = vsel %vm904, %v1312, %v1377
      %1379 = vst [vmem:[%s1337 + $0x34] sm:$0x1] %v1378
      %v1380 = vld [vmem:[%s1337 + $0x38] sm:$0xf]
      %v1381 = vsel %vm1151, %v1319, %v1380
      %1382 = vst [vmem:[%s1337 + $0x38] sm:$0xf] %v1381
      %v1383 = vld [vmem:[%s1337 + $0x3c] sm:$0x1]
      %v1384 = vsel %vm904, %v1320, %v1383
      %1385 = vst [vmem:[%s1337 + $0x3c] sm:$0x1] %v1384
      %v1390 = vunpack.c.l.b16 %v896
      %v1391 = vunpack.c.h.b16 %v896
      %v1392 = vunpack.c.l.b16 %v897
      %v1393 = vunpack.c.h.b16 %v897
      %v1394 = vunpack.c.l.b16 %v898
      %v1395 = vunpack.c.h.b16 %v898
      %v1396 = vunpack.c.l.b16 %v899
      %v1397 = vunpack.c.h.b16 %v899
      %v1398 = vpack.c.b16 %v1390, %v1390
      %v1399 = vpack.c.b16 %v1391, %v1391
      %v1400 = vpack.c.b16 %v1392, %v1392
      %v1401 = vpack.c.b16 %v1393, %v1393
      %v1402 = vpack.c.b16 %v1394, %v1394
      %v1403 = vpack.c.b16 %v1395, %v1395
      %v1404 = vpack.c.b16 %v1396, %v1396
      %v1405 = vpack.c.b16 %v1397, %v1397
      %s1414 = scalar_lea.vmem [#allocation2], 216
      %1415 = vst.msk [vmem:[%s1414] sm:$0xf] %vm900, %v1398
      %1416 = vst.msk [vmem:[%s1414 + $0x8] sm:$0xf] %vm900, %v1399
      %1417 = vst.msk [vmem:[%s1414 + $0x10] sm:$0xf] %vm900, %v1400
      %1418 = vst.msk [vmem:[%s1414 + $0x18] sm:$0xf] %vm900, %v1401
      %1419 = vst.msk [vmem:[%s1414 + $0x20] sm:$0xf] %vm900, %v1402
      %1420 = vst.msk [vmem:[%s1414 + $0x28] sm:$0xf] %vm900, %v1403
      %1421 = vst.msk [vmem:[%s1414 + $0x30] sm:$0xf] %vm900, %v1404
      %1422 = vst.msk [vmem:[%s1414 + $0x38] sm:$0xf] %vm900, %v1405
      %v1423 = vld [vmem:[#allocation2] sm:$0xf]
      %v1424 = vld [vmem:[#allocation2 + $0x8] sm:$0xf]
      %v1425 = vld [vmem:[#allocation2 + $0x10] sm:$0xf]
      %v1426 = vld [vmem:[#allocation2 + $0x18] sm:$0xf]
      %v1427 = vld [vmem:[#allocation2 + $0x20] sm:$0xf]
      %v1428 = vld [vmem:[#allocation2 + $0x28] sm:$0xf]
      %v1429 = vld [vmem:[#allocation2 + $0x30] sm:$0xf]
      %v1430 = vld [vmem:[#allocation2 + $0x38] sm:$0xf]
      %v1431 = vld [vmem:[%s2] sm:$0xf]
      %v1432 = vld [vmem:[%s2 + $0x4] sm:$0xf]
      %v1433 = vld [vmem:[%s2 + $0x8] sm:$0xf]
      %v1434 = vld [vmem:[%s2 + $0xc] sm:$0xf]
      %v1435 = vld [vmem:[%s2 + $0x10] sm:$0xf]
      %v1436 = vld [vmem:[%s2 + $0x14] sm:$0xf]
      %v1437 = vld [vmem:[%s2 + $0x18] sm:$0xf]
      %v1438 = vld [vmem:[%s2 + $0x1c] sm:$0xf]
      %s1439 = scalar_lea.vmem [#allocation2], 72
      %v1440 = vld [vmem:[%s1439] sm:$0xf]
      %v1441 = vld [vmem:[%s1439 + $0x8] sm:$0xf]
      %v1442 = vld [vmem:[%s1439 + $0x10] sm:$0xf]
      %v1443 = vld [vmem:[%s1439 + $0x18] sm:$0xf]
      %v1444 = vld [vmem:[%s1439 + $0x20] sm:$0xf]
      %v1445 = vld [vmem:[%s1439 + $0x28] sm:$0xf]
      %v1446 = vld [vmem:[%s1439 + $0x30] sm:$0xf]
      %v1447 = vld [vmem:[%s1439 + $0x38] sm:$0xf]
      %v1448 = vld [vmem:[%s2 + $0x20] sm:$0xf]
      %v1449 = vld [vmem:[%s2 + $0x24] sm:$0xf]
      %v1450 = vld [vmem:[%s2 + $0x28] sm:$0xf]
      %v1451 = vld [vmem:[%s2 + $0x2c] sm:$0xf]
      %v1452 = vld [vmem:[%s2 + $0x30] sm:$0xf]
      %v1453 = vld [vmem:[%s2 + $0x34] sm:$0xf]
      %v1454 = vld [vmem:[%s2 + $0x38] sm:$0xf]
      %v1455 = vld [vmem:[%s2 + $0x3c] sm:$0xf]
      %v1464 = vunpack.c.l.b16 %v1440
      %v1465 = vunpack.c.l.b16 %v1441
      %v1466 = vunpack.c.l.b16 %v1442
      %v1467 = vunpack.c.l.b16 %v1443
      %v1468 = vunpack.c.l.b16 %v1444
      %v1469 = vunpack.c.l.b16 %v1445
      %v1470 = vunpack.c.l.b16 %v1446
      %v1471 = vunpack.c.l.b16 %v1447
      %v1472 = vpack.c.b16 %v1465, %v1464
      %v1473 = vpack.c.b16 %v1467, %v1466
      %v1474 = vpack.c.b16 %v1469, %v1468
      %v1475 = vpack.c.b16 %v1471, %v1470
      %v1484 = vunpack.c.l.b16 %v1448
      %v1485 = vunpack.c.l.b16 %v1449
      %v1486 = vunpack.c.l.b16 %v1450
      %v1487 = vunpack.c.l.b16 %v1451
      %v1488 = vunpack.c.l.b16 %v1452
      %v1489 = vunpack.c.l.b16 %v1453
      %v1490 = vunpack.c.l.b16 %v1454
      %v1491 = vunpack.c.l.b16 %v1455
      %v1492 = vpack.c.b16 %v1485, %v1484
      %v1493 = vpack.c.b16 %v1487, %v1486
      %v1494 = vpack.c.b16 %v1489, %v1488
      %v1495 = vpack.c.b16 %v1491, %v1490
      %vm1500 = vcmask 523264
      %v1502 = vsel %vm1500, %v1472, 0
      %v1505 = vsel %vm1500, %v1473, 0
      %v1508 = vsel %vm1500, %v1474, 0
      %v1511 = vsel %vm1500, %v1475, 0
      %1513 = vmatprep.subr.bf16.mxu0 0
      %1514 = vmatpush1.bf16.msra.mxu0 %v1492
      %1515 = vmatprep.subr.bf16.mxu0 0
      %1516 = vmatpush1.bf16.msra.mxu0 %v1493
      %1517 = vmatprep.subr.bf16.mxu0 0
      %1518 = vmatpush1.bf16.msra.mxu0 %v1494
      %1519 = vmatprep.subr.bf16.mxu0 0
      %1520 = vmatpush1.bf16.msra.mxu0 %v1495
      %1521 = vmatprep.subr.bf16.mxu0 0
      %1522 = vmatpush1.bf16.msra.mxu0 0
      %1523 = vmatprep.subr.bf16.mxu0 0
      %1524 = vmatpush1.bf16.msra.mxu0 0
      %1525 = vmatprep.subr.bf16.mxu0 0
      %1526 = vmatpush1.bf16.msra.mxu0 0
      %1527 = vmatprep.subr.bf16.mxu0 0
      %1528 = vmatpush1.bf16.msra.mxu0 0
      %1529 = vmatprep.subr.bf16.mxu0 0
      %1530 = vmatpush1.bf16.msra.mxu0 0
      %1531 = vmatprep.subr.bf16.mxu0 0
      %1532 = vmatpush1.bf16.msra.mxu0 0
      %1533 = vmatprep.subr.bf16.mxu0 0
      %1534 = vmatpush1.bf16.msra.mxu0 0
      %1535 = vmatprep.subr.bf16.mxu0 0
      %1536 = vmatpush1.bf16.msra.mxu0 0
      %1537 = vmatprep.subr.bf16.mxu0 0
      %1538 = vmatpush1.bf16.msra.mxu0 0
      %1539 = vmatprep.subr.bf16.mxu0 0
      %1540 = vmatpush1.bf16.msra.mxu0 0
      %1541 = vmatprep.subr.bf16.mxu0 0
      %1542 = vmatpush1.bf16.msra.mxu0 0
      %1543 = vmatprep.subr.bf16.mxu0 0
      %1544 = vmatpush1.bf16.msra.mxu0 0
      %1545 = vmatprep.mubr.bf16.mxu0 0
      %1546 = vmatmul.mubr.bf16.gmra.mrb[0].mxu0 %v1502
      %v1547 = vpop.f32.mrb[0].mxu0
      %v1548 = vadd.f32 0.0, %v1547
      %v1549 = vpop.f32.mrb[0].mxu0
      %v1550 = vpop.f32.mrb[0].mxu0
      %v1551 = vadd.f32 0.0, %v1550
      %v1552 = vpop.f32.mrb[0].mxu0
      %1553 = vmatprep.mubr.bf16.mxu0 0
      %1554 = vmatmul.mubr.bf16.gmra.mrb[0].mxu0 %v1505
      %v1555 = vpop.f32.mrb[0].mxu0
      %v1556 = vadd.f32 0.0, %v1555
      %v1557 = vpop.f32.mrb[0].mxu0
      %v1558 = vpop.f32.mrb[0].mxu0
      %v1559 = vadd.f32 0.0, %v1558
      %v1560 = vpop.f32.mrb[0].mxu0
      %1561 = vmatprep.mubr.bf16.mxu0 0
      %1562 = vmatmul.mubr.bf16.gmra.mrb[0].mxu0 %v1508
      %v1563 = vpop.f32.mrb[0].mxu0
      %v1564 = vadd.f32 0.0, %v1563
      %v1565 = vpop.f32.mrb[0].mxu0
      %v1566 = vpop.f32.mrb[0].mxu0
      %v1567 = vadd.f32 0.0, %v1566
      %v1568 = vpop.f32.mrb[0].mxu0
      %1569 = vmatprep.mubr.bf16.mxu0 0
      %1570 = vmatmul.mubr.bf16.gmra.mrb[0].mxu0 %v1511
      %v1571 = vpop.f32.mrb[0].mxu0
      %v1572 = vadd.f32 0.0, %v1571
      %v1573 = vpop.f32.mrb[0].mxu0
      %v1574 = vpop.f32.mrb[0].mxu0
      %v1575 = vadd.f32 0.0, %v1574
      %v1576 = vpop.f32.mrb[0].mxu0
      %1577 = vdwg.mxu0
      %v1586 = vunpack.c.l.b16 %v1423
      %v1587 = vunpack.c.l.b16 %v1424
      %v1588 = vunpack.c.l.b16 %v1425
      %v1589 = vunpack.c.l.b16 %v1426
      %v1590 = vunpack.c.l.b16 %v1427
      %v1591 = vunpack.c.l.b16 %v1428
      %v1592 = vunpack.c.l.b16 %v1429
      %v1593 = vunpack.c.l.b16 %v1430
      %v1594 = vpack.c.b16 %v1587, %v1586
      %v1595 = vpack.c.b16 %v1589, %v1588
      %v1596 = vpack.c.b16 %v1591, %v1590
      %v1597 = vpack.c.b16 %v1593, %v1592
      %v1606 = vunpack.c.l.b16 %v1431
      %v1607 = vunpack.c.l.b16 %v1432
      %v1608 = vunpack.c.l.b16 %v1433
      %v1609 = vunpack.c.l.b16 %v1434
      %v1610 = vunpack.c.l.b16 %v1435
      %v1611 = vunpack.c.l.b16 %v1436
      %v1612 = vunpack.c.l.b16 %v1437
      %v1613 = vunpack.c.l.b16 %v1438
      %v1614 = vpack.c.b16 %v1607, %v1606
      %v1615 = vpack.c.b16 %v1609, %v1608
      %v1616 = vpack.c.b16 %v1611, %v1610
      %v1617 = vpack.c.b16 %v1613, %v1612
      %v1623 = vsel %vm1500, %v1594, 0
      %v1626 = vsel %vm1500, %v1595, 0
      %v1629 = vsel %vm1500, %v1596, 0
      %v1632 = vsel %vm1500, %v1597, 0
      %1634 = vmatprep.subr.bf16.mxu0 0
      %1635 = vmatpush1.bf16.msra.mxu0 %v1614
      %1636 = vmatprep.subr.bf16.mxu0 0
      %1637 = vmatpush1.bf16.msra.mxu0 %v1615
      %1638 = vmatprep.subr.bf16.mxu0 0
      %1639 = vmatpush1.bf16.msra.mxu0 %v1616
      %1640 = vmatprep.subr.bf16.mxu0 0
      %1641 = vmatpush1.bf16.msra.mxu0 %v1617
      %1642 = vmatprep.subr.bf16.mxu0 0
      %1643 = vmatpush1.bf16.msra.mxu0 0
      %1644 = vmatprep.subr.bf16.mxu0 0
      %1645 = vmatpush1.bf16.msra.mxu0 0
      %1646 = vmatprep.subr.bf16.mxu0 0
      %1647 = vmatpush1.bf16.msra.mxu0 0
      %1648 = vmatprep.subr.bf16.mxu0 0
      %1649 = vmatpush1.bf16.msra.mxu0 0
      %1650 = vmatprep.subr.bf16.mxu0 0
      %1651 = vmatpush1.bf16.msra.mxu0 0
      %1652 = vmatprep.subr.bf16.mxu0 0
      %1653 = vmatpush1.bf16.msra.mxu0 0
      %1654 = vmatprep.subr.bf16.mxu0 0
      %1655 = vmatpush1.bf16.msra.mxu0 0
      %1656 = vmatprep.subr.bf16.mxu0 0
      %1657 = vmatpush1.bf16.msra.mxu0 0
      %1658 = vmatprep.subr.bf16.mxu0 0
      %1659 = vmatpush1.bf16.msra.mxu0 0
      %1660 = vmatprep.subr.bf16.mxu0 0
      %1661 = vmatpush1.bf16.msra.mxu0 0
      %1662 = vmatprep.subr.bf16.mxu0 0
      %1663 = vmatpush1.bf16.msra.mxu0 0
      %1664 = vmatprep.subr.bf16.mxu0 0
      %1665 = vmatpush1.bf16.msra.mxu0 0
      %1666 = vmatprep.mubr.bf16.mxu0 0
      %1667 = vmatmul.mubr.bf16.gmra.mrb[0].mxu0 %v1623
      %v1668 = vpop.f32.mrb[0].mxu0
      %v1669 = vadd.f32 %v1548, %v1668
      %v1670 = vpop.f32.mrb[0].mxu0
      %v1671 = vpop.f32.mrb[0].mxu0
      %v1672 = vadd.f32 %v1551, %v1671
      %v1673 = vpop.f32.mrb[0].mxu0
      %1674 = vmatprep.mubr.bf16.mxu0 0
      %1675 = vmatmul.mubr.bf16.gmra.mrb[0].mxu0 %v1626
      %v1676 = vpop.f32.mrb[0].mxu0
      %v1677 = vadd.f32 %v1556, %v1676
      %v1678 = vpop.f32.mrb[0].mxu0
      %v1679 = vpop.f32.mrb[0].mxu0
      %v1680 = vadd.f32 %v1559, %v1679
      %v1681 = vpop.f32.mrb[0].mxu0
      %1682 = vmatprep.mubr.bf16.mxu0 0
      %1683 = vmatmul.mubr.bf16.gmra.mrb[0].mxu0 %v1629
      %v1684 = vpop.f32.mrb[0].mxu0
      %v1685 = vadd.f32 %v1564, %v1684
      %v1686 = vpop.f32.mrb[0].mxu0
      %v1687 = vpop.f32.mrb[0].mxu0
      %v1688 = vadd.f32 %v1567, %v1687
      %v1689 = vpop.f32.mrb[0].mxu0
      %1690 = vmatprep.mubr.bf16.mxu0 0
      %1691 = vmatmul.mubr.bf16.gmra.mrb[0].mxu0 %v1632
      %v1692 = vpop.f32.mrb[0].mxu0
      %v1693 = vadd.f32 %v1572, %v1692
      %v1694 = vpop.f32.mrb[0].mxu0
      %v1695 = vpop.f32.mrb[0].mxu0
      %v1696 = vadd.f32 %v1575, %v1695
      %v1697 = vpop.f32.mrb[0].mxu0
      %1698 = vdwg.mxu0
      %v1699 = vld [vmem:[#allocation2] sm:$0xf]
      %v1700 = vld [vmem:[#allocation2 + $0x4] sm:$0x1]
      %v1701 = vld [vmem:[#allocation2 + $0x8] sm:$0xf]
      %v1702 = vld [vmem:[#allocation2 + $0xc] sm:$0x1]
      %v1703 = vld [vmem:[#allocation2 + $0x10] sm:$0xf]
      %v1704 = vld [vmem:[#allocation2 + $0x14] sm:$0x1]
      %v1705 = vld [vmem:[#allocation2 + $0x18] sm:$0xf]
      %v1706 = vld [vmem:[#allocation2 + $0x1c] sm:$0x1]
      %v1707 = vld [vmem:[#allocation2 + $0x20] sm:$0xf]
      %v1708 = vld [vmem:[#allocation2 + $0x24] sm:$0x1]
      %v1709 = vld [vmem:[#allocation2 + $0x28] sm:$0xf]
      %v1710 = vld [vmem:[#allocation2 + $0x2c] sm:$0x1]
      %v1711 = vld [vmem:[#allocation2 + $0x30] sm:$0xf]
      %v1712 = vld [vmem:[#allocation2 + $0x34] sm:$0x1]
      %v1713 = vld [vmem:[#allocation2 + $0x38] sm:$0xf]
      %v1714 = vld [vmem:[#allocation2 + $0x3c] sm:$0x1]
      %vm1715 = vsmask.f32 3328
      %vm1716 = vsmask.f32 7440
      %vm1717 = vmor %vm1715, %vm1716
      %v1719 = vshrl.u32 %v1699, 16
      %v1721 = vrot.slane %v1719, 4
      %v1722 = vshll.u32 %v1699, 16
      %v1724 = vrot.slane %v1722, 5
      %v1725 = vor.u32 %v1721, %v1724
      %v1726 = vrot.slane %v1725, 4
      %v1728 = vshll.u32 %v1700, 16
      %v1730 = vrot.slane %v1728, 5
      %v1731 = vsel %vm1717, %v1726, %v1730
      %v1733 = vshrl.u32 %v1701, 16
      %v1735 = vrot.slane %v1733, 4
      %v1736 = vshll.u32 %v1701, 16
      %v1738 = vrot.slane %v1736, 5
      %v1739 = vor.u32 %v1735, %v1738
      %v1740 = vrot.slane %v1739, 4
      %v1742 = vshll.u32 %v1702, 16
      %v1744 = vrot.slane %v1742, 5
      %v1745 = vsel %vm1717, %v1740, %v1744
      %v1747 = vshrl.u32 %v1703, 16
      %v1749 = vrot.slane %v1747, 4
      %v1750 = vshll.u32 %v1703, 16
      %v1752 = vrot.slane %v1750, 5
      %v1753 = vor.u32 %v1749, %v1752
      %v1754 = vrot.slane %v1753, 4
      %v1756 = vshll.u32 %v1704, 16
      %v1758 = vrot.slane %v1756, 5
      %v1759 = vsel %vm1717, %v1754, %v1758
      %v1761 = vshrl.u32 %v1705, 16
      %v1763 = vrot.slane %v1761, 4
      %v1764 = vshll.u32 %v1705, 16
      %v1766 = vrot.slane %v1764, 5
      %v1767 = vor.u32 %v1763, %v1766
      %v1768 = vrot.slane %v1767, 4
      %v1770 = vshll.u32 %v1706, 16
      %v1772 = vrot.slane %v1770, 5
      %v1773 = vsel %vm1717, %v1768, %v1772
      %v1775 = vshrl.u32 %v1707, 16
      %v1777 = vrot.slane %v1775, 4
      %v1778 = vshll.u32 %v1707, 16
      %v1780 = vrot.slane %v1778, 5
      %v1781 = vor.u32 %v1777, %v1780
      %v1782 = vrot.slane %v1781, 4
      %v1784 = vshll.u32 %v1708, 16
      %v1786 = vrot.slane %v1784, 5
      %v1787 = vsel %vm1717, %v1782, %v1786
      %v1789 = vshrl.u32 %v1709, 16
      %v1791 = vrot.slane %v1789, 4
      %v1792 = vshll.u32 %v1709, 16
      %v1794 = vrot.slane %v1792, 5
      %v1795 = vor.u32 %v1791, %v1794
      %v1796 = vrot.slane %v1795, 4
      %v1798 = vshll.u32 %v1710, 16
      %v1800 = vrot.slane %v1798, 5
      %v1801 = vsel %vm1717, %v1796, %v1800
      %v1803 = vshrl.u32 %v1711, 16
      %v1805 = vrot.slane %v1803, 4
      %v1806 = vshll.u32 %v1711, 16
      %v1808 = vrot.slane %v1806, 5
      %v1809 = vor.u32 %v1805, %v1808
      %v1810 = vrot.slane %v1809, 4
      %v1812 = vshll.u32 %v1712, 16
      %v1814 = vrot.slane %v1812, 5
      %v1815 = vsel %vm1717, %v1810, %v1814
      %v1817 = vshrl.u32 %v1713, 16
      %v1819 = vrot.slane %v1817, 4
      %v1820 = vshll.u32 %v1713, 16
      %v1822 = vrot.slane %v1820, 5
      %v1823 = vor.u32 %v1819, %v1822
      %v1824 = vrot.slane %v1823, 4
      %v1826 = vshll.u32 %v1714, 16
      %v1828 = vrot.slane %v1826, 5
      %v1829 = vsel %vm1717, %v1824, %v1828
      %v1830 = vld [vmem:[%s2 + $0x40] sm:$0xf]
      %v1831 = vld [vmem:[%s2 + $0x44] sm:$0xf]
      %v1832 = vld [vmem:[%s2 + $0x48] sm:$0xf]
      %v1833 = vld [vmem:[%s2 + $0x4c] sm:$0xf]
      %v1834 = vld [vmem:[%s2 + $0x50] sm:$0xf]
      %v1835 = vld [vmem:[%s2 + $0x54] sm:$0xf]
      %v1836 = vld [vmem:[%s2 + $0x58] sm:$0xf]
      %v1837 = vld [vmem:[%s2 + $0x5c] sm:$0xf]
      %v1838 = vunpack.c.l.b16 %v1731
      %v1839 = vunpack.c.l.b16 %v1745
      %v1840 = vunpack.c.l.b16 %v1759
      %v1841 = vunpack.c.l.b16 %v1773
      %v1842 = vunpack.c.l.b16 %v1787
      %v1843 = vunpack.c.l.b16 %v1801
      %v1844 = vunpack.c.l.b16 %v1815
      %v1845 = vunpack.c.l.b16 %v1829
      %v1846 = vpack.c.b16 %v1839, %v1838
      %v1847 = vpack.c.b16 %v1841, %v1840
      %v1848 = vpack.c.b16 %v1843, %v1842
      %v1849 = vpack.c.b16 %v1845, %v1844
      %v1858 = vunpack.c.l.b16 %v1830
      %v1859 = vunpack.c.l.b16 %v1831
      %v1860 = vunpack.c.l.b16 %v1832
      %v1861 = vunpack.c.l.b16 %v1833
      %v1862 = vunpack.c.l.b16 %v1834
      %v1863 = vunpack.c.l.b16 %v1835
      %v1864 = vunpack.c.l.b16 %v1836
      %v1865 = vunpack.c.l.b16 %v1837
      %v1866 = vpack.c.b16 %v1859, %v1858
      %v1867 = vpack.c.b16 %v1861, %v1860
      %v1868 = vpack.c.b16 %v1863, %v1862
      %v1869 = vpack.c.b16 %v1865, %v1864
      %v1875 = vsel %vm1500, %v1846, 0
      %v1878 = vsel %vm1500, %v1847, 0
      %v1881 = vsel %vm1500, %v1848, 0
      %v1884 = vsel %vm1500, %v1849, 0
      %1886 = vmatprep.subr.bf16.mxu0 0
      %1887 = vmatpush1.bf16.msra.mxu0 %v1866
      %1888 = vmatprep.subr.bf16.mxu0 0
      %1889 = vmatpush1.bf16.msra.mxu0 %v1867
      %1890 = vmatprep.subr.bf16.mxu0 0
      %1891 = vmatpush1.bf16.msra.mxu0 %v1868
      %1892 = vmatprep.subr.bf16.mxu0 0
      %1893 = vmatpush1.bf16.msra.mxu0 %v1869
      %1894 = vmatprep.subr.bf16.mxu0 0
      %1895 = vmatpush1.bf16.msra.mxu0 0
      %1896 = vmatprep.subr.bf16.mxu0 0
      %1897 = vmatpush1.bf16.msra.mxu0 0
      %1898 = vmatprep.subr.bf16.mxu0 0
      %1899 = vmatpush1.bf16.msra.mxu0 0
      %1900 = vmatprep.subr.bf16.mxu0 0
      %1901 = vmatpush1.bf16.msra.mxu0 0
      %1902 = vmatprep.subr.bf16.mxu0 0
      %1903 = vmatpush1.bf16.msra.mxu0 0
      %1904 = vmatprep.subr.bf16.mxu0 0
      %1905 = vmatpush1.bf16.msra.mxu0 0
      %1906 = vmatprep.subr.bf16.mxu0 0
      %1907 = vmatpush1.bf16.msra.mxu0 0
      %1908 = vmatprep.subr.bf16.mxu0 0
      %1909 = vmatpush1.bf16.msra.mxu0 0
      %1910 = vmatprep.subr.bf16.mxu0 0
      %1911 = vmatpush1.bf16.msra.mxu0 0
      %1912 = vmatprep.subr.bf16.mxu0 0
      %1913 = vmatpush1.bf16.msra.mxu0 0
      %1914 = vmatprep.subr.bf16.mxu0 0
      %1915 = vmatpush1.bf16.msra.mxu0 0
      %1916 = vmatprep.subr.bf16.mxu0 0
      %1917 = vmatpush1.bf16.msra.mxu0 0
      %1918 = vmatprep.mubr.bf16.mxu0 0
      %1919 = vmatmul.mubr.bf16.gmra.mrb[0].mxu0 %v1875
      %v1920 = vpop.f32.mrb[0].mxu0
      %v1921 = vadd.f32 0.0, %v1920
      %v1922 = vpop.f32.mrb[0].mxu0
      %v1923 = vpop.f32.mrb[0].mxu0
      %v1924 = vadd.f32 0.0, %v1923
      %v1925 = vpop.f32.mrb[0].mxu0
      %1926 = vmatprep.mubr.bf16.mxu0 0
      %1927 = vmatmul.mubr.bf16.gmra.mrb[0].mxu0 %v1878
      %v1928 = vpop.f32.mrb[0].mxu0
      %v1929 = vadd.f32 0.0, %v1928
      %v1930 = vpop.f32.mrb[0].mxu0
      %v1931 = vpop.f32.mrb[0].mxu0
      %v1932 = vadd.f32 0.0, %v1931
      %v1933 = vpop.f32.mrb[0].mxu0
      %1934 = vmatprep.mubr.bf16.mxu0 0
      %1935 = vmatmul.mubr.bf16.gmra.mrb[0].mxu0 %v1881
      %v1936 = vpop.f32.mrb[0].mxu0
      %v1937 = vadd.f32 0.0, %v1936
      %v1938 = vpop.f32.mrb[0].mxu0
      %v1939 = vpop.f32.mrb[0].mxu0
      %v1940 = vadd.f32 0.0, %v1939
      %v1941 = vpop.f32.mrb[0].mxu0
      %1942 = vmatprep.mubr.bf16.mxu0 0
      %1943 = vmatmul.mubr.bf16.gmra.mrb[0].mxu0 %v1884
      %v1944 = vpop.f32.mrb[0].mxu0
      %v1945 = vadd.f32 0.0, %v1944
      %v1946 = vpop.f32.mrb[0].mxu0
      %v1947 = vpop.f32.mrb[0].mxu0
      %v1948 = vadd.f32 0.0, %v1947
      %v1949 = vpop.f32.mrb[0].mxu0
      %1950 = vdwg.mxu0
      %v1951 = vadd.f32 %v1669, %v1921
      %v1952 = vadd.f32 %v1672, %v1924
      %v1953 = vadd.f32 %v1677, %v1929
      %v1954 = vadd.f32 %v1680, %v1932
      %v1955 = vadd.f32 %v1685, %v1937
      %v1956 = vadd.f32 %v1688, %v1940
      %v1957 = vadd.f32 %v1693, %v1945
      %v1958 = vadd.f32 %v1696, %v1948
      %v1959 = vld [vmem:[%s1337] sm:$0xf]
      %v1960 = vld [vmem:[%s1337 + $0x8] sm:$0xf]
      %v1961 = vld [vmem:[%s1337 + $0x10] sm:$0xf]
      %v1962 = vld [vmem:[%s1337 + $0x18] sm:$0xf]
      %v1963 = vld [vmem:[%s1337 + $0x20] sm:$0xf]
      %v1964 = vld [vmem:[%s1337 + $0x28] sm:$0xf]
      %v1965 = vld [vmem:[%s1337 + $0x30] sm:$0xf]
      %v1966 = vld [vmem:[%s1337 + $0x38] sm:$0xf]
      %v1967 = vld [vmem:[%s2 + $0x60] sm:$0xf]
      %v1968 = vld [vmem:[%s2 + $0x64] sm:$0xf]
      %v1969 = vld [vmem:[%s2 + $0x68] sm:$0xf]
      %v1970 = vld [vmem:[%s2 + $0x6c] sm:$0xf]
      %v1971 = vld [vmem:[%s2 + $0x70] sm:$0xf]
      %v1972 = vld [vmem:[%s2 + $0x74] sm:$0xf]
      %v1973 = vld [vmem:[%s2 + $0x78] sm:$0xf]
      %v1974 = vld [vmem:[%s2 + $0x7c] sm:$0xf]
      %v1983 = vunpack.c.l.b16 %v1959
      %v1984 = vunpack.c.l.b16 %v1960
      %v1985 = vunpack.c.l.b16 %v1961
      %v1986 = vunpack.c.l.b16 %v1962
      %v1987 = vunpack.c.l.b16 %v1963
      %v1988 = vunpack.c.l.b16 %v1964
      %v1989 = vunpack.c.l.b16 %v1965
      %v1990 = vunpack.c.l.b16 %v1966
      %v1991 = vpack.c.b16 %v1984, %v1983
      %v1992 = vpack.c.b16 %v1986, %v1985
      %v1993 = vpack.c.b16 %v1988, %v1987
      %v1994 = vpack.c.b16 %v1990, %v1989
      %v2003 = vunpack.c.l.b16 %v1967
      %v2004 = vunpack.c.l.b16 %v1968
      %v2005 = vunpack.c.l.b16 %v1969
      %v2006 = vunpack.c.l.b16 %v1970
      %v2007 = vunpack.c.l.b16 %v1971
      %v2008 = vunpack.c.l.b16 %v1972
      %v2009 = vunpack.c.l.b16 %v1973
      %v2010 = vunpack.c.l.b16 %v1974
      %v2011 = vpack.c.b16 %v2004, %v2003
      %v2012 = vpack.c.b16 %v2006, %v2005
      %v2013 = vpack.c.b16 %v2008, %v2007
      %v2014 = vpack.c.b16 %v2010, %v2009
      %v2020 = vsel %vm1500, %v1991, 0
      %v2023 = vsel %vm1500, %v1992, 0
      %v2026 = vsel %vm1500, %v1993, 0
      %v2029 = vsel %vm1500, %v1994, 0
      %2031 = vmatprep.subr.bf16.mxu0 0
      %2032 = vmatpush1.bf16.msra.mxu0 %v2011
      %2033 = vmatprep.subr.bf16.mxu0 0
      %2034 = vmatpush1.bf16.msra.mxu0 %v2012
      %2035 = vmatprep.subr.bf16.mxu0 0
      %2036 = vmatpush1.bf16.msra.mxu0 %v2013
      %2037 = vmatprep.subr.bf16.mxu0 0
      %2038 = vmatpush1.bf16.msra.mxu0 %v2014
      %2039 = vmatprep.subr.bf16.mxu0 0
      %2040 = vmatpush1.bf16.msra.mxu0 0
      %2041 = vmatprep.subr.bf16.mxu0 0
      %2042 = vmatpush1.bf16.msra.mxu0 0
      %2043 = vmatprep.subr.bf16.mxu0 0
      %2044 = vmatpush1.bf16.msra.mxu0 0
      %2045 = vmatprep.subr.bf16.mxu0 0
      %2046 = vmatpush1.bf16.msra.mxu0 0
      %2047 = vmatprep.subr.bf16.mxu0 0
      %2048 = vmatpush1.bf16.msra.mxu0 0
      %2049 = vmatprep.subr.bf16.mxu0 0
      %2050 = vmatpush1.bf16.msra.mxu0 0
      %2051 = vmatprep.subr.bf16.mxu0 0
      %2052 = vmatpush1.bf16.msra.mxu0 0
      %2053 = vmatprep.subr.bf16.mxu0 0
      %2054 = vmatpush1.bf16.msra.mxu0 0
      %2055 = vmatprep.subr.bf16.mxu0 0
      %2056 = vmatpush1.bf16.msra.mxu0 0
      %2057 = vmatprep.subr.bf16.mxu0 0
      %2058 = vmatpush1.bf16.msra.mxu0 0
      %2059 = vmatprep.subr.bf16.mxu0 0
      %2060 = vmatpush1.bf16.msra.mxu0 0
      %2061 = vmatprep.subr.bf16.mxu0 0
      %2062 = vmatpush1.bf16.msra.mxu0 0
      %2063 = vmatprep.mubr.bf16.mxu0 0
      %2064 = vmatmul.mubr.bf16.gmra.mrb[0].mxu0 %v2020
      %v2065 = vpop.f32.mrb[0].mxu0
      %v2066 = vadd.f32 0.0, %v2065
      %v2067 = vpop.f32.mrb[0].mxu0
      %v2068 = vpop.f32.mrb[0].mxu0
      %v2069 = vadd.f32 0.0, %v2068
      %v2070 = vpop.f32.mrb[0].mxu0
      %2071 = vmatprep.mubr.bf16.mxu0 0
      %2072 = vmatmul.mubr.bf16.gmra.mrb[0].mxu0 %v2023
      %v2073 = vpop.f32.mrb[0].mxu0
      %v2074 = vadd.f32 0.0, %v2073
      %v2075 = vpop.f32.mrb[0].mxu0
      %v2076 = vpop.f32.mrb[0].mxu0
      %v2077 = vadd.f32 0.0, %v2076
      %v2078 = vpop.f32.mrb[0].mxu0
      %2079 = vmatprep.mubr.bf16.mxu0 0
      %2080 = vmatmul.mubr.bf16.gmra.mrb[0].mxu0 %v2026
      %v2081 = vpop.f32.mrb[0].mxu0
      %v2082 = vadd.f32 0.0, %v2081
      %v2083 = vpop.f32.mrb[0].mxu0
      %v2084 = vpop.f32.mrb[0].mxu0
      %v2085 = vadd.f32 0.0, %v2084
      %v2086 = vpop.f32.mrb[0].mxu0
      %2087 = vmatprep.mubr.bf16.mxu0 0
      %2088 = vmatmul.mubr.bf16.gmra.mrb[0].mxu0 %v2029
      %v2089 = vpop.f32.mrb[0].mxu0
      %v2090 = vadd.f32 0.0, %v2089
      %v2091 = vpop.f32.mrb[0].mxu0
      %v2092 = vpop.f32.mrb[0].mxu0
      %v2093 = vadd.f32 0.0, %v2092
      %v2094 = vpop.f32.mrb[0].mxu0
      %2095 = vdwg.mxu0
      %v2096 = vadd.f32 %v1951, %v2066
      %v2097 = vadd.f32 %v1952, %v2069
      %v2098 = vadd.f32 %v1953, %v2074
      %v2099 = vadd.f32 %v1954, %v2077
      %v2100 = vadd.f32 %v1955, %v2082
      %v2101 = vadd.f32 %v1956, %v2085
      %v2102 = vadd.f32 %v1957, %v2090
      %v2103 = vadd.f32 %v1958, %v2093
      %v2104 = vld [vmem:[%s1414] sm:$0xf]
      %v2105 = vld [vmem:[%s1414 + $0x8] sm:$0xf]
      %v2106 = vld [vmem:[%s1414 + $0x10] sm:$0xf]
      %v2107 = vld [vmem:[%s1414 + $0x18] sm:$0xf]
      %v2108 = vld [vmem:[%s1414 + $0x20] sm:$0xf]
      %v2109 = vld [vmem:[%s1414 + $0x28] sm:$0xf]
      %v2110 = vld [vmem:[%s1414 + $0x30] sm:$0xf]
      %v2111 = vld [vmem:[%s1414 + $0x38] sm:$0xf]
      %v2112 = vld [vmem:[%s2 + $0x80] sm:$0xf]
      %v2113 = vld [vmem:[%s2 + $0x84] sm:$0xf]
      %v2114 = vld [vmem:[%s2 + $0x88] sm:$0xf]
      %v2115 = vld [vmem:[%s2 + $0x8c] sm:$0xf]
      %v2116 = vld [vmem:[%s2 + $0x90] sm:$0xf]
      %v2117 = vld [vmem:[%s2 + $0x94] sm:$0xf]
      %v2118 = vld [vmem:[%s2 + $0x98] sm:$0xf]
      %v2119 = vld [vmem:[%s2 + $0x9c] sm:$0xf]
      %v2128 = vunpack.c.l.b16 %v2104
      %v2129 = vunpack.c.l.b16 %v2105
      %v2130 = vunpack.c.l.b16 %v2106
      %v2131 = vunpack.c.l.b16 %v2107
      %v2132 = vunpack.c.l.b16 %v2108
      %v2133 = vunpack.c.l.b16 %v2109
      %v2134 = vunpack.c.l.b16 %v2110
      %v2135 = vunpack.c.l.b16 %v2111
      %v2136 = vpack.c.b16 %v2129, %v2128
      %v2137 = vpack.c.b16 %v2131, %v2130
      %v2138 = vpack.c.b16 %v2133, %v2132
      %v2139 = vpack.c.b16 %v2135, %v2134
      %v2148 = vunpack.c.l.b16 %v2112
      %v2149 = vunpack.c.l.b16 %v2113
      %v2150 = vunpack.c.l.b16 %v2114
      %v2151 = vunpack.c.l.b16 %v2115
      %v2152 = vunpack.c.l.b16 %v2116
      %v2153 = vunpack.c.l.b16 %v2117
      %v2154 = vunpack.c.l.b16 %v2118
      %v2155 = vunpack.c.l.b16 %v2119
      %v2156 = vpack.c.b16 %v2149, %v2148
      %v2157 = vpack.c.b16 %v2151, %v2150
      %v2158 = vpack.c.b16 %v2153, %v2152
      %v2159 = vpack.c.b16 %v2155, %v2154
      %v2165 = vsel %vm1500, %v2136, 0
      %v2168 = vsel %vm1500, %v2137, 0
      %v2171 = vsel %vm1500, %v2138, 0
      %v2174 = vsel %vm1500, %v2139, 0
      %2176 = vmatprep.subr.bf16.mxu0 0
      %2177 = vmatpush1.bf16.msra.mxu0 %v2156
      %2178 = vmatprep.subr.bf16.mxu0 0
      %2179 = vmatpush1.bf16.msra.mxu0 %v2157
      %2180 = vmatprep.subr.bf16.mxu0 0
      %2181 = vmatpush1.bf16.msra.mxu0 %v2158
      %2182 = vmatprep.subr.bf16.mxu0 0
      %2183 = vmatpush1.bf16.msra.mxu0 %v2159
      %2184 = vmatprep.subr.bf16.mxu0 0
      %2185 = vmatpush1.bf16.msra.mxu0 0
      %2186 = vmatprep.subr.bf16.mxu0 0
      %2187 = vmatpush1.bf16.msra.mxu0 0
      %2188 = vmatprep.subr.bf16.mxu0 0
      %2189 = vmatpush1.bf16.msra.mxu0 0
      %2190 = vmatprep.subr.bf16.mxu0 0
      %2191 = vmatpush1.bf16.msra.mxu0 0
      %2192 = vmatprep.subr.bf16.mxu0 0
      %2193 = vmatpush1.bf16.msra.mxu0 0
      %2194 = vmatprep.subr.bf16.mxu0 0
      %2195 = vmatpush1.bf16.msra.mxu0 0
      %2196 = vmatprep.subr.bf16.mxu0 0
      %2197 = vmatpush1.bf16.msra.mxu0 0
      %2198 = vmatprep.subr.bf16.mxu0 0
      %2199 = vmatpush1.bf16.msra.mxu0 0
      %2200 = vmatprep.subr.bf16.mxu0 0
      %2201 = vmatpush1.bf16.msra.mxu0 0
      %2202 = vmatprep.subr.bf16.mxu0 0
      %2203 = vmatpush1.bf16.msra.mxu0 0
      %2204 = vmatprep.subr.bf16.mxu0 0
      %2205 = vmatpush1.bf16.msra.mxu0 0
      %2206 = vmatprep.subr.bf16.mxu0 0
      %2207 = vmatpush1.bf16.msra.mxu0 0
      %2208 = vmatprep.mubr.bf16.mxu0 0
      %2209 = vmatmul.mubr.bf16.gmra.mrb[0].mxu0 %v2165
      %v2210 = vpop.f32.mrb[0].mxu0
      %v2211 = vadd.f32 0.0, %v2210
      %v2212 = vpop.f32.mrb[0].mxu0
      %v2213 = vpop.f32.mrb[0].mxu0
      %v2214 = vadd.f32 0.0, %v2213
      %v2215 = vpop.f32.mrb[0].mxu0
      %2216 = vmatprep.mubr.bf16.mxu0 0
      %2217 = vmatmul.mubr.bf16.gmra.mrb[0].mxu0 %v2168
      %v2218 = vpop.f32.mrb[0].mxu0
      %v2219 = vadd.f32 0.0, %v2218
      %v2220 = vpop.f32.mrb[0].mxu0
      %v2221 = vpop.f32.mrb[0].mxu0
      %v2222 = vadd.f32 0.0, %v2221
      %v2223 = vpop.f32.mrb[0].mxu0
      %2224 = vmatprep.mubr.bf16.mxu0 0
      %2225 = vmatmul.mubr.bf16.gmra.mrb[0].mxu0 %v2171
      %v2226 = vpop.f32.mrb[0].mxu0
      %v2227 = vadd.f32 0.0, %v2226
      %v2228 = vpop.f32.mrb[0].mxu0
      %v2229 = vpop.f32.mrb[0].mxu0
      %v2230 = vadd.f32 0.0, %v2229
      %v2231 = vpop.f32.mrb[0].mxu0
      %2232 = vmatprep.mubr.bf16.mxu0 0
      %2233 = vmatmul.mubr.bf16.gmra.mrb[0].mxu0 %v2174
      %v2234 = vpop.f32.mrb[0].mxu0
      %v2235 = vadd.f32 0.0, %v2234
      %v2236 = vpop.f32.mrb[0].mxu0
      %v2237 = vpop.f32.mrb[0].mxu0
      %v2238 = vadd.f32 0.0, %v2237
      %v2239 = vpop.f32.mrb[0].mxu0
      %2240 = vdwg.mxu0
      %v2241 = vadd.f32 %v2096, %v2211
      %v2242 = vadd.f32 %v2097, %v2214
      %v2243 = vadd.f32 %v2098, %v2219
      %v2244 = vadd.f32 %v2099, %v2222
      %v2245 = vadd.f32 %v2100, %v2227
      %v2246 = vadd.f32 %v2101, %v2230
      %v2247 = vadd.f32 %v2102, %v2235
      %v2248 = vadd.f32 %v2103, %v2238
      %v2249 = vld [vmem:[%s1337] sm:$0xf]
      %v2250 = vld [vmem:[%s1337 + $0x4] sm:$0x1]
      %v2251 = vld [vmem:[%s1337 + $0x8] sm:$0xf]
      %v2252 = vld [vmem:[%s1337 + $0xc] sm:$0x1]
      %v2253 = vld [vmem:[%s1337 + $0x10] sm:$0xf]
      %v2254 = vld [vmem:[%s1337 + $0x14] sm:$0x1]
      %v2255 = vld [vmem:[%s1337 + $0x18] sm:$0xf]
      %v2256 = vld [vmem:[%s1337 + $0x1c] sm:$0x1]
      %v2257 = vld [vmem:[%s1337 + $0x20] sm:$0xf]
      %v2258 = vld [vmem:[%s1337 + $0x24] sm:$0x1]
      %v2259 = vld [vmem:[%s1337 + $0x28] sm:$0xf]
      %v2260 = vld [vmem:[%s1337 + $0x2c] sm:$0x1]
      %v2261 = vld [vmem:[%s1337 + $0x30] sm:$0xf]
      %v2262 = vld [vmem:[%s1337 + $0x34] sm:$0x1]
      %v2263 = vld [vmem:[%s1337 + $0x38] sm:$0xf]
      %v2264 = vld [vmem:[%s1337 + $0x3c] sm:$0x1]
      %v2266 = vshrl.u32 %v2249, 16
      %v2268 = vrot.slane %v2266, 4
      %v2269 = vshll.u32 %v2249, 16
      %v2271 = vrot.slane %v2269, 5
      %v2272 = vor.u32 %v2268, %v2271
      %v2273 = vrot.slane %v2272, 4
      %v2275 = vshll.u32 %v2250, 16
      %v2277 = vrot.slane %v2275, 5
      %v2278 = vsel %vm1717, %v2273, %v2277
      %v2280 = vshrl.u32 %v2251, 16
      %v2282 = vrot.slane %v2280, 4
      %v2283 = vshll.u32 %v2251, 16
      %v2285 = vrot.slane %v2283, 5
      %v2286 = vor.u32 %v2282, %v2285
      %v2287 = vrot.slane %v2286, 4
      %v2289 = vshll.u32 %v2252, 16
      %v2291 = vrot.slane %v2289, 5
      %v2292 = vsel %vm1717, %v2287, %v2291
      %v2294 = vshrl.u32 %v2253, 16
      %v2296 = vrot.slane %v2294, 4
      %v2297 = vshll.u32 %v2253, 16
      %v2299 = vrot.slane %v2297, 5
      %v2300 = vor.u32 %v2296, %v2299
      %v2301 = vrot.slane %v2300, 4
      %v2303 = vshll.u32 %v2254, 16
      %v2305 = vrot.slane %v2303, 5
      %v2306 = vsel %vm1717, %v2301, %v2305
      %v2308 = vshrl.u32 %v2255, 16
      %v2310 = vrot.slane %v2308, 4
      %v2311 = vshll.u32 %v2255, 16
      %v2313 = vrot.slane %v2311, 5
      %v2314 = vor.u32 %v2310, %v2313
      %v2315 = vrot.slane %v2314, 4
      %v2317 = vshll.u32 %v2256, 16
      %v2319 = vrot.slane %v2317, 5
      %v2320 = vsel %vm1717, %v2315, %v2319
      %v2322 = vshrl.u32 %v2257, 16
      %v2324 = vrot.slane %v2322, 4
      %v2325 = vshll.u32 %v2257, 16
      %v2327 = vrot.slane %v2325, 5
      %v2328 = vor.u32 %v2324, %v2327
      %v2329 = vrot.slane %v2328, 4
      %v2331 = vshll.u32 %v2258, 16
      %v2333 = vrot.slane %v2331, 5
      %v2334 = vsel %vm1717, %v2329, %v2333
      %v2336 = vshrl.u32 %v2259, 16
      %v2338 = vrot.slane %v2336, 4
      %v2339 = vshll.u32 %v2259, 16
      %v2341 = vrot.slane %v2339, 5
      %v2342 = vor.u32 %v2338, %v2341
      %v2343 = vrot.slane %v2342, 4
      %v2345 = vshll.u32 %v2260, 16
      %v2347 = vrot.slane %v2345, 5
      %v2348 = vsel %vm1717, %v2343, %v2347
      %v2350 = vshrl.u32 %v2261, 16
      %v2352 = vrot.slane %v2350, 4
      %v2353 = vshll.u32 %v2261, 16
      %v2355 = vrot.slane %v2353, 5
      %v2356 = vor.u32 %v2352, %v2355
      %v2357 = vrot.slane %v2356, 4
      %v2359 = vshll.u32 %v2262, 16
      %v2361 = vrot.slane %v2359, 5
      %v2362 = vsel %vm1717, %v2357, %v2361
      %v2364 = vshrl.u32 %v2263, 16
      %v2366 = vrot.slane %v2364, 4
      %v2367 = vshll.u32 %v2263, 16
      %v2369 = vrot.slane %v2367, 5
      %v2370 = vor.u32 %v2366, %v2369
      %v2371 = vrot.slane %v2370, 4
      %v2373 = vshll.u32 %v2264, 16
      %v2375 = vrot.slane %v2373, 5
      %v2376 = vsel %vm1717, %v2371, %v2375
      %v2377 = vld [vmem:[%s2 + $0xa0] sm:$0xf]
      %v2378 = vld [vmem:[%s2 + $0xa4] sm:$0xf]
      %v2379 = vld [vmem:[%s2 + $0xa8] sm:$0xf]
      %v2380 = vld [vmem:[%s2 + $0xac] sm:$0xf]
      %v2381 = vld [vmem:[%s2 + $0xb0] sm:$0xf]
      %v2382 = vld [vmem:[%s2 + $0xb4] sm:$0xf]
      %v2383 = vld [vmem:[%s2 + $0xb8] sm:$0xf]
      %v2384 = vld [vmem:[%s2 + $0xbc] sm:$0xf]
      %v2385 = vunpack.c.l.b16 %v2278
      %v2386 = vunpack.c.l.b16 %v2292
      %v2387 = vunpack.c.l.b16 %v2306
      %v2388 = vunpack.c.l.b16 %v2320
      %v2389 = vunpack.c.l.b16 %v2334
      %v2390 = vunpack.c.l.b16 %v2348
      %v2391 = vunpack.c.l.b16 %v2362
      %v2392 = vunpack.c.l.b16 %v2376
      %v2393 = vpack.c.b16 %v2386, %v2385
      %v2394 = vpack.c.b16 %v2388, %v2387
      %v2395 = vpack.c.b16 %v2390, %v2389
      %v2396 = vpack.c.b16 %v2392, %v2391
      %v2405 = vunpack.c.l.b16 %v2377
      %v2406 = vunpack.c.l.b16 %v2378
      %v2407 = vunpack.c.l.b16 %v2379
      %v2408 = vunpack.c.l.b16 %v2380
      %v2409 = vunpack.c.l.b16 %v2381
      %v2410 = vunpack.c.l.b16 %v2382
      %v2411 = vunpack.c.l.b16 %v2383
      %v2412 = vunpack.c.l.b16 %v2384
      %v2413 = vpack.c.b16 %v2406, %v2405
      %v2414 = vpack.c.b16 %v2408, %v2407
      %v2415 = vpack.c.b16 %v2410, %v2409
      %v2416 = vpack.c.b16 %v2412, %v2411
      %v2422 = vsel %vm1500, %v2393, 0
      %v2425 = vsel %vm1500, %v2394, 0
      %v2428 = vsel %vm1500, %v2395, 0
      %v2431 = vsel %vm1500, %v2396, 0
      %2433 = vmatprep.subr.bf16.mxu0 0
      %2434 = vmatpush1.bf16.msra.mxu0 %v2413
      %2435 = vmatprep.subr.bf16.mxu0 0
      %2436 = vmatpush1.bf16.msra.mxu0 %v2414
      %2437 = vmatprep.subr.bf16.mxu0 0
      %2438 = vmatpush1.bf16.msra.mxu0 %v2415
      %2439 = vmatprep.subr.bf16.mxu0 0
      %2440 = vmatpush1.bf16.msra.mxu0 %v2416
      %2441 = vmatprep.subr.bf16.mxu0 0
      %2442 = vmatpush1.bf16.msra.mxu0 0
      %2443 = vmatprep.subr.bf16.mxu0 0
      %2444 = vmatpush1.bf16.msra.mxu0 0
      %2445 = vmatprep.subr.bf16.mxu0 0
      %2446 = vmatpush1.bf16.msra.mxu0 0
      %2447 = vmatprep.subr.bf16.mxu0 0
      %2448 = vmatpush1.bf16.msra.mxu0 0
      %2449 = vmatprep.subr.bf16.mxu0 0
      %2450 = vmatpush1.bf16.msra.mxu0 0
      %2451 = vmatprep.subr.bf16.mxu0 0
      %2452 = vmatpush1.bf16.msra.mxu0 0
      %2453 = vmatprep.subr.bf16.mxu0 0
      %2454 = vmatpush1.bf16.msra.mxu0 0
      %2455 = vmatprep.subr.bf16.mxu0 0
      %2456 = vmatpush1.bf16.msra.mxu0 0
      %2457 = vmatprep.subr.bf16.mxu0 0
      %2458 = vmatpush1.bf16.msra.mxu0 0
      %2459 = vmatprep.subr.bf16.mxu0 0
      %2460 = vmatpush1.bf16.msra.mxu0 0
      %2461 = vmatprep.subr.bf16.mxu0 0
      %2462 = vmatpush1.bf16.msra.mxu0 0
      %2463 = vmatprep.subr.bf16.mxu0 0
      %2464 = vmatpush1.bf16.msra.mxu0 0
      %2465 = vmatprep.mubr.bf16.mxu0 0
      %2466 = vmatmul.mubr.bf16.gmra.mrb[0].mxu0 %v2422
      %v2467 = vpop.f32.mrb[0].mxu0
      %v2468 = vadd.f32 0.0, %v2467
      %v2469 = vpop.f32.mrb[0].mxu0
      %v2470 = vpop.f32.mrb[0].mxu0
      %v2471 = vadd.f32 0.0, %v2470
      %v2472 = vpop.f32.mrb[0].mxu0
      %2473 = vmatprep.mubr.bf16.mxu0 0
      %2474 = vmatmul.mubr.bf16.gmra.mrb[0].mxu0 %v2425
      %v2475 = vpop.f32.mrb[0].mxu0
      %v2476 = vadd.f32 0.0, %v2475
      %v2477 = vpop.f32.mrb[0].mxu0
      %v2478 = vpop.f32.mrb[0].mxu0
      %v2479 = vadd.f32 0.0, %v2478
      %v2480 = vpop.f32.mrb[0].mxu0
      %2481 = vmatprep.mubr.bf16.mxu0 0
      %2482 = vmatmul.mubr.bf16.gmra.mrb[0].mxu0 %v2428
      %v2483 = vpop.f32.mrb[0].mxu0
      %v2484 = vadd.f32 0.0, %v2483
      %v2485 = vpop.f32.mrb[0].mxu0
      %v2486 = vpop.f32.mrb[0].mxu0
      %v2487 = vadd.f32 0.0, %v2486
      %v2488 = vpop.f32.mrb[0].mxu0
      %2489 = vmatprep.mubr.bf16.mxu0 0
      %2490 = vmatmul.mubr.bf16.gmra.mrb[0].mxu0 %v2431
      %v2491 = vpop.f32.mrb[0].mxu0
      %v2492 = vadd.f32 0.0, %v2491
      %v2493 = vpop.f32.mrb[0].mxu0
      %v2494 = vpop.f32.mrb[0].mxu0
      %v2495 = vadd.f32 0.0, %v2494
      %v2496 = vpop.f32.mrb[0].mxu0
      %2497 = vdwg.mxu0
      %v2498 = vadd.f32 %v2241, %v2468
      %v2499 = vadd.f32 %v2242, %v2471
      %v2500 = vadd.f32 %v2243, %v2476
      %v2501 = vadd.f32 %v2244, %v2479
      %v2502 = vadd.f32 %v2245, %v2484
      %v2503 = vadd.f32 %v2246, %v2487
      %v2504 = vadd.f32 %v2247, %v2492
      %v2505 = vadd.f32 %v2248, %v2495
      %v2506 = vld [vmem:[%s1148] sm:$0xf]
      %v2507 = vld [vmem:[%s1148 + $0x8] sm:$0xf]
      %v2508 = vld [vmem:[%s1148 + $0x10] sm:$0xf]
      %v2509 = vld [vmem:[%s1148 + $0x18] sm:$0xf]
      %v2510 = vld [vmem:[%s1148 + $0x20] sm:$0xf]
      %v2511 = vld [vmem:[%s1148 + $0x28] sm:$0xf]
      %v2512 = vld [vmem:[%s1148 + $0x30] sm:$0xf]
      %v2513 = vld [vmem:[%s1148 + $0x38] sm:$0xf]
      %v2514 = vld [vmem:[%s2 + $0xc0] sm:$0xf]
      %v2515 = vld [vmem:[%s2 + $0xc4] sm:$0xf]
      %v2516 = vld [vmem:[%s2 + $0xc8] sm:$0xf]
      %v2517 = vld [vmem:[%s2 + $0xcc] sm:$0xf]
      %v2518 = vld [vmem:[%s2 + $0xd0] sm:$0xf]
      %v2519 = vld [vmem:[%s2 + $0xd4] sm:$0xf]
      %v2520 = vld [vmem:[%s2 + $0xd8] sm:$0xf]
      %v2521 = vld [vmem:[%s2 + $0xdc] sm:$0xf]
      %v2530 = vunpack.c.l.b16 %v2506
      %v2531 = vunpack.c.l.b16 %v2507
      %v2532 = vunpack.c.l.b16 %v2508
      %v2533 = vunpack.c.l.b16 %v2509
      %v2534 = vunpack.c.l.b16 %v2510
      %v2535 = vunpack.c.l.b16 %v2511
      %v2536 = vunpack.c.l.b16 %v2512
      %v2537 = vunpack.c.l.b16 %v2513
      %v2538 = vpack.c.b16 %v2531, %v2530
      %v2539 = vpack.c.b16 %v2533, %v2532
      %v2540 = vpack.c.b16 %v2535, %v2534
      %v2541 = vpack.c.b16 %v2537, %v2536
      %v2550 = vunpack.c.l.b16 %v2514
      %v2551 = vunpack.c.l.b16 %v2515
      %v2552 = vunpack.c.l.b16 %v2516
      %v2553 = vunpack.c.l.b16 %v2517
      %v2554 = vunpack.c.l.b16 %v2518
      %v2555 = vunpack.c.l.b16 %v2519
      %v2556 = vunpack.c.l.b16 %v2520
      %v2557 = vunpack.c.l.b16 %v2521
      %v2558 = vpack.c.b16 %v2551, %v2550
      %v2559 = vpack.c.b16 %v2553, %v2552
      %v2560 = vpack.c.b16 %v2555, %v2554
      %v2561 = vpack.c.b16 %v2557, %v2556
      %v2567 = vsel %vm1500, %v2538, 0
      %v2570 = vsel %vm1500, %v2539, 0
      %v2573 = vsel %vm1500, %v2540, 0
      %v2576 = vsel %vm1500, %v2541, 0
      %2578 = vmatprep.subr.bf16.mxu0 0
      %2579 = vmatpush1.bf16.msra.mxu0 %v2558
      %2580 = vmatprep.subr.bf16.mxu0 0
      %2581 = vmatpush1.bf16.msra.mxu0 %v2559
      %2582 = vmatprep.subr.bf16.mxu0 0
      %2583 = vmatpush1.bf16.msra.mxu0 %v2560
      %2584 = vmatprep.subr.bf16.mxu0 0
      %2585 = vmatpush1.bf16.msra.mxu0 %v2561
      %2586 = vmatprep.subr.bf16.mxu0 0
      %2587 = vmatpush1.bf16.msra.mxu0 0
      %2588 = vmatprep.subr.bf16.mxu0 0
      %2589 = vmatpush1.bf16.msra.mxu0 0
      %2590 = vmatprep.subr.bf16.mxu0 0
      %2591 = vmatpush1.bf16.msra.mxu0 0
      %2592 = vmatprep.subr.bf16.mxu0 0
      %2593 = vmatpush1.bf16.msra.mxu0 0
      %2594 = vmatprep.subr.bf16.mxu0 0
      %2595 = vmatpush1.bf16.msra.mxu0 0
      %2596 = vmatprep.subr.bf16.mxu0 0
      %2597 = vmatpush1.bf16.msra.mxu0 0
      %2598 = vmatprep.subr.bf16.mxu0 0
      %2599 = vmatpush1.bf16.msra.mxu0 0
      %2600 = vmatprep.subr.bf16.mxu0 0
      %2601 = vmatpush1.bf16.msra.mxu0 0
      %2602 = vmatprep.subr.bf16.mxu0 0
      %2603 = vmatpush1.bf16.msra.mxu0 0
      %2604 = vmatprep.subr.bf16.mxu0 0
      %2605 = vmatpush1.bf16.msra.mxu0 0
      %2606 = vmatprep.subr.bf16.mxu0 0
      %2607 = vmatpush1.bf16.msra.mxu0 0
      %2608 = vmatprep.subr.bf16.mxu0 0
      %2609 = vmatpush1.bf16.msra.mxu0 0
      %2610 = vmatprep.mubr.bf16.mxu0 0
      %2611 = vmatmul.mubr.bf16.gmra.mrb[0].mxu0 %v2567
      %v2612 = vpop.f32.mrb[0].mxu0
      %v2613 = vadd.f32 0.0, %v2612
      %v2614 = vpop.f32.mrb[0].mxu0
      %v2615 = vpop.f32.mrb[0].mxu0
      %v2616 = vadd.f32 0.0, %v2615
      %v2617 = vpop.f32.mrb[0].mxu0
      %2618 = vmatprep.mubr.bf16.mxu0 0
      %2619 = vmatmul.mubr.bf16.gmra.mrb[0].mxu0 %v2570
      %v2620 = vpop.f32.mrb[0].mxu0
      %v2621 = vadd.f32 0.0, %v2620
      %v2622 = vpop.f32.mrb[0].mxu0
      %v2623 = vpop.f32.mrb[0].mxu0
      %v2624 = vadd.f32 0.0, %v2623
      %v2625 = vpop.f32.mrb[0].mxu0
      %2626 = vmatprep.mubr.bf16.mxu0 0
      %2627 = vmatmul.mubr.bf16.gmra.mrb[0].mxu0 %v2573
      %v2628 = vpop.f32.mrb[0].mxu0
      %v2629 = vadd.f32 0.0, %v2628
      %v2630 = vpop.f32.mrb[0].mxu0
      %v2631 = vpop.f32.mrb[0].mxu0
      %v2632 = vadd.f32 0.0, %v2631
      %v2633 = vpop.f32.mrb[0].mxu0
      %2634 = vmatprep.mubr.bf16.mxu0 0
      %2635 = vmatmul.mubr.bf16.gmra.mrb[0].mxu0 %v2576
      %v2636 = vpop.f32.mrb[0].mxu0
      %v2637 = vadd.f32 0.0, %v2636
      %v2638 = vpop.f32.mrb[0].mxu0
      %v2639 = vpop.f32.mrb[0].mxu0
      %v2640 = vadd.f32 0.0, %v2639
      %v2641 = vpop.f32.mrb[0].mxu0
      %2642 = vdwg.mxu0
      %v2643 = vadd.f32 %v2498, %v2613
      %v2644 = vadd.f32 %v2499, %v2616
      %v2645 = vadd.f32 %v2500, %v2621
      %v2646 = vadd.f32 %v2501, %v2624
      %v2647 = vadd.f32 %v2502, %v2629
      %v2648 = vadd.f32 %v2503, %v2632
      %v2649 = vadd.f32 %v2504, %v2637
      %v2650 = vadd.f32 %v2505, %v2640
      %v2651 = vld [vmem:[%s1228] sm:$0xf]
      %v2652 = vld [vmem:[%s1228 + $0x8] sm:$0xf]
      %v2653 = vld [vmem:[%s1228 + $0x10] sm:$0xf]
      %v2654 = vld [vmem:[%s1228 + $0x18] sm:$0xf]
      %v2655 = vld [vmem:[%s1228 + $0x20] sm:$0xf]
      %v2656 = vld [vmem:[%s1228 + $0x28] sm:$0xf]
      %v2657 = vld [vmem:[%s1228 + $0x30] sm:$0xf]
      %v2658 = vld [vmem:[%s1228 + $0x38] sm:$0xf]
      %v2659 = vld [vmem:[%s2 + $0xe0] sm:$0xf]
      %v2660 = vld [vmem:[%s2 + $0xe4] sm:$0xf]
      %v2661 = vld [vmem:[%s2 + $0xe8] sm:$0xf]
      %v2662 = vld [vmem:[%s2 + $0xec] sm:$0xf]
      %v2663 = vld [vmem:[%s2 + $0xf0] sm:$0xf]
      %v2664 = vld [vmem:[%s2 + $0xf4] sm:$0xf]
      %v2665 = vld [vmem:[%s2 + $0xf8] sm:$0xf]
      %v2666 = vld [vmem:[%s2 + $0xfc] sm:$0xf]
      %v2675 = vunpack.c.l.b16 %v2651
      %v2676 = vunpack.c.l.b16 %v2652
      %v2677 = vunpack.c.l.b16 %v2653
      %v2678 = vunpack.c.l.b16 %v2654
      %v2679 = vunpack.c.l.b16 %v2655
      %v2680 = vunpack.c.l.b16 %v2656
      %v2681 = vunpack.c.l.b16 %v2657
      %v2682 = vunpack.c.l.b16 %v2658
      %v2683 = vpack.c.b16 %v2676, %v2675
      %v2684 = vpack.c.b16 %v2678, %v2677
      %v2685 = vpack.c.b16 %v2680, %v2679
      %v2686 = vpack.c.b16 %v2682, %v2681
      %v2695 = vunpack.c.l.b16 %v2659
      %v2696 = vunpack.c.l.b16 %v2660
      %v2697 = vunpack.c.l.b16 %v2661
      %v2698 = vunpack.c.l.b16 %v2662
      %v2699 = vunpack.c.l.b16 %v2663
      %v2700 = vunpack.c.l.b16 %v2664
      %v2701 = vunpack.c.l.b16 %v2665
      %v2702 = vunpack.c.l.b16 %v2666
      %v2703 = vpack.c.b16 %v2696, %v2695
      %v2704 = vpack.c.b16 %v2698, %v2697
      %v2705 = vpack.c.b16 %v2700, %v2699
      %v2706 = vpack.c.b16 %v2702, %v2701
      %v2712 = vsel %vm1500, %v2683, 0
      %v2715 = vsel %vm1500, %v2684, 0
      %v2718 = vsel %vm1500, %v2685, 0
      %v2721 = vsel %vm1500, %v2686, 0
      %2723 = vmatprep.subr.bf16.mxu0 0
      %2724 = vmatpush1.bf16.msra.mxu0 %v2703
      %2725 = vmatprep.subr.bf16.mxu0 0
      %2726 = vmatpush1.bf16.msra.mxu0 %v2704
      %2727 = vmatprep.subr.bf16.mxu0 0
      %2728 = vmatpush1.bf16.msra.mxu0 %v2705
      %2729 = vmatprep.subr.bf16.mxu0 0
      %2730 = vmatpush1.bf16.msra.mxu0 %v2706
      %2731 = vmatprep.subr.bf16.mxu0 0
      %2732 = vmatpush1.bf16.msra.mxu0 0
      %2733 = vmatprep.subr.bf16.mxu0 0
      %2734 = vmatpush1.bf16.msra.mxu0 0
      %2735 = vmatprep.subr.bf16.mxu0 0
      %2736 = vmatpush1.bf16.msra.mxu0 0
      %2737 = vmatprep.subr.bf16.mxu0 0
      %2738 = vmatpush1.bf16.msra.mxu0 0
      %2739 = vmatprep.subr.bf16.mxu0 0
      %2740 = vmatpush1.bf16.msra.mxu0 0
      %2741 = vmatprep.subr.bf16.mxu0 0
      %2742 = vmatpush1.bf16.msra.mxu0 0
      %2743 = vmatprep.subr.bf16.mxu0 0
      %2744 = vmatpush1.bf16.msra.mxu0 0
      %2745 = vmatprep.subr.bf16.mxu0 0
      %2746 = vmatpush1.bf16.msra.mxu0 0
      %2747 = vmatprep.subr.bf16.mxu0 0
      %2748 = vmatpush1.bf16.msra.mxu0 0
      %2749 = vmatprep.subr.bf16.mxu0 0
      %2750 = vmatpush1.bf16.msra.mxu0 0
      %2751 = vmatprep.subr.bf16.mxu0 0
      %2752 = vmatpush1.bf16.msra.mxu0 0
      %2753 = vmatprep.subr.bf16.mxu0 0
      %2754 = vmatpush1.bf16.msra.mxu0 0
      %2755 = vmatprep.mubr.bf16.mxu0 0
      %2756 = vmatmul.mubr.bf16.gmra.mrb[0].mxu0 %v2712
      %v2757 = vpop.f32.mrb[0].mxu0
      %v2758 = vadd.f32 0.0, %v2757
      %v2759 = vpop.f32.mrb[0].mxu0
      %v2760 = vpop.f32.mrb[0].mxu0
      %v2761 = vadd.f32 0.0, %v2760
      %v2762 = vpop.f32.mrb[0].mxu0
      %2763 = vmatprep.mubr.bf16.mxu0 0
      %2764 = vmatmul.mubr.bf16.gmra.mrb[0].mxu0 %v2715
      %v2765 = vpop.f32.mrb[0].mxu0
      %v2766 = vadd.f32 0.0, %v2765
      %v2767 = vpop.f32.mrb[0].mxu0
      %v2768 = vpop.f32.mrb[0].mxu0
      %v2769 = vadd.f32 0.0, %v2768
      %v2770 = vpop.f32.mrb[0].mxu0
      %2771 = vmatprep.mubr.bf16.mxu0 0
      %2772 = vmatmul.mubr.bf16.gmra.mrb[0].mxu0 %v2718
      %v2773 = vpop.f32.mrb[0].mxu0
      %v2774 = vadd.f32 0.0, %v2773
      %v2775 = vpop.f32.mrb[0].mxu0
      %v2776 = vpop.f32.mrb[0].mxu0
      %v2777 = vadd.f32 0.0, %v2776
      %v2778 = vpop.f32.mrb[0].mxu0
      %2779 = vmatprep.mubr.bf16.mxu0 0
      %2780 = vmatmul.mubr.bf16.gmra.mrb[0].mxu0 %v2721
      %v2781 = vpop.f32.mrb[0].mxu0
      %v2782 = vadd.f32 0.0, %v2781
      %v2783 = vpop.f32.mrb[0].mxu0
      %v2784 = vpop.f32.mrb[0].mxu0
      %v2785 = vadd.f32 0.0, %v2784
      %v2786 = vpop.f32.mrb[0].mxu0
      %2787 = vdwg.mxu0
      %v2788 = vadd.f32 %v2643, %v2758
      %v2789 = vadd.f32 %v2644, %v2761
      %v2790 = vadd.f32 %v2645, %v2766
      %v2791 = vadd.f32 %v2646, %v2769
      %v2792 = vadd.f32 %v2647, %v2774
      %v2793 = vadd.f32 %v2648, %v2777
      %v2794 = vadd.f32 %v2649, %v2782
      %v2795 = vadd.f32 %v2650, %v2785
      %v2796 = vld [vmem:[%s1148] sm:$0xf]
      %v2797 = vld [vmem:[%s1148 + $0x4] sm:$0x1]
      %v2798 = vld [vmem:[%s1148 + $0x8] sm:$0xf]
      %v2799 = vld [vmem:[%s1148 + $0xc] sm:$0x1]
      %v2800 = vld [vmem:[%s1148 + $0x10] sm:$0xf]
      %v2801 = vld [vmem:[%s1148 + $0x14] sm:$0x1]
      %v2802 = vld [vmem:[%s1148 + $0x18] sm:$0xf]
      %v2803 = vld [vmem:[%s1148 + $0x1c] sm:$0x1]
      %v2804 = vld [vmem:[%s1148 + $0x20] sm:$0xf]
      %v2805 = vld [vmem:[%s1148 + $0x24] sm:$0x1]
      %v2806 = vld [vmem:[%s1148 + $0x28] sm:$0xf]
      %v2807 = vld [vmem:[%s1148 + $0x2c] sm:$0x1]
      %v2808 = vld [vmem:[%s1148 + $0x30] sm:$0xf]
      %v2809 = vld [vmem:[%s1148 + $0x34] sm:$0x1]
      %v2810 = vld [vmem:[%s1148 + $0x38] sm:$0xf]
      %v2811 = vld [vmem:[%s1148 + $0x3c] sm:$0x1]
      %v2813 = vshrl.u32 %v2796, 16
      %v2815 = vrot.slane %v2813, 4
      %v2816 = vshll.u32 %v2796, 16
      %v2818 = vrot.slane %v2816, 5
      %v2819 = vor.u32 %v2815, %v2818
      %v2820 = vrot.slane %v2819, 4
      %v2822 = vshll.u32 %v2797, 16
      %v2824 = vrot.slane %v2822, 5
      %v2825 = vsel %vm1717, %v2820, %v2824
      %v2827 = vshrl.u32 %v2798, 16
      %v2829 = vrot.slane %v2827, 4
      %v2830 = vshll.u32 %v2798, 16
      %v2832 = vrot.slane %v2830, 5
      %v2833 = vor.u32 %v2829, %v2832
      %v2834 = vrot.slane %v2833, 4
      %v2836 = vshll.u32 %v2799, 16
      %v2838 = vrot.slane %v2836, 5
      %v2839 = vsel %vm1717, %v2834, %v2838
      %v2841 = vshrl.u32 %v2800, 16
      %v2843 = vrot.slane %v2841, 4
      %v2844 = vshll.u32 %v2800, 16
      %v2846 = vrot.slane %v2844, 5
      %v2847 = vor.u32 %v2843, %v2846
      %v2848 = vrot.slane %v2847, 4
      %v2850 = vshll.u32 %v2801, 16
      %v2852 = vrot.slane %v2850, 5
      %v2853 = vsel %vm1717, %v2848, %v2852
      %v2855 = vshrl.u32 %v2802, 16
      %v2857 = vrot.slane %v2855, 4
      %v2858 = vshll.u32 %v2802, 16
      %v2860 = vrot.slane %v2858, 5
      %v2861 = vor.u32 %v2857, %v2860
      %v2862 = vrot.slane %v2861, 4
      %v2864 = vshll.u32 %v2803, 16
      %v2866 = vrot.slane %v2864, 5
      %v2867 = vsel %vm1717, %v2862, %v2866
      %v2869 = vshrl.u32 %v2804, 16
      %v2871 = vrot.slane %v2869, 4
      %v2872 = vshll.u32 %v2804, 16
      %v2874 = vrot.slane %v2872, 5
      %v2875 = vor.u32 %v2871, %v2874
      %v2876 = vrot.slane %v2875, 4
      %v2878 = vshll.u32 %v2805, 16
      %v2880 = vrot.slane %v2878, 5
      %v2881 = vsel %vm1717, %v2876, %v2880
      %v2883 = vshrl.u32 %v2806, 16
      %v2885 = vrot.slane %v2883, 4
      %v2886 = vshll.u32 %v2806, 16
      %v2888 = vrot.slane %v2886, 5
      %v2889 = vor.u32 %v2885, %v2888
      %v2890 = vrot.slane %v2889, 4
      %v2892 = vshll.u32 %v2807, 16
      %v2894 = vrot.slane %v2892, 5
      %v2895 = vsel %vm1717, %v2890, %v2894
      %v2897 = vshrl.u32 %v2808, 16
      %v2899 = vrot.slane %v2897, 4
      %v2900 = vshll.u32 %v2808, 16
      %v2902 = vrot.slane %v2900, 5
      %v2903 = vor.u32 %v2899, %v2902
      %v2904 = vrot.slane %v2903, 4
      %v2906 = vshll.u32 %v2809, 16
      %v2908 = vrot.slane %v2906, 5
      %v2909 = vsel %vm1717, %v2904, %v2908
      %v2911 = vshrl.u32 %v2810, 16
      %v2913 = vrot.slane %v2911, 4
      %v2914 = vshll.u32 %v2810, 16
      %v2916 = vrot.slane %v2914, 5
      %v2917 = vor.u32 %v2913, %v2916
      %v2918 = vrot.slane %v2917, 4
      %v2920 = vshll.u32 %v2811, 16
      %v2922 = vrot.slane %v2920, 5
      %v2923 = vsel %vm1717, %v2918, %v2922
      %v2924 = vld [vmem:[%s2 + $0x100] sm:$0xf]
      %v2925 = vld [vmem:[%s2 + $0x104] sm:$0xf]
      %v2926 = vld [vmem:[%s2 + $0x108] sm:$0xf]
      %v2927 = vld [vmem:[%s2 + $0x10c] sm:$0xf]
      %v2928 = vld [vmem:[%s2 + $0x110] sm:$0xf]
      %v2929 = vld [vmem:[%s2 + $0x114] sm:$0xf]
      %v2930 = vld [vmem:[%s2 + $0x118] sm:$0xf]
      %v2931 = vld [vmem:[%s2 + $0x11c] sm:$0xf]
      %v2932 = vunpack.c.l.b16 %v2825
      %v2933 = vunpack.c.l.b16 %v2839
      %v2934 = vunpack.c.l.b16 %v2853
      %v2935 = vunpack.c.l.b16 %v2867
      %v2936 = vunpack.c.l.b16 %v2881
      %v2937 = vunpack.c.l.b16 %v2895
      %v2938 = vunpack.c.l.b16 %v2909
      %v2939 = vunpack.c.l.b16 %v2923
      %v2940 = vpack.c.b16 %v2933, %v2932
      %v2941 = vpack.c.b16 %v2935, %v2934
      %v2942 = vpack.c.b16 %v2937, %v2936
      %v2943 = vpack.c.b16 %v2939, %v2938
      %v2952 = vunpack.c.l.b16 %v2924
      %v2953 = vunpack.c.l.b16 %v2925
      %v2954 = vunpack.c.l.b16 %v2926
      %v2955 = vunpack.c.l.b16 %v2927
      %v2956 = vunpack.c.l.b16 %v2928
      %v2957 = vunpack.c.l.b16 %v2929
      %v2958 = vunpack.c.l.b16 %v2930
      %v2959 = vunpack.c.l.b16 %v2931
      %v2960 = vpack.c.b16 %v2953, %v2952
      %v2961 = vpack.c.b16 %v2955, %v2954
      %v2962 = vpack.c.b16 %v2957, %v2956
      %v2963 = vpack.c.b16 %v2959, %v2958
      %v2969 = vsel %vm1500, %v2940, 0
      %v2972 = vsel %vm1500, %v2941, 0
      %v2975 = vsel %vm1500, %v2942, 0
      %v2978 = vsel %vm1500, %v2943, 0
      %2980 = vmatprep.subr.bf16.mxu0 0
      %2981 = vmatpush1.bf16.msra.mxu0 %v2960
      %2982 = vmatprep.subr.bf16.mxu0 0
      %2983 = vmatpush1.bf16.msra.mxu0 %v2961
      %2984 = vmatprep.subr.bf16.mxu0 0
      %2985 = vmatpush1.bf16.msra.mxu0 %v2962
      %2986 = vmatprep.subr.bf16.mxu0 0
      %2987 = vmatpush1.bf16.msra.mxu0 %v2963
      %2988 = vmatprep.subr.bf16.mxu0 0
      %2989 = vmatpush1.bf16.msra.mxu0 0
      %2990 = vmatprep.subr.bf16.mxu0 0
      %2991 = vmatpush1.bf16.msra.mxu0 0
      %2992 = vmatprep.subr.bf16.mxu0 0
      %2993 = vmatpush1.bf16.msra.mxu0 0
      %2994 = vmatprep.subr.bf16.mxu0 0
      %2995 = vmatpush1.bf16.msra.mxu0 0
      %2996 = vmatprep.subr.bf16.mxu0 0
      %2997 = vmatpush1.bf16.msra.mxu0 0
      %2998 = vmatprep.subr.bf16.mxu0 0
      %2999 = vmatpush1.bf16.msra.mxu0 0
      %3000 = vmatprep.subr.bf16.mxu0 0
      %3001 = vmatpush1.bf16.msra.mxu0 0
      %3002 = vmatprep.subr.bf16.mxu0 0
      %3003 = vmatpush1.bf16.msra.mxu0 0
      %3004 = vmatprep.subr.bf16.mxu0 0
      %3005 = vmatpush1.bf16.msra.mxu0 0
      %3006 = vmatprep.subr.bf16.mxu0 0
      %3007 = vmatpush1.bf16.msra.mxu0 0
      %3008 = vmatprep.subr.bf16.mxu0 0
      %3009 = vmatpush1.bf16.msra.mxu0 0
      %3010 = vmatprep.subr.bf16.mxu0 0
      %3011 = vmatpush1.bf16.msra.mxu0 0
      %3012 = vmatprep.mubr.bf16.mxu0 0
      %3013 = vmatmul.mubr.bf16.gmra.mrb[0].mxu0 %v2969
      %v3014 = vpop.f32.mrb[0].mxu0
      %v3015 = vadd.f32 0.0, %v3014
      %v3016 = vpop.f32.mrb[0].mxu0
      %v3017 = vpop.f32.mrb[0].mxu0
      %v3018 = vadd.f32 0.0, %v3017
      %v3019 = vpop.f32.mrb[0].mxu0
      %3020 = vmatprep.mubr.bf16.mxu0 0
      %3021 = vmatmul.mubr.bf16.gmra.mrb[0].mxu0 %v2972
      %v3022 = vpop.f32.mrb[0].mxu0
      %v3023 = vadd.f32 0.0, %v3022
      %v3024 = vpop.f32.mrb[0].mxu0
      %v3025 = vpop.f32.mrb[0].mxu0
      %v3026 = vadd.f32 0.0, %v3025
      %v3027 = vpop.f32.mrb[0].mxu0
      %3028 = vmatprep.mubr.bf16.mxu0 0
      %3029 = vmatmul.mubr.bf16.gmra.mrb[0].mxu0 %v2975
      %v3030 = vpop.f32.mrb[0].mxu0
      %v3031 = vadd.f32 0.0, %v3030
      %v3032 = vpop.f32.mrb[0].mxu0
      %v3033 = vpop.f32.mrb[0].mxu0
      %v3034 = vadd.f32 0.0, %v3033
      %v3035 = vpop.f32.mrb[0].mxu0
      %3036 = vmatprep.mubr.bf16.mxu0 0
      %3037 = vmatmul.mubr.bf16.gmra.mrb[0].mxu0 %v2978
      %v3038 = vpop.f32.mrb[0].mxu0
      %v3039 = vadd.f32 0.0, %v3038
      %v3040 = vpop.f32.mrb[0].mxu0
      %v3041 = vpop.f32.mrb[0].mxu0
      %v3042 = vadd.f32 0.0, %v3041
      %v3043 = vpop.f32.mrb[0].mxu0
      %3044 = vdwg.mxu0
      %v3045 = vadd.f32 %v2788, %v3015
      %v3046 = vadd.f32 %v2789, %v3018
      %v3047 = vadd.f32 %v2790, %v3023
      %v3048 = vadd.f32 %v2791, %v3026
      %v3049 = vadd.f32 %v2792, %v3031
      %v3050 = vadd.f32 %v2793, %v3034
      %v3051 = vadd.f32 %v2794, %v3039
      %v3052 = vadd.f32 %v2795, %v3042
      %v3053 = vld [vmem:[%s5] sm:$0x1]
      %v3055 = vlaneseq
      %v3056 = vshrl.u32 %v3055, 7
      %v3057 = vsub.s32 0, %v3056
      %v3058 = vrot.slane %v3053, %v3057
      %v3060 = vadd.f32 %v3045, %v3058
      %v3061 = vadd.f32 %v3046, %v3058
      %v3062 = vadd.f32 %v3047, %v3058
      %v3063 = vadd.f32 %v3048, %v3058
      %v3064 = vadd.f32 %v3049, %v3058
      %v3065 = vadd.f32 %v3050, %v3058
      %v3066 = vadd.f32 %v3051, %v3058
      %v3067 = vadd.f32 %v3052, %v3058
      %v3068 = vsub.f32 0.0, %v3060
      %v3069 = vsub.f32 0.0, %v3061
      %v3070 = vsub.f32 0.0, %v3062
      %v3071 = vsub.f32 0.0, %v3063
      %v3072 = vsub.f32 0.0, %v3064
      %v3073 = vsub.f32 0.0, %v3065
      %v3074 = vsub.f32 0.0, %v3066
      %v3075 = vsub.f32 0.0, %v3067
      %v3076 = vmul.f32 %v3068, 1.442695
      %v3077 = vpow.pop %v3076
      %v3078 = vmul.f32 %v3069, 1.442695
      %v3079 = vpow.pop %v3078
      %v3080 = vmul.f32 %v3070, 1.442695
      %v3081 = vpow.pop %v3080
      %v3082 = vmul.f32 %v3071, 1.442695
      %v3083 = vpow.pop %v3082
      %v3084 = vmul.f32 %v3072, 1.442695
      %v3085 = vpow.pop %v3084
      %v3086 = vmul.f32 %v3073, 1.442695
      %v3087 = vpow.pop %v3086
      %v3088 = vmul.f32 %v3074, 1.442695
      %v3089 = vpow.pop %v3088
      %v3090 = vmul.f32 %v3075, 1.442695
      %v3091 = vpow.pop %v3090
      %v3092 = vadd.f32 %v3077, 1.0
      %v3093 = vadd.f32 %v3079, 1.0
      %v3094 = vadd.f32 %v3081, 1.0
      %v3095 = vadd.f32 %v3083, 1.0
      %v3096 = vadd.f32 %v3085, 1.0
      %v3097 = vadd.f32 %v3087, 1.0
      %v3098 = vadd.f32 %v3089, 1.0
      %v3099 = vadd.f32 %v3091, 1.0
      %v3100 = vrcp.pop %v3092
      %v3101 = vmul.f32 1.0, %v3100
      %v3102 = vrcp.pop %v3093
      %v3103 = vmul.f32 1.0, %v3102
      %v3104 = vrcp.pop %v3094
      %v3105 = vmul.f32 1.0, %v3104
      %v3106 = vrcp.pop %v3095
      %v3107 = vmul.f32 1.0, %v3106
      %v3108 = vrcp.pop %v3096
      %v3109 = vmul.f32 1.0, %v3108
      %v3110 = vrcp.pop %v3097
      %v3111 = vmul.f32 1.0, %v3110
      %v3112 = vrcp.pop %v3098
      %v3113 = vmul.f32 1.0, %v3112
      %v3114 = vrcp.pop %v3099
      %v3115 = vmul.f32 1.0, %v3114
      %v3116 = vmul.f32 %v3060, %v3101
      %v3117 = vmul.f32 %v3061, %v3103
      %v3118 = vmul.f32 %v3062, %v3105
      %v3119 = vmul.f32 %v3063, %v3107
      %v3120 = vmul.f32 %v3064, %v3109
      %v3121 = vmul.f32 %v3065, %v3111
      %v3122 = vmul.f32 %v3066, %v3113
      %v3123 = vmul.f32 %v3067, %v3115
      %v3124 = vld [vmem:[%s7] sm:$0xf]
      %v3125 = vld [vmem:[%s7 + $0x4] sm:$0xf]
      %v3126 = vld [vmem:[%s7 + $0x8] sm:$0xf]
      %v3127 = vld [vmem:[%s7 + $0xc] sm:$0xf]
      %v3128 = vld [vmem:[%s7 + $0x10] sm:$0xf]
      %v3129 = vld [vmem:[%s7 + $0x14] sm:$0xf]
      %v3130 = vld [vmem:[%s7 + $0x18] sm:$0xf]
      %v3131 = vld [vmem:[%s7 + $0x1c] sm:$0xf]
      %v3132 = vpack.c.bf16 %v3117, %v3116
      %v3133 = vpack.c.bf16 %v3119, %v3118
      %v3134 = vpack.c.bf16 %v3121, %v3120
      %v3135 = vpack.c.bf16 %v3123, %v3122
      %v3144 = vunpack.c.l.b16 %v3124
      %v3145 = vunpack.c.l.b16 %v3125
      %v3146 = vunpack.c.l.b16 %v3126
      %v3147 = vunpack.c.l.b16 %v3127
      %v3148 = vunpack.c.l.b16 %v3128
      %v3149 = vunpack.c.l.b16 %v3129
      %v3150 = vunpack.c.l.b16 %v3130
      %v3151 = vunpack.c.l.b16 %v3131
      %v3152 = vpack.c.b16 %v3145, %v3144
      %v3153 = vpack.c.b16 %v3147, %v3146
      %v3154 = vpack.c.b16 %v3149, %v3148
      %v3155 = vpack.c.b16 %v3151, %v3150
      %v3157 = vsel %vm1500, %v3152, 0
      %v3160 = vsel %vm1500, %v3153, 0
      %v3163 = vsel %vm1500, %v3154, 0
      %v3166 = vsel %vm1500, %v3155, 0
      %3168 = vmatprep.subr.bf16.mxu0 0
      %3169 = vmatpush1.bf16.msra.mxu0 %v3132
      %3170 = vmatprep.subr.bf16.mxu0 0
      %3171 = vmatpush1.bf16.msra.mxu0 %v3133
      %3172 = vmatprep.subr.bf16.mxu0 0
      %3173 = vmatpush1.bf16.msra.mxu0 %v3134
      %3174 = vmatprep.subr.bf16.mxu0 0
      %3175 = vmatpush1.bf16.msra.mxu0 %v3135
      %3176 = vmatprep.subr.bf16.mxu0 0
      %3177 = vmatpush1.bf16.msra.mxu0 0
      %3178 = vmatprep.subr.bf16.mxu0 0
      %3179 = vmatpush1.bf16.msra.mxu0 0
      %3180 = vmatprep.subr.bf16.mxu0 0
      %3181 = vmatpush1.bf16.msra.mxu0 0
      %3182 = vmatprep.subr.bf16.mxu0 0
      %3183 = vmatpush1.bf16.msra.mxu0 0
      %3184 = vmatprep.subr.bf16.mxu0 0
      %3185 = vmatpush1.bf16.msra.mxu0 0
      %3186 = vmatprep.subr.bf16.mxu0 0
      %3187 = vmatpush1.bf16.msra.mxu0 0
      %3188 = vmatprep.subr.bf16.mxu0 0
      %3189 = vmatpush1.bf16.msra.mxu0 0
      %3190 = vmatprep.subr.bf16.mxu0 0
      %3191 = vmatpush1.bf16.msra.mxu0 0
      %3192 = vmatprep.subr.bf16.mxu0 0
      %3193 = vmatpush1.bf16.msra.mxu0 0
      %3194 = vmatprep.subr.bf16.mxu0 0
      %3195 = vmatpush1.bf16.msra.mxu0 0
      %3196 = vmatprep.subr.bf16.mxu0 0
      %3197 = vmatpush1.bf16.msra.mxu0 0
      %3198 = vmatprep.subr.bf16.mxu0 0
      %3199 = vmatpush1.bf16.msra.mxu0 0
      %3200 = vmatprep.mubr.bf16.mxu0 0
      %3201 = vmatmul.mubr.bf16.gmra.mrb[0].mxu0 %v3157
      %v3202 = vpop.f32.mrb[0].mxu0
      %v3203 = vadd.f32 0.0, %v3202
      %v3204 = vpop.f32.mrb[0].mxu0
      %v3205 = vpop.f32.mrb[0].mxu0
      %v3206 = vadd.f32 0.0, %v3205
      %v3207 = vpop.f32.mrb[0].mxu0
      %3208 = vmatprep.mubr.bf16.mxu0 0
      %3209 = vmatmul.mubr.bf16.gmra.mrb[0].mxu0 %v3160
      %v3210 = vpop.f32.mrb[0].mxu0
      %v3211 = vadd.f32 0.0, %v3210
      %v3212 = vpop.f32.mrb[0].mxu0
      %v3213 = vpop.f32.mrb[0].mxu0
      %v3214 = vadd.f32 0.0, %v3213
      %v3215 = vpop.f32.mrb[0].mxu0
      %3216 = vmatprep.mubr.bf16.mxu0 0
      %3217 = vmatmul.mubr.bf16.gmra.mrb[0].mxu0 %v3163
      %v3218 = vpop.f32.mrb[0].mxu0
      %v3219 = vadd.f32 0.0, %v3218
      %v3220 = vpop.f32.mrb[0].mxu0
      %v3221 = vpop.f32.mrb[0].mxu0
      %v3222 = vadd.f32 0.0, %v3221
      %v3223 = vpop.f32.mrb[0].mxu0
      %3224 = vmatprep.mubr.bf16.mxu0 0
      %3225 = vmatmul.mubr.bf16.gmra.mrb[0].mxu0 %v3166
      %v3226 = vpop.f32.mrb[0].mxu0
      %v3227 = vadd.f32 0.0, %v3226
      %v3228 = vpop.f32.mrb[0].mxu0
      %v3229 = vpop.f32.mrb[0].mxu0
      %v3230 = vadd.f32 0.0, %v3229
      %v3231 = vpop.f32.mrb[0].mxu0
      %3232 = vdwg.mxu0
      %v3233 = vpack.c.bf16 %v3206, %v3203
      %v3234 = vpack.c.bf16 %v3214, %v3211
      %v3235 = vpack.c.bf16 %v3222, %v3219
      %v3236 = vpack.c.bf16 %v3230, %v3227
      %vm3237 = vcmask 1042432
      %vm3238 = vsmask.f32 2304
      %vm3239 = vmand %vm3237, %vm3238
      %v3240 = vld [vmem:[#allocation3] sm:$0x7]
      %v3241 = vsel %vm3239, 0, %v3240
      %3242 = vst [vmem:[#allocation3] sm:$0x7] %v3241
      %v3243 = vld [vmem:[#allocation3 + $0x4] sm:$0x7]
      %v3244 = vsel %vm3239, 0, %v3243
      %3245 = vst [vmem:[#allocation3 + $0x4] sm:$0x7] %v3244
      %v3246 = vld [vmem:[#allocation3 + $0x8] sm:$0x7]
      %v3247 = vsel %vm3239, 0, %v3246
      %3248 = vst [vmem:[#allocation3 + $0x8] sm:$0x7] %v3247
      %v3249 = vld [vmem:[#allocation3 + $0xc] sm:$0x7]
      %v3250 = vsel %vm3239, 0, %v3249
      %3251 = vst [vmem:[#allocation3 + $0xc] sm:$0x7] %v3250
      %v3252 = vld [vmem:[#allocation3 + $0x10] sm:$0x7]
      %v3253 = vsel %vm3239, 0, %v3252
      %3254 = vst [vmem:[#allocation3 + $0x10] sm:$0x7] %v3253
      %v3255 = vld [vmem:[#allocation3 + $0x14] sm:$0x7]
      %v3256 = vsel %vm3239, 0, %v3255
      %3257 = vst [vmem:[#allocation3 + $0x14] sm:$0x7] %v3256
      %v3258 = vld [vmem:[#allocation3 + $0x18] sm:$0x7]
      %v3259 = vsel %vm3239, 0, %v3258
      %3260 = vst [vmem:[#allocation3 + $0x18] sm:$0x7] %v3259
      %v3261 = vld [vmem:[#allocation3 + $0x1c] sm:$0x7]
      %v3262 = vsel %vm3239, 0, %v3261
      %3263 = vst [vmem:[#allocation3 + $0x1c] sm:$0x7] %v3262
      %v3264 = vld [vmem:[#allocation3 + $0x20] sm:$0x7]
      %v3265 = vsel %vm3239, 0, %v3264
      %3266 = vst [vmem:[#allocation3 + $0x20] sm:$0x7] %v3265
      %v3267 = vld [vmem:[#allocation3 + $0x24] sm:$0x7]
      %v3268 = vsel %vm3239, 0, %v3267
      %3269 = vst [vmem:[#allocation3 + $0x24] sm:$0x7] %v3268
      %v3270 = vld [vmem:[#allocation3 + $0x28] sm:$0x7]
      %v3271 = vsel %vm3239, 0, %v3270
      %3272 = vst [vmem:[#allocation3 + $0x28] sm:$0x7] %v3271
      %v3273 = vld [vmem:[#allocation3 + $0x2c] sm:$0x7]
      %v3274 = vsel %vm3239, 0, %v3273
      %3275 = vst [vmem:[#allocation3 + $0x2c] sm:$0x7] %v3274
      %v3276 = vld [vmem:[#allocation3 + $0x30] sm:$0x7]
      %v3277 = vsel %vm3239, 0, %v3276
      %3278 = vst [vmem:[#allocation3 + $0x30] sm:$0x7] %v3277
      %v3279 = vld [vmem:[#allocation3 + $0x34] sm:$0x7]
      %v3280 = vsel %vm3239, 0, %v3279
      %3281 = vst [vmem:[#allocation3 + $0x34] sm:$0x7] %v3280
      %v3282 = vld [vmem:[#allocation3 + $0x38] sm:$0x7]
      %v3283 = vsel %vm3239, 0, %v3282
      %3284 = vst [vmem:[#allocation3 + $0x38] sm:$0x7] %v3283
      %v3285 = vld [vmem:[#allocation3 + $0x3c] sm:$0x7]
      %v3286 = vsel %vm3239, 0, %v3285
      %3287 = vst [vmem:[#allocation3 + $0x3c] sm:$0x7] %v3286
      %v3288 = vld [vmem:[#allocation3 + $0x40] sm:$0x7]
      %v3289 = vsel %vm3239, 0, %v3288
      %3290 = vst [vmem:[#allocation3 + $0x40] sm:$0x7] %v3289
      %v3291 = vld [vmem:[#allocation3 + $0x44] sm:$0x7]
      %v3292 = vsel %vm3239, 0, %v3291
      %3293 = vst [vmem:[#allocation3 + $0x44] sm:$0x7] %v3292
      %v3294 = vld [vmem:[#allocation3 + $0x48] sm:$0x7]
      %v3295 = vsel %vm3239, 0, %v3294
      %3296 = vst [vmem:[#allocation3 + $0x48] sm:$0x7] %v3295
      %v3297 = vld [vmem:[#allocation3 + $0x4c] sm:$0x7]
      %v3298 = vsel %vm3239, 0, %v3297
      %3299 = vst [vmem:[#allocation3 + $0x4c] sm:$0x7] %v3298
      %v3301 = vcombine.high %v3233, %v3233
      %v3303 = vunpack.c.l.s4 1983009808
      %v3304 = vunpack.c.0.s8 %v3303
      %v3305 = vlaneseq
      %v3306 = vshrl.u32 %v3305, 7
      %v3307 = vsub.s32 %v3304, %v3306
      %v3308 = vrot.slane %v3233, %v3307
      %v3310 = vunpack.c.l.s4 1983009808
      %v3311 = vunpack.c.0.s8 %v3310
      %v3312 = vlaneseq
      %v3313 = vshrl.u32 %v3312, 7
      %v3314 = vsub.s32 %v3311, %v3313
      %v3315 = vrot.slane %v3301, %v3314
      %v3316 = vcombine.high %v3308, %v3308
      %v3317 = vcombine.high %v3315, %v3315
      %v3319 = vunpack.c.l.s4 1983009808
      %v3320 = vunpack.c.0.s8 %v3319
      %v3321 = vlaneseq
      %v3322 = vshrl.u32 %v3321, 7
      %v3323 = vsub.s32 %v3320, %v3322
      %v3324 = vrot.slane %v3308, %v3323
      %v3326 = vunpack.c.l.s4 1983009808
      %v3327 = vunpack.c.0.s8 %v3326
      %v3328 = vlaneseq
      %v3329 = vshrl.u32 %v3328, 7
      %v3330 = vsub.s32 %v3327, %v3329
      %v3331 = vrot.slane %v3316, %v3330
      %v3333 = vunpack.c.l.s4 1983009808
      %v3334 = vunpack.c.0.s8 %v3333
      %v3335 = vlaneseq
      %v3336 = vshrl.u32 %v3335, 7
      %v3337 = vsub.s32 %v3334, %v3336
      %v3338 = vrot.slane %v3315, %v3337
      %v3340 = vunpack.c.l.s4 1983009808
      %v3341 = vunpack.c.0.s8 %v3340
      %v3342 = vlaneseq
      %v3343 = vshrl.u32 %v3342, 7
      %v3344 = vsub.s32 %v3341, %v3343
      %v3345 = vrot.slane %v3317, %v3344
      %v3347 = vshrl.u32 %v3324, 16
      %v3349 = vrot.slane %v3347, 7
      %v3350 = vshll.u32 %v3324, 16
      %v3352 = vor.u32 %v3349, %v3350
      %v3354 = vshrl.u32 %v3331, 16
      %v3356 = vrot.slane %v3354, 7
      %v3357 = vshll.u32 %v3331, 16
      %v3359 = vor.u32 %v3356, %v3357
      %v3361 = vshrl.u32 %v3338, 16
      %v3363 = vrot.slane %v3361, 7
      %v3364 = vshll.u32 %v3338, 16
      %v3366 = vor.u32 %v3363, %v3364
      %v3368 = vshrl.u32 %v3345, 16
      %v3370 = vrot.slane %v3368, 7
      %v3371 = vshll.u32 %v3345, 16
      %v3373 = vor.u32 %v3370, %v3371
      %s3378 = scalar_lea.vmem [#allocation3], 4
      %vm3379 = vsmask.f32 2306
      %vm3380 = vmand %vm3237, %vm3379
      %v3381 = vld [vmem:[%s3378] sm:$0x7]
      %v3382 = vsel %vm3380, %v3352, %v3381
      %3383 = vst [vmem:[%s3378] sm:$0x7] %v3382
      %v3384 = vld [vmem:[%s3378 + $0x4] sm:$0x7]
      %v3385 = vsel %vm3380, %v3359, %v3384
      %3386 = vst [vmem:[%s3378 + $0x4] sm:$0x7] %v3385
      %v3387 = vld [vmem:[%s3378 + $0x8] sm:$0x7]
      %v3388 = vsel %vm3380, %v3366, %v3387
      %3389 = vst [vmem:[%s3378 + $0x8] sm:$0x7] %v3388
      %v3390 = vld [vmem:[%s3378 + $0xc] sm:$0x7]
      %v3391 = vsel %vm3380, %v3373, %v3390
      %3392 = vst [vmem:[%s3378 + $0xc] sm:$0x7] %v3391
      %v3394 = vcombine.high %v3234, %v3234
      %v3396 = vunpack.c.l.s4 1983009808
      %v3397 = vunpack.c.0.s8 %v3396
      %v3398 = vlaneseq
      %v3399 = vshrl.u32 %v3398, 7
      %v3400 = vsub.s32 %v3397, %v3399
      %v3401 = vrot.slane %v3234, %v3400
      %v3403 = vunpack.c.l.s4 1983009808
      %v3404 = vunpack.c.0.s8 %v3403
      %v3405 = vlaneseq
      %v3406 = vshrl.u32 %v3405, 7
      %v3407 = vsub.s32 %v3404, %v3406
      %v3408 = vrot.slane %v3394, %v3407
      %v3409 = vcombine.high %v3401, %v3401
      %v3410 = vcombine.high %v3408, %v3408
      %s3415 = scalar_lea.vmem [#allocation3], 24
      %3416 = vst [vmem:[%s3415] sm:$0x3] %v3401
      %3417 = vst [vmem:[%s3415 + $0x4] sm:$0x3] %v3409
      %3418 = vst [vmem:[%s3415 + $0x8] sm:$0x3] %v3408
      %3419 = vst [vmem:[%s3415 + $0xc] sm:$0x3] %v3410
      %v3421 = vcombine.high %v3235, %v3235
      %v3423 = vunpack.c.l.s4 1983009808
      %v3424 = vunpack.c.0.s8 %v3423
      %v3425 = vlaneseq
      %v3426 = vshrl.u32 %v3425, 7
      %v3427 = vsub.s32 %v3424, %v3426
      %v3428 = vrot.slane %v3235, %v3427
      %v3430 = vunpack.c.l.s4 1983009808
      %v3431 = vunpack.c.0.s8 %v3430
      %v3432 = vlaneseq
      %v3433 = vshrl.u32 %v3432, 7
      %v3434 = vsub.s32 %v3431, %v3433
      %v3435 = vrot.slane %v3421, %v3434
      %v3436 = vcombine.high %v3428, %v3428
      %v3437 = vcombine.high %v3435, %v3435
      %v3439 = vunpack.c.l.s4 1983009808
      %v3440 = vunpack.c.0.s8 %v3439
      %v3441 = vlaneseq
      %v3442 = vshrl.u32 %v3441, 7
      %v3443 = vsub.s32 %v3440, %v3442
      %v3444 = vrot.slane %v3428, %v3443
      %v3446 = vunpack.c.l.s4 1983009808
      %v3447 = vunpack.c.0.s8 %v3446
      %v3448 = vlaneseq
      %v3449 = vshrl.u32 %v3448, 7
      %v3450 = vsub.s32 %v3447, %v3449
      %v3451 = vrot.slane %v3436, %v3450
      %v3453 = vunpack.c.l.s4 1983009808
      %v3454 = vunpack.c.0.s8 %v3453
      %v3455 = vlaneseq
      %v3456 = vshrl.u32 %v3455, 7
      %v3457 = vsub.s32 %v3454, %v3456
      %v3458 = vrot.slane %v3435, %v3457
      %v3460 = vunpack.c.l.s4 1983009808
      %v3461 = vunpack.c.0.s8 %v3460
      %v3462 = vlaneseq
      %v3463 = vshrl.u32 %v3462, 7
      %v3464 = vsub.s32 %v3461, %v3463
      %v3465 = vrot.slane %v3437, %v3464
      %v3467 = vshrl.u32 %v3444, 16
      %v3469 = vrot.slane %v3467, 7
      %v3470 = vshll.u32 %v3444, 16
      %v3472 = vor.u32 %v3469, %v3470
      %v3474 = vshrl.u32 %v3451, 16
      %v3476 = vrot.slane %v3474, 7
      %v3477 = vshll.u32 %v3451, 16
      %v3479 = vor.u32 %v3476, %v3477
      %v3481 = vshrl.u32 %v3458, 16
      %v3483 = vrot.slane %v3481, 7
      %v3484 = vshll.u32 %v3458, 16
      %v3486 = vor.u32 %v3483, %v3484
      %v3488 = vshrl.u32 %v3465, 16
      %v3490 = vrot.slane %v3488, 7
      %v3491 = vshll.u32 %v3465, 16
      %v3493 = vor.u32 %v3490, %v3491
      %s3498 = scalar_lea.vmem [#allocation3], 40
      %v3499 = vld [vmem:[%s3498] sm:$0x7]
      %v3500 = vsel %vm3380, %v3472, %v3499
      %3501 = vst [vmem:[%s3498] sm:$0x7] %v3500
      %v3502 = vld [vmem:[%s3498 + $0x4] sm:$0x7]
      %v3503 = vsel %vm3380, %v3479, %v3502
      %3504 = vst [vmem:[%s3498 + $0x4] sm:$0x7] %v3503
      %v3505 = vld [vmem:[%s3498 + $0x8] sm:$0x7]
      %v3506 = vsel %vm3380, %v3486, %v3505
      %3507 = vst [vmem:[%s3498 + $0x8] sm:$0x7] %v3506
      %v3508 = vld [vmem:[%s3498 + $0xc] sm:$0x7]
      %v3509 = vsel %vm3380, %v3493, %v3508
      %3510 = vst [vmem:[%s3498 + $0xc] sm:$0x7] %v3509
      %v3512 = vcombine.high %v3236, %v3236
      %v3514 = vunpack.c.l.s4 1983009808
      %v3515 = vunpack.c.0.s8 %v3514
      %v3516 = vlaneseq
      %v3517 = vshrl.u32 %v3516, 7
      %v3518 = vsub.s32 %v3515, %v3517
      %v3519 = vrot.slane %v3236, %v3518
      %v3521 = vunpack.c.l.s4 1983009808
      %v3522 = vunpack.c.0.s8 %v3521
      %v3523 = vlaneseq
      %v3524 = vshrl.u32 %v3523, 7
      %v3525 = vsub.s32 %v3522, %v3524
      %v3526 = vrot.slane %v3512, %v3525
      %v3527 = vcombine.high %v3519, %v3519
      %v3528 = vcombine.high %v3526, %v3526
      %s3533 = scalar_lea.vmem [#allocation3], 60
      %3534 = vst [vmem:[%s3533] sm:$0x3] %v3519
      %3535 = vst [vmem:[%s3533 + $0x4] sm:$0x3] %v3527
      %3536 = vst [vmem:[%s3533 + $0x8] sm:$0x3] %v3526
      %3537 = vst [vmem:[%s3533 + $0xc] sm:$0x3] %v3528
      %v3538 = vld [vmem:[#allocation3] sm:$0x3]
      %v3539 = vld [vmem:[#allocation3 + $0x4] sm:$0x3]
      %v3540 = vld [vmem:[#allocation3 + $0x8] sm:$0x3]
      %v3541 = vld [vmem:[#allocation3 + $0xc] sm:$0x3]
      %v3542 = vld [vmem:[%s3] sm:$0xff]
      %v3543 = vld [vmem:[%s3 + $0x8] sm:$0xff]
      %v3544 = vld [vmem:[%s3 + $0x10] sm:$0xff]
      %v3545 = vld [vmem:[%s3 + $0x18] sm:$0xff]
      %v3546 = vld [vmem:[%s3 + $0x20] sm:$0xff]
      %v3547 = vld [vmem:[%s3 + $0x28] sm:$0xff]
      %v3548 = vld [vmem:[%s3 + $0x30] sm:$0xff]
      %v3549 = vld [vmem:[%s3 + $0x38] sm:$0xff]
      %v3550 = vld [vmem:[%s3 + $0x40] sm:$0xff]
      %v3551 = vld [vmem:[%s3 + $0x48] sm:$0xff]
      %v3552 = vld [vmem:[%s3 + $0x50] sm:$0xff]
      %v3553 = vld [vmem:[%s3 + $0x58] sm:$0xff]
      %v3554 = vld [vmem:[%s3 + $0x60] sm:$0xff]
      %v3555 = vld [vmem:[%s3 + $0x68] sm:$0xff]
      %v3556 = vld [vmem:[%s3 + $0x70] sm:$0xff]
      %v3557 = vld [vmem:[%s3 + $0x78] sm:$0xff]
      %s3558 = scalar_lea.vmem [#allocation3], 20
      %v3559 = vld [vmem:[%s3558] sm:$0x3]
      %v3560 = vld [vmem:[%s3558 + $0x4] sm:$0x3]
      %v3561 = vld [vmem:[%s3558 + $0x8] sm:$0x3]
      %v3562 = vld [vmem:[%s3558 + $0xc] sm:$0x3]
      %v3563 = vld [vmem:[%s3 + $0x80] sm:$0xff]
      %v3564 = vld [vmem:[%s3 + $0x88] sm:$0xff]
      %v3565 = vld [vmem:[%s3 + $0x90] sm:$0xff]
      %v3566 = vld [vmem:[%s3 + $0x98] sm:$0xff]
      %v3567 = vld [vmem:[%s3 + $0xa0] sm:$0xff]
      %v3568 = vld [vmem:[%s3 + $0xa8] sm:$0xff]
      %v3569 = vld [vmem:[%s3 + $0xb0] sm:$0xff]
      %v3570 = vld [vmem:[%s3 + $0xb8] sm:$0xff]
      %v3571 = vld [vmem:[%s3 + $0xc0] sm:$0xff]
      %v3572 = vld [vmem:[%s3 + $0xc8] sm:$0xff]
      %v3573 = vld [vmem:[%s3 + $0xd0] sm:$0xff]
      %v3574 = vld [vmem:[%s3 + $0xd8] sm:$0xff]
      %v3575 = vld [vmem:[%s3 + $0xe0] sm:$0xff]
      %v3576 = vld [vmem:[%s3 + $0xe8] sm:$0xff]
      %v3577 = vld [vmem:[%s3 + $0xf0] sm:$0xff]
      %v3578 = vld [vmem:[%s3 + $0xf8] sm:$0xff]
      %v3583 = vcombine.low %v3559, %v3560
      %v3584 = vcombine.low %v3561, %v3562
      %v3586 = vunpack.c.l.s4 1983009808
      %v3587 = vunpack.c.0.s8 %v3586
      %v3588 = vlaneseq
      %v3589 = vshrl.u32 %v3588, 7
      %v3590 = vsub.s32 %v3587, %v3589
      %v3591 = vrot.slane %v3583, %v3590
      %v3593 = vunpack.c.l.s4 1983009808
      %v3594 = vunpack.c.0.s8 %v3593
      %v3595 = vlaneseq
      %v3596 = vshrl.u32 %v3595, 7
      %v3597 = vsub.s32 %v3594, %v3596
      %v3598 = vrot.slane %v3584, %v3597
      %v3599 = vcombine.low %v3591, %v3598
      %v3617 = vunpack.c.l.b16 %v3563
      %v3618 = vunpack.c.h.b16 %v3563
      %v3619 = vunpack.c.l.b16 %v3564
      %v3620 = vunpack.c.h.b16 %v3564
      %v3621 = vunpack.c.l.b16 %v3565
      %v3622 = vunpack.c.h.b16 %v3565
      %v3623 = vunpack.c.l.b16 %v3566
      %v3624 = vunpack.c.h.b16 %v3566
      %v3625 = vunpack.c.l.b16 %v3567
      %v3626 = vunpack.c.h.b16 %v3567
      %v3627 = vunpack.c.l.b16 %v3568
      %v3628 = vunpack.c.h.b16 %v3568
      %v3629 = vunpack.c.l.b16 %v3569
      %v3630 = vunpack.c.h.b16 %v3569
      %v3631 = vunpack.c.l.b16 %v3570
      %v3632 = vunpack.c.h.b16 %v3570
      %v3633 = vunpack.c.l.b16 %v3571
      %v3634 = vunpack.c.h.b16 %v3571
      %v3635 = vunpack.c.l.b16 %v3572
      %v3636 = vunpack.c.h.b16 %v3572
      %v3637 = vunpack.c.l.b16 %v3573
      %v3638 = vunpack.c.h.b16 %v3573
      %v3639 = vunpack.c.l.b16 %v3574
      %v3640 = vunpack.c.h.b16 %v3574
      %v3641 = vunpack.c.l.b16 %v3575
      %v3642 = vunpack.c.h.b16 %v3575
      %v3643 = vunpack.c.l.b16 %v3576
      %v3644 = vunpack.c.h.b16 %v3576
      %v3645 = vunpack.c.l.b16 %v3577
      %v3646 = vunpack.c.h.b16 %v3577
      %v3647 = vunpack.c.l.b16 %v3578
      %v3648 = vunpack.c.h.b16 %v3578
      %v3649 = vpack.c.b16 %v3619, %v3617
      %v3650 = vpack.c.b16 %v3620, %v3618
      %v3651 = vpack.c.b16 %v3623, %v3621
      %v3652 = vpack.c.b16 %v3624, %v3622
      %v3653 = vpack.c.b16 %v3627, %v3625
      %v3654 = vpack.c.b16 %v3628, %v3626
      %v3655 = vpack.c.b16 %v3631, %v3629
      %v3656 = vpack.c.b16 %v3632, %v3630
      %v3657 = vpack.c.b16 %v3635, %v3633
      %v3658 = vpack.c.b16 %v3636, %v3634
      %v3659 = vpack.c.b16 %v3639, %v3637
      %v3660 = vpack.c.b16 %v3640, %v3638
      %v3661 = vpack.c.b16 %v3643, %v3641
      %v3662 = vpack.c.b16 %v3644, %v3642
      %v3663 = vpack.c.b16 %v3647, %v3645
      %v3664 = vpack.c.b16 %v3648, %v3646
      %3681 = vmatprep.subr.bf16.mxu0 %v3650
      %3682 = vmatpush1.bf16.msra.mxu0 %v3649
      %3683 = vmatprep.subr.bf16.mxu0 %v3652
      %3684 = vmatpush1.bf16.msra.mxu0 %v3651
      %3685 = vmatprep.subr.bf16.mxu0 %v3654
      %3686 = vmatpush1.bf16.msra.mxu0 %v3653
      %3687 = vmatprep.subr.bf16.mxu0 %v3656
      %3688 = vmatpush1.bf16.msra.mxu0 %v3655
      %3689 = vmatprep.subr.bf16.mxu0 %v3658
      %3690 = vmatpush1.bf16.msra.mxu0 %v3657
      %3691 = vmatprep.subr.bf16.mxu0 %v3660
      %3692 = vmatpush1.bf16.msra.mxu0 %v3659
      %3693 = vmatprep.subr.bf16.mxu0 %v3662
      %3694 = vmatpush1.bf16.msra.mxu0 %v3661
      %3695 = vmatprep.subr.bf16.mxu0 %v3664
      %3696 = vmatpush1.bf16.msra.mxu0 %v3663
      %3697 = vmatprep.subr.bf16.mxu0 0
      %3698 = vmatpush1.bf16.msra.mxu0 0
      %3699 = vmatprep.subr.bf16.mxu0 0
      %3700 = vmatpush1.bf16.msra.mxu0 0
      %3701 = vmatprep.subr.bf16.mxu0 0
      %3702 = vmatpush1.bf16.msra.mxu0 0
      %3703 = vmatprep.subr.bf16.mxu0 0
      %3704 = vmatpush1.bf16.msra.mxu0 0
      %3705 = vmatprep.subr.bf16.mxu0 0
      %3706 = vmatpush1.bf16.msra.mxu0 0
      %3707 = vmatprep.subr.bf16.mxu0 0
      %3708 = vmatpush1.bf16.msra.mxu0 0
      %3709 = vmatprep.subr.bf16.mxu0 0
      %3710 = vmatpush1.bf16.msra.mxu0 0
      %3711 = vmatprep.subr.bf16.mxu0 0
      %3712 = vmatpush1.bf16.msra.mxu0 0
      %3713 = vmatprep.mubr.bf16.mxu0 0
      %3714 = vmatmul.mubr.bf16.gmra.mrb[0].mxu0 %v3599
      %v3715 = vpop.f32.mrb[0].mxu0
      %v3716 = vadd.f32 0.0, %v3715
      %v3717 = vpop.f32.mrb[0].mxu0
      %v3718 = vadd.f32 0.0, %v3717
      %v3719 = vpop.f32.mrb[0].mxu0
      %v3720 = vadd.f32 0.0, %v3719
      %v3721 = vpop.f32.mrb[0].mxu0
      %v3722 = vadd.f32 0.0, %v3721
      %3723 = vdwg.mxu0
      %v3728 = vcombine.low %v3538, %v3539
      %v3729 = vcombine.low %v3540, %v3541
      %v3731 = vunpack.c.l.s4 1983009808
      %v3732 = vunpack.c.0.s8 %v3731
      %v3733 = vlaneseq
      %v3734 = vshrl.u32 %v3733, 7
      %v3735 = vsub.s32 %v3732, %v3734
      %v3736 = vrot.slane %v3728, %v3735
      %v3738 = vunpack.c.l.s4 1983009808
      %v3739 = vunpack.c.0.s8 %v3738
      %v3740 = vlaneseq
      %v3741 = vshrl.u32 %v3740, 7
      %v3742 = vsub.s32 %v3739, %v3741
      %v3743 = vrot.slane %v3729, %v3742
      %v3744 = vcombine.low %v3736, %v3743
      %v3762 = vunpack.c.l.b16 %v3542
      %v3763 = vunpack.c.h.b16 %v3542
      %v3764 = vunpack.c.l.b16 %v3543
      %v3765 = vunpack.c.h.b16 %v3543
      %v3766 = vunpack.c.l.b16 %v3544
      %v3767 = vunpack.c.h.b16 %v3544
      %v3768 = vunpack.c.l.b16 %v3545
      %v3769 = vunpack.c.h.b16 %v3545
      %v3770 = vunpack.c.l.b16 %v3546
      %v3771 = vunpack.c.h.b16 %v3546
      %v3772 = vunpack.c.l.b16 %v3547
      %v3773 = vunpack.c.h.b16 %v3547
      %v3774 = vunpack.c.l.b16 %v3548
      %v3775 = vunpack.c.h.b16 %v3548
      %v3776 = vunpack.c.l.b16 %v3549
      %v3777 = vunpack.c.h.b16 %v3549
      %v3778 = vunpack.c.l.b16 %v3550
      %v3779 = vunpack.c.h.b16 %v3550
      %v3780 = vunpack.c.l.b16 %v3551
      %v3781 = vunpack.c.h.b16 %v3551
      %v3782 = vunpack.c.l.b16 %v3552
      %v3783 = vunpack.c.h.b16 %v3552
      %v3784 = vunpack.c.l.b16 %v3553
      %v3785 = vunpack.c.h.b16 %v3553
      %v3786 = vunpack.c.l.b16 %v3554
      %v3787 = vunpack.c.h.b16 %v3554
      %v3788 = vunpack.c.l.b16 %v3555
      %v3789 = vunpack.c.h.b16 %v3555
      %v3790 = vunpack.c.l.b16 %v3556
      %v3791 = vunpack.c.h.b16 %v3556
      %v3792 = vunpack.c.l.b16 %v3557
      %v3793 = vunpack.c.h.b16 %v3557
      %v3794 = vpack.c.b16 %v3764, %v3762
      %v3795 = vpack.c.b16 %v3765, %v3763
      %v3796 = vpack.c.b16 %v3768, %v3766
      %v3797 = vpack.c.b16 %v3769, %v3767
      %v3798 = vpack.c.b16 %v3772, %v3770
      %v3799 = vpack.c.b16 %v3773, %v3771
      %v3800 = vpack.c.b16 %v3776, %v3774
      %v3801 = vpack.c.b16 %v3777, %v3775
      %v3802 = vpack.c.b16 %v3780, %v3778
      %v3803 = vpack.c.b16 %v3781, %v3779
      %v3804 = vpack.c.b16 %v3784, %v3782
      %v3805 = vpack.c.b16 %v3785, %v3783
      %v3806 = vpack.c.b16 %v3788, %v3786
      %v3807 = vpack.c.b16 %v3789, %v3787
      %v3808 = vpack.c.b16 %v3792, %v3790
      %v3809 = vpack.c.b16 %v3793, %v3791
      %3826 = vmatprep.subr.bf16.mxu0 %v3795
      %3827 = vmatpush1.bf16.msra.mxu0 %v3794
      %3828 = vmatprep.subr.bf16.mxu0 %v3797
      %3829 = vmatpush1.bf16.msra.mxu0 %v3796
      %3830 = vmatprep.subr.bf16.mxu0 %v3799
      %3831 = vmatpush1.bf16.msra.mxu0 %v3798
      %3832 = vmatprep.subr.bf16.mxu0 %v3801
      %3833 = vmatpush1.bf16.msra.mxu0 %v3800
      %3834 = vmatprep.subr.bf16.mxu0 %v3803
      %3835 = vmatpush1.bf16.msra.mxu0 %v3802
      %3836 = vmatprep.subr.bf16.mxu0 %v3805
      %3837 = vmatpush1.bf16.msra.mxu0 %v3804
      %3838 = vmatprep.subr.bf16.mxu0 %v3807
      %3839 = vmatpush1.bf16.msra.mxu0 %v3806
      %3840 = vmatprep.subr.bf16.mxu0 %v3809
      %3841 = vmatpush1.bf16.msra.mxu0 %v3808
      %3842 = vmatprep.subr.bf16.mxu0 0
      %3843 = vmatpush1.bf16.msra.mxu0 0
      %3844 = vmatprep.subr.bf16.mxu0 0
      %3845 = vmatpush1.bf16.msra.mxu0 0
      %3846 = vmatprep.subr.bf16.mxu0 0
      %3847 = vmatpush1.bf16.msra.mxu0 0
      %3848 = vmatprep.subr.bf16.mxu0 0
      %3849 = vmatpush1.bf16.msra.mxu0 0
      %3850 = vmatprep.subr.bf16.mxu0 0
      %3851 = vmatpush1.bf16.msra.mxu0 0
      %3852 = vmatprep.subr.bf16.mxu0 0
      %3853 = vmatpush1.bf16.msra.mxu0 0
      %3854 = vmatprep.subr.bf16.mxu0 0
      %3855 = vmatpush1.bf16.msra.mxu0 0
      %3856 = vmatprep.subr.bf16.mxu0 0
      %3857 = vmatpush1.bf16.msra.mxu0 0
      %3858 = vmatprep.mubr.bf16.mxu0 0
      %3859 = vmatmul.mubr.bf16.gmra.mrb[0].mxu0 %v3744
      %v3860 = vpop.f32.mrb[0].mxu0
      %v3861 = vadd.f32 %v3716, %v3860
      %v3862 = vpop.f32.mrb[0].mxu0
      %v3863 = vadd.f32 %v3718, %v3862
      %v3864 = vpop.f32.mrb[0].mxu0
      %v3865 = vadd.f32 %v3720, %v3864
      %v3866 = vpop.f32.mrb[0].mxu0
      %v3867 = vadd.f32 %v3722, %v3866
      %3868 = vdwg.mxu0
      %v3869 = vld [vmem:[#allocation3] sm:$0x7]
      %v3870 = vld [vmem:[#allocation3 + $0x4] sm:$0x7]
      %v3871 = vld [vmem:[#allocation3 + $0x8] sm:$0x7]
      %v3872 = vld [vmem:[#allocation3 + $0xc] sm:$0x7]
      %v3878 = vunpack.c.l.s4 1983009808
      %v3879 = vunpack.c.0.s8 %v3878
      %v3880 = vlaneseq
      %v3881 = vshrl.u32 %v3880, 7
      %v3882 = vsub.s32 %v3879, %v3881
      %v3883 = vrot.slane %v3869, %v3882
      %v3884 = vcombine.high %v3883, %v3883
      %v3886 = vunpack.c.l.s4 1983009808
      %v3887 = vunpack.c.0.s8 %v3886
      %v3888 = vlaneseq
      %v3889 = vshrl.u32 %v3888, 7
      %v3890 = vsub.s32 %v3887, %v3889
      %v3891 = vrot.slane %v3870, %v3890
      %v3892 = vcombine.high %v3891, %v3891
      %v3894 = vunpack.c.l.s4 1983009808
      %v3895 = vunpack.c.0.s8 %v3894
      %v3896 = vlaneseq
      %v3897 = vshrl.u32 %v3896, 7
      %v3898 = vsub.s32 %v3895, %v3897
      %v3899 = vrot.slane %v3871, %v3898
      %v3900 = vcombine.high %v3899, %v3899
      %v3902 = vunpack.c.l.s4 1983009808
      %v3903 = vunpack.c.0.s8 %v3902
      %v3904 = vlaneseq
      %v3905 = vshrl.u32 %v3904, 7
      %v3906 = vsub.s32 %v3903, %v3905
      %v3907 = vrot.slane %v3872, %v3906
      %v3908 = vcombine.high %v3907, %v3907
      %vm3909 = vsmask.f32 1280
      %vm3910 = vsmask.f32 3336
      %vm3911 = vmor %vm3909, %vm3910
      %vm3912 = vsmask.f32 5392
      %vm3913 = vmor %vm3911, %vm3912
      %vm3914 = vsmask.f32 7448
      %vm3915 = vmor %vm3913, %vm3914
      %v3917 = vshrl.u32 %v3883, 16
      %v3919 = vrot.slane %v3917, 6
      %v3920 = vshll.u32 %v3883, 16
      %v3922 = vrot.slane %v3920, 7
      %v3923 = vor.u32 %v3919, %v3922
      %v3924 = vrot.slane %v3923, 2
      %v3926 = vshll.u32 %v3884, 16
      %v3928 = vrot.slane %v3926, 7
      %v3929 = vsel %vm3915, %v3924, %v3928
      %v3931 = vshrl.u32 %v3891, 16
      %v3933 = vrot.slane %v3931, 6
      %v3934 = vshll.u32 %v3891, 16
      %v3936 = vrot.slane %v3934, 7
      %v3937 = vor.u32 %v3933, %v3936
      %v3938 = vrot.slane %v3937, 2
      %v3940 = vshll.u32 %v3892, 16
      %v3942 = vrot.slane %v3940, 7
      %v3943 = vsel %vm3915, %v3938, %v3942
      %v3945 = vshrl.u32 %v3899, 16
      %v3947 = vrot.slane %v3945, 6
      %v3948 = vshll.u32 %v3899, 16
      %v3950 = vrot.slane %v3948, 7
      %v3951 = vor.u32 %v3947, %v3950
      %v3952 = vrot.slane %v3951, 2
      %v3954 = vshll.u32 %v3900, 16
      %v3956 = vrot.slane %v3954, 7
      %v3957 = vsel %vm3915, %v3952, %v3956
      %v3959 = vshrl.u32 %v3907, 16
      %v3961 = vrot.slane %v3959, 6
      %v3962 = vshll.u32 %v3907, 16
      %v3964 = vrot.slane %v3962, 7
      %v3965 = vor.u32 %v3961, %v3964
      %v3966 = vrot.slane %v3965, 2
      %v3968 = vshll.u32 %v3908, 16
      %v3970 = vrot.slane %v3968, 7
      %v3971 = vsel %vm3915, %v3966, %v3970
      %v3972 = vld [vmem:[%s3 + $0x100] sm:$0xff]
      %v3973 = vld [vmem:[%s3 + $0x108] sm:$0xff]
      %v3974 = vld [vmem:[%s3 + $0x110] sm:$0xff]
      %v3975 = vld [vmem:[%s3 + $0x118] sm:$0xff]
      %v3976 = vld [vmem:[%s3 + $0x120] sm:$0xff]
      %v3977 = vld [vmem:[%s3 + $0x128] sm:$0xff]
      %v3978 = vld [vmem:[%s3 + $0x130] sm:$0xff]
      %v3979 = vld [vmem:[%s3 + $0x138] sm:$0xff]
      %v3980 = vld [vmem:[%s3 + $0x140] sm:$0xff]
      %v3981 = vld [vmem:[%s3 + $0x148] sm:$0xff]
      %v3982 = vld [vmem:[%s3 + $0x150] sm:$0xff]
      %v3983 = vld [vmem:[%s3 + $0x158] sm:$0xff]
      %v3984 = vld [vmem:[%s3 + $0x160] sm:$0xff]
      %v3985 = vld [vmem:[%s3 + $0x168] sm:$0xff]
      %v3986 = vld [vmem:[%s3 + $0x170] sm:$0xff]
      %v3987 = vld [vmem:[%s3 + $0x178] sm:$0xff]
      %v3988 = vcombine.low %v3929, %v3943
      %v3989 = vcombine.low %v3957, %v3971
      %v3991 = vunpack.c.l.s4 1983009808
      %v3992 = vunpack.c.0.s8 %v3991
      %v3993 = vlaneseq
      %v3994 = vshrl.u32 %v3993, 7
      %v3995 = vsub.s32 %v3992, %v3994
      %v3996 = vrot.slane %v3988, %v3995
      %v3998 = vunpack.c.l.s4 1983009808
      %v3999 = vunpack.c.0.s8 %v3998
      %v4000 = vlaneseq
      %v4001 = vshrl.u32 %v4000, 7
      %v4002 = vsub.s32 %v3999, %v4001
      %v4003 = vrot.slane %v3989, %v4002
      %v4004 = vcombine.low %v3996, %v4003
      %v4022 = vunpack.c.l.b16 %v3972
      %v4023 = vunpack.c.h.b16 %v3972
      %v4024 = vunpack.c.l.b16 %v3973
      %v4025 = vunpack.c.h.b16 %v3973
      %v4026 = vunpack.c.l.b16 %v3974
      %v4027 = vunpack.c.h.b16 %v3974
      %v4028 = vunpack.c.l.b16 %v3975
      %v4029 = vunpack.c.h.b16 %v3975
      %v4030 = vunpack.c.l.b16 %v3976
      %v4031 = vunpack.c.h.b16 %v3976
      %v4032 = vunpack.c.l.b16 %v3977
      %v4033 = vunpack.c.h.b16 %v3977
      %v4034 = vunpack.c.l.b16 %v3978
      %v4035 = vunpack.c.h.b16 %v3978
      %v4036 = vunpack.c.l.b16 %v3979
      %v4037 = vunpack.c.h.b16 %v3979
      %v4038 = vunpack.c.l.b16 %v3980
      %v4039 = vunpack.c.h.b16 %v3980
      %v4040 = vunpack.c.l.b16 %v3981
      %v4041 = vunpack.c.h.b16 %v3981
      %v4042 = vunpack.c.l.b16 %v3982
      %v4043 = vunpack.c.h.b16 %v3982
      %v4044 = vunpack.c.l.b16 %v3983
      %v4045 = vunpack.c.h.b16 %v3983
      %v4046 = vunpack.c.l.b16 %v3984
      %v4047 = vunpack.c.h.b16 %v3984
      %v4048 = vunpack.c.l.b16 %v3985
      %v4049 = vunpack.c.h.b16 %v3985
      %v4050 = vunpack.c.l.b16 %v3986
      %v4051 = vunpack.c.h.b16 %v3986
      %v4052 = vunpack.c.l.b16 %v3987
      %v4053 = vunpack.c.h.b16 %v3987
      %v4054 = vpack.c.b16 %v4024, %v4022
      %v4055 = vpack.c.b16 %v4025, %v4023
      %v4056 = vpack.c.b16 %v4028, %v4026
      %v4057 = vpack.c.b16 %v4029, %v4027
      %v4058 = vpack.c.b16 %v4032, %v4030
      %v4059 = vpack.c.b16 %v4033, %v4031
      %v4060 = vpack.c.b16 %v4036, %v4034
      %v4061 = vpack.c.b16 %v4037, %v4035
      %v4062 = vpack.c.b16 %v4040, %v4038
      %v4063 = vpack.c.b16 %v4041, %v4039
      %v4064 = vpack.c.b16 %v4044, %v4042
      %v4065 = vpack.c.b16 %v4045, %v4043
      %v4066 = vpack.c.b16 %v4048, %v4046
      %v4067 = vpack.c.b16 %v4049, %v4047
      %v4068 = vpack.c.b16 %v4052, %v4050
      %v4069 = vpack.c.b16 %v4053, %v4051
      %4086 = vmatprep.subr.bf16.mxu0 %v4055
      %4087 = vmatpush1.bf16.msra.mxu0 %v4054
      %4088 = vmatprep.subr.bf16.mxu0 %v4057
      %4089 = vmatpush1.bf16.msra.mxu0 %v4056
      %4090 = vmatprep.subr.bf16.mxu0 %v4059
      %4091 = vmatpush1.bf16.msra.mxu0 %v4058
      %4092 = vmatprep.subr.bf16.mxu0 %v4061
      %4093 = vmatpush1.bf16.msra.mxu0 %v4060
      %4094 = vmatprep.subr.bf16.mxu0 %v4063
      %4095 = vmatpush1.bf16.msra.mxu0 %v4062
      %4096 = vmatprep.subr.bf16.mxu0 %v4065
      %4097 = vmatpush1.bf16.msra.mxu0 %v4064
      %4098 = vmatprep.subr.bf16.mxu0 %v4067
      %4099 = vmatpush1.bf16.msra.mxu0 %v4066
      %4100 = vmatprep.subr.bf16.mxu0 %v4069
      %4101 = vmatpush1.bf16.msra.mxu0 %v4068
      %4102 = vmatprep.subr.bf16.mxu0 0
      %4103 = vmatpush1.bf16.msra.mxu0 0
      %4104 = vmatprep.subr.bf16.mxu0 0
      %4105 = vmatpush1.bf16.msra.mxu0 0
      %4106 = vmatprep.subr.bf16.mxu0 0
      %4107 = vmatpush1.bf16.msra.mxu0 0
      %4108 = vmatprep.subr.bf16.mxu0 0
      %4109 = vmatpush1.bf16.msra.mxu0 0
      %4110 = vmatprep.subr.bf16.mxu0 0
      %4111 = vmatpush1.bf16.msra.mxu0 0
      %4112 = vmatprep.subr.bf16.mxu0 0
      %4113 = vmatpush1.bf16.msra.mxu0 0
      %4114 = vmatprep.subr.bf16.mxu0 0
      %4115 = vmatpush1.bf16.msra.mxu0 0
      %4116 = vmatprep.subr.bf16.mxu0 0
      %4117 = vmatpush1.bf16.msra.mxu0 0
      %4118 = vmatprep.mubr.bf16.mxu0 0
      %4119 = vmatmul.mubr.bf16.gmra.mrb[0].mxu0 %v4004
      %v4120 = vpop.f32.mrb[0].mxu0
      %v4121 = vadd.f32 0.0, %v4120
      %v4122 = vpop.f32.mrb[0].mxu0
      %v4123 = vadd.f32 0.0, %v4122
      %v4124 = vpop.f32.mrb[0].mxu0
      %v4125 = vadd.f32 0.0, %v4124
      %v4126 = vpop.f32.mrb[0].mxu0
      %v4127 = vadd.f32 0.0, %v4126
      %4128 = vdwg.mxu0
      %v4129 = vadd.f32 %v3861, %v4121
      %v4130 = vadd.f32 %v3863, %v4123
      %v4131 = vadd.f32 %v3865, %v4125
      %v4132 = vadd.f32 %v3867, %v4127
      %v4133 = vld [vmem:[%s3498] sm:$0x3]
      %v4134 = vld [vmem:[%s3498 + $0x4] sm:$0x3]
      %v4135 = vld [vmem:[%s3498 + $0x8] sm:$0x3]
      %v4136 = vld [vmem:[%s3498 + $0xc] sm:$0x3]
      %v4137 = vld [vmem:[%s3 + $0x180] sm:$0xff]
      %v4138 = vld [vmem:[%s3 + $0x188] sm:$0xff]
      %v4139 = vld [vmem:[%s3 + $0x190] sm:$0xff]
      %v4140 = vld [vmem:[%s3 + $0x198] sm:$0xff]
      %v4141 = vld [vmem:[%s3 + $0x1a0] sm:$0xff]
      %v4142 = vld [vmem:[%s3 + $0x1a8] sm:$0xff]
      %v4143 = vld [vmem:[%s3 + $0x1b0] sm:$0xff]
      %v4144 = vld [vmem:[%s3 + $0x1b8] sm:$0xff]
      %v4145 = vld [vmem:[%s3 + $0x1c0] sm:$0xff]
      %v4146 = vld [vmem:[%s3 + $0x1c8] sm:$0xff]
      %v4147 = vld [vmem:[%s3 + $0x1d0] sm:$0xff]
      %v4148 = vld [vmem:[%s3 + $0x1d8] sm:$0xff]
      %v4149 = vld [vmem:[%s3 + $0x1e0] sm:$0xff]
      %v4150 = vld [vmem:[%s3 + $0x1e8] sm:$0xff]
      %v4151 = vld [vmem:[%s3 + $0x1f0] sm:$0xff]
      %v4152 = vld [vmem:[%s3 + $0x1f8] sm:$0xff]
      %v4157 = vcombine.low %v4133, %v4134
      %v4158 = vcombine.low %v4135, %v4136
      %v4160 = vunpack.c.l.s4 1983009808
      %v4161 = vunpack.c.0.s8 %v4160
      %v4162 = vlaneseq
      %v4163 = vshrl.u32 %v4162, 7
      %v4164 = vsub.s32 %v4161, %v4163
      %v4165 = vrot.slane %v4157, %v4164
      %v4167 = vunpack.c.l.s4 1983009808
      %v4168 = vunpack.c.0.s8 %v4167
      %v4169 = vlaneseq
      %v4170 = vshrl.u32 %v4169, 7
      %v4171 = vsub.s32 %v4168, %v4170
      %v4172 = vrot.slane %v4158, %v4171
      %v4173 = vcombine.low %v4165, %v4172
      %v4191 = vunpack.c.l.b16 %v4137
      %v4192 = vunpack.c.h.b16 %v4137
      %v4193 = vunpack.c.l.b16 %v4138
      %v4194 = vunpack.c.h.b16 %v4138
      %v4195 = vunpack.c.l.b16 %v4139
      %v4196 = vunpack.c.h.b16 %v4139
      %v4197 = vunpack.c.l.b16 %v4140
      %v4198 = vunpack.c.h.b16 %v4140
      %v4199 = vunpack.c.l.b16 %v4141
      %v4200 = vunpack.c.h.b16 %v4141
      %v4201 = vunpack.c.l.b16 %v4142
      %v4202 = vunpack.c.h.b16 %v4142
      %v4203 = vunpack.c.l.b16 %v4143
      %v4204 = vunpack.c.h.b16 %v4143
      %v4205 = vunpack.c.l.b16 %v4144
      %v4206 = vunpack.c.h.b16 %v4144
      %v4207 = vunpack.c.l.b16 %v4145
      %v4208 = vunpack.c.h.b16 %v4145
      %v4209 = vunpack.c.l.b16 %v4146
      %v4210 = vunpack.c.h.b16 %v4146
      %v4211 = vunpack.c.l.b16 %v4147
      %v4212 = vunpack.c.h.b16 %v4147
      %v4213 = vunpack.c.l.b16 %v4148
      %v4214 = vunpack.c.h.b16 %v4148
      %v4215 = vunpack.c.l.b16 %v4149
      %v4216 = vunpack.c.h.b16 %v4149
      %v4217 = vunpack.c.l.b16 %v4150
      %v4218 = vunpack.c.h.b16 %v4150
      %v4219 = vunpack.c.l.b16 %v4151
      %v4220 = vunpack.c.h.b16 %v4151
      %v4221 = vunpack.c.l.b16 %v4152
      %v4222 = vunpack.c.h.b16 %v4152
      %v4223 = vpack.c.b16 %v4193, %v4191
      %v4224 = vpack.c.b16 %v4194, %v4192
      %v4225 = vpack.c.b16 %v4197, %v4195
      %v4226 = vpack.c.b16 %v4198, %v4196
      %v4227 = vpack.c.b16 %v4201, %v4199
      %v4228 = vpack.c.b16 %v4202, %v4200
      %v4229 = vpack.c.b16 %v4205, %v4203
      %v4230 = vpack.c.b16 %v4206, %v4204
      %v4231 = vpack.c.b16 %v4209, %v4207
      %v4232 = vpack.c.b16 %v4210, %v4208
      %v4233 = vpack.c.b16 %v4213, %v4211
      %v4234 = vpack.c.b16 %v4214, %v4212
      %v4235 = vpack.c.b16 %v4217, %v4215
      %v4236 = vpack.c.b16 %v4218, %v4216
      %v4237 = vpack.c.b16 %v4221, %v4219
      %v4238 = vpack.c.b16 %v4222, %v4220
      %4255 = vmatprep.subr.bf16.mxu0 %v4224
      %4256 = vmatpush1.bf16.msra.mxu0 %v4223
      %4257 = vmatprep.subr.bf16.mxu0 %v4226
      %4258 = vmatpush1.bf16.msra.mxu0 %v4225
      %4259 = vmatprep.subr.bf16.mxu0 %v4228
      %4260 = vmatpush1.bf16.msra.mxu0 %v4227
      %4261 = vmatprep.subr.bf16.mxu0 %v4230
      %4262 = vmatpush1.bf16.msra.mxu0 %v4229
      %4263 = vmatprep.subr.bf16.mxu0 %v4232
      %4264 = vmatpush1.bf16.msra.mxu0 %v4231
      %4265 = vmatprep.subr.bf16.mxu0 %v4234
      %4266 = vmatpush1.bf16.msra.mxu0 %v4233
      %4267 = vmatprep.subr.bf16.mxu0 %v4236
      %4268 = vmatpush1.bf16.msra.mxu0 %v4235
      %4269 = vmatprep.subr.bf16.mxu0 %v4238
      %4270 = vmatpush1.bf16.msra.mxu0 %v4237
      %4271 = vmatprep.subr.bf16.mxu0 0
      %4272 = vmatpush1.bf16.msra.mxu0 0
      %4273 = vmatprep.subr.bf16.mxu0 0
      %4274 = vmatpush1.bf16.msra.mxu0 0
      %4275 = vmatprep.subr.bf16.mxu0 0
      %4276 = vmatpush1.bf16.msra.mxu0 0
      %4277 = vmatprep.subr.bf16.mxu0 0
      %4278 = vmatpush1.bf16.msra.mxu0 0
      %4279 = vmatprep.subr.bf16.mxu0 0
      %4280 = vmatpush1.bf16.msra.mxu0 0
      %4281 = vmatprep.subr.bf16.mxu0 0
      %4282 = vmatpush1.bf16.msra.mxu0 0
      %4283 = vmatprep.subr.bf16.mxu0 0
      %4284 = vmatpush1.bf16.msra.mxu0 0
      %4285 = vmatprep.subr.bf16.mxu0 0
      %4286 = vmatpush1.bf16.msra.mxu0 0
      %4287 = vmatprep.mubr.bf16.mxu0 0
      %4288 = vmatmul.mubr.bf16.gmra.mrb[0].mxu0 %v4173
      %v4289 = vpop.f32.mrb[0].mxu0
      %v4290 = vadd.f32 0.0, %v4289
      %v4291 = vpop.f32.mrb[0].mxu0
      %v4292 = vadd.f32 0.0, %v4291
      %v4293 = vpop.f32.mrb[0].mxu0
      %v4294 = vadd.f32 0.0, %v4293
      %v4295 = vpop.f32.mrb[0].mxu0
      %v4296 = vadd.f32 0.0, %v4295
      %4297 = vdwg.mxu0
      %v4298 = vadd.f32 %v4129, %v4290
      %v4299 = vadd.f32 %v4130, %v4292
      %v4300 = vadd.f32 %v4131, %v4294
      %v4301 = vadd.f32 %v4132, %v4296
      %v4302 = vld [vmem:[%s3533] sm:$0x3]
      %v4303 = vld [vmem:[%s3533 + $0x4] sm:$0x3]
      %v4304 = vld [vmem:[%s3533 + $0x8] sm:$0x3]
      %v4305 = vld [vmem:[%s3533 + $0xc] sm:$0x3]
      %v4306 = vld [vmem:[%s3 + $0x200] sm:$0xff]
      %v4307 = vld [vmem:[%s3 + $0x208] sm:$0xff]
      %v4308 = vld [vmem:[%s3 + $0x210] sm:$0xff]
      %v4309 = vld [vmem:[%s3 + $0x218] sm:$0xff]
      %v4310 = vld [vmem:[%s3 + $0x220] sm:$0xff]
      %v4311 = vld [vmem:[%s3 + $0x228] sm:$0xff]
      %v4312 = vld [vmem:[%s3 + $0x230] sm:$0xff]
      %v4313 = vld [vmem:[%s3 + $0x238] sm:$0xff]
      %v4314 = vld [vmem:[%s3 + $0x240] sm:$0xff]
      %v4315 = vld [vmem:[%s3 + $0x248] sm:$0xff]
      %v4316 = vld [vmem:[%s3 + $0x250] sm:$0xff]
      %v4317 = vld [vmem:[%s3 + $0x258] sm:$0xff]
      %v4318 = vld [vmem:[%s3 + $0x260] sm:$0xff]
      %v4319 = vld [vmem:[%s3 + $0x268] sm:$0xff]
      %v4320 = vld [vmem:[%s3 + $0x270] sm:$0xff]
      %v4321 = vld [vmem:[%s3 + $0x278] sm:$0xff]
      %v4326 = vcombine.low %v4302, %v4303
      %v4327 = vcombine.low %v4304, %v4305
      %v4329 = vunpack.c.l.s4 1983009808
      %v4330 = vunpack.c.0.s8 %v4329
      %v4331 = vlaneseq
      %v4332 = vshrl.u32 %v4331, 7
      %v4333 = vsub.s32 %v4330, %v4332
      %v4334 = vrot.slane %v4326, %v4333
      %v4336 = vunpack.c.l.s4 1983009808
      %v4337 = vunpack.c.0.s8 %v4336
      %v4338 = vlaneseq
      %v4339 = vshrl.u32 %v4338, 7
      %v4340 = vsub.s32 %v4337, %v4339
      %v4341 = vrot.slane %v4327, %v4340
      %v4342 = vcombine.low %v4334, %v4341
      %v4360 = vunpack.c.l.b16 %v4306
      %v4361 = vunpack.c.h.b16 %v4306
      %v4362 = vunpack.c.l.b16 %v4307
      %v4363 = vunpack.c.h.b16 %v4307
      %v4364 = vunpack.c.l.b16 %v4308
      %v4365 = vunpack.c.h.b16 %v4308
      %v4366 = vunpack.c.l.b16 %v4309
      %v4367 = vunpack.c.h.b16 %v4309
      %v4368 = vunpack.c.l.b16 %v4310
      %v4369 = vunpack.c.h.b16 %v4310
      %v4370 = vunpack.c.l.b16 %v4311
      %v4371 = vunpack.c.h.b16 %v4311
      %v4372 = vunpack.c.l.b16 %v4312
      %v4373 = vunpack.c.h.b16 %v4312
      %v4374 = vunpack.c.l.b16 %v4313
      %v4375 = vunpack.c.h.b16 %v4313
      %v4376 = vunpack.c.l.b16 %v4314
      %v4377 = vunpack.c.h.b16 %v4314
      %v4378 = vunpack.c.l.b16 %v4315
      %v4379 = vunpack.c.h.b16 %v4315
      %v4380 = vunpack.c.l.b16 %v4316
      %v4381 = vunpack.c.h.b16 %v4316
      %v4382 = vunpack.c.l.b16 %v4317
      %v4383 = vunpack.c.h.b16 %v4317
      %v4384 = vunpack.c.l.b16 %v4318
      %v4385 = vunpack.c.h.b16 %v4318
      %v4386 = vunpack.c.l.b16 %v4319
      %v4387 = vunpack.c.h.b16 %v4319
      %v4388 = vunpack.c.l.b16 %v4320
      %v4389 = vunpack.c.h.b16 %v4320
      %v4390 = vunpack.c.l.b16 %v4321
      %v4391 = vunpack.c.h.b16 %v4321
      %v4392 = vpack.c.b16 %v4362, %v4360
      %v4393 = vpack.c.b16 %v4363, %v4361
      %v4394 = vpack.c.b16 %v4366, %v4364
      %v4395 = vpack.c.b16 %v4367, %v4365
      %v4396 = vpack.c.b16 %v4370, %v4368
      %v4397 = vpack.c.b16 %v4371, %v4369
      %v4398 = vpack.c.b16 %v4374, %v4372
      %v4399 = vpack.c.b16 %v4375, %v4373
      %v4400 = vpack.c.b16 %v4378, %v4376
      %v4401 = vpack.c.b16 %v4379, %v4377
      %v4402 = vpack.c.b16 %v4382, %v4380
      %v4403 = vpack.c.b16 %v4383, %v4381
      %v4404 = vpack.c.b16 %v4386, %v4384
      %v4405 = vpack.c.b16 %v4387, %v4385
      %v4406 = vpack.c.b16 %v4390, %v4388
      %v4407 = vpack.c.b16 %v4391, %v4389
      %4424 = vmatprep.subr.bf16.mxu0 %v4393
      %4425 = vmatpush1.bf16.msra.mxu0 %v4392
      %4426 = vmatprep.subr.bf16.mxu0 %v4395
      %4427 = vmatpush1.bf16.msra.mxu0 %v4394
      %4428 = vmatprep.subr.bf16.mxu0 %v4397
      %4429 = vmatpush1.bf16.msra.mxu0 %v4396
      %4430 = vmatprep.subr.bf16.mxu0 %v4399
      %4431 = vmatpush1.bf16.msra.mxu0 %v4398
      %4432 = vmatprep.subr.bf16.mxu0 %v4401
      %4433 = vmatpush1.bf16.msra.mxu0 %v4400
      %4434 = vmatprep.subr.bf16.mxu0 %v4403
      %4435 = vmatpush1.bf16.msra.mxu0 %v4402
      %4436 = vmatprep.subr.bf16.mxu0 %v4405
      %4437 = vmatpush1.bf16.msra.mxu0 %v4404
      %4438 = vmatprep.subr.bf16.mxu0 %v4407
      %4439 = vmatpush1.bf16.msra.mxu0 %v4406
      %4440 = vmatprep.subr.bf16.mxu0 0
      %4441 = vmatpush1.bf16.msra.mxu0 0
      %4442 = vmatprep.subr.bf16.mxu0 0
      %4443 = vmatpush1.bf16.msra.mxu0 0
      %4444 = vmatprep.subr.bf16.mxu0 0
      %4445 = vmatpush1.bf16.msra.mxu0 0
      %4446 = vmatprep.subr.bf16.mxu0 0
      %4447 = vmatpush1.bf16.msra.mxu0 0
      %4448 = vmatprep.subr.bf16.mxu0 0
      %4449 = vmatpush1.bf16.msra.mxu0 0
      %4450 = vmatprep.subr.bf16.mxu0 0
      %4451 = vmatpush1.bf16.msra.mxu0 0
      %4452 = vmatprep.subr.bf16.mxu0 0
      %4453 = vmatpush1.bf16.msra.mxu0 0
      %4454 = vmatprep.subr.bf16.mxu0 0
      %4455 = vmatpush1.bf16.msra.mxu0 0
      %4456 = vmatprep.mubr.bf16.mxu0 0
      %4457 = vmatmul.mubr.bf16.gmra.mrb[0].mxu0 %v4342
      %v4458 = vpop.f32.mrb[0].mxu0
      %v4459 = vadd.f32 0.0, %v4458
      %v4460 = vpop.f32.mrb[0].mxu0
      %v4461 = vadd.f32 0.0, %v4460
      %v4462 = vpop.f32.mrb[0].mxu0
      %v4463 = vadd.f32 0.0, %v4462
      %v4464 = vpop.f32.mrb[0].mxu0
      %v4465 = vadd.f32 0.0, %v4464
      %4466 = vdwg.mxu0
      %v4467 = vadd.f32 %v4298, %v4459
      %v4468 = vadd.f32 %v4299, %v4461
      %v4469 = vadd.f32 %v4300, %v4463
      %v4470 = vadd.f32 %v4301, %v4465
      %v4471 = vld [vmem:[%s3498] sm:$0x7]
      %v4472 = vld [vmem:[%s3498 + $0x4] sm:$0x7]
      %v4473 = vld [vmem:[%s3498 + $0x8] sm:$0x7]
      %v4474 = vld [vmem:[%s3498 + $0xc] sm:$0x7]
      %v4480 = vunpack.c.l.s4 1983009808
      %v4481 = vunpack.c.0.s8 %v4480
      %v4482 = vlaneseq
      %v4483 = vshrl.u32 %v4482, 7
      %v4484 = vsub.s32 %v4481, %v4483
      %v4485 = vrot.slane %v4471, %v4484
      %v4486 = vcombine.high %v4485, %v4485
      %v4488 = vunpack.c.l.s4 1983009808
      %v4489 = vunpack.c.0.s8 %v4488
      %v4490 = vlaneseq
      %v4491 = vshrl.u32 %v4490, 7
      %v4492 = vsub.s32 %v4489, %v4491
      %v4493 = vrot.slane %v4472, %v4492
      %v4494 = vcombine.high %v4493, %v4493
      %v4496 = vunpack.c.l.s4 1983009808
      %v4497 = vunpack.c.0.s8 %v4496
      %v4498 = vlaneseq
      %v4499 = vshrl.u32 %v4498, 7
      %v4500 = vsub.s32 %v4497, %v4499
      %v4501 = vrot.slane %v4473, %v4500
      %v4502 = vcombine.high %v4501, %v4501
      %v4504 = vunpack.c.l.s4 1983009808
      %v4505 = vunpack.c.0.s8 %v4504
      %v4506 = vlaneseq
      %v4507 = vshrl.u32 %v4506, 7
      %v4508 = vsub.s32 %v4505, %v4507
      %v4509 = vrot.slane %v4474, %v4508
      %v4510 = vcombine.high %v4509, %v4509
      %v4512 = vshrl.u32 %v4485, 16
      %v4514 = vrot.slane %v4512, 6
      %v4515 = vshll.u32 %v4485, 16
      %v4517 = vrot.slane %v4515, 7
      %v4518 = vor.u32 %v4514, %v4517
      %v4519 = vrot.slane %v4518, 2
      %v4521 = vshll.u32 %v4486, 16
      %v4523 = vrot.slane %v4521, 7
      %v4524 = vsel %vm3915, %v4519, %v4523
      %v4526 = vshrl.u32 %v4493, 16
      %v4528 = vrot.slane %v4526, 6
      %v4529 = vshll.u32 %v4493, 16
      %v4531 = vrot.slane %v4529, 7
      %v4532 = vor.u32 %v4528, %v4531
      %v4533 = vrot.slane %v4532, 2
      %v4535 = vshll.u32 %v4494, 16
      %v4537 = vrot.slane %v4535, 7
      %v4538 = vsel %vm3915, %v4533, %v4537
      %v4540 = vshrl.u32 %v4501, 16
      %v4542 = vrot.slane %v4540, 6
      %v4543 = vshll.u32 %v4501, 16
      %v4545 = vrot.slane %v4543, 7
      %v4546 = vor.u32 %v4542, %v4545
      %v4547 = vrot.slane %v4546, 2
      %v4549 = vshll.u32 %v4502, 16
      %v4551 = vrot.slane %v4549, 7
      %v4552 = vsel %vm3915, %v4547, %v4551
      %v4554 = vshrl.u32 %v4509, 16
      %v4556 = vrot.slane %v4554, 6
      %v4557 = vshll.u32 %v4509, 16
      %v4559 = vrot.slane %v4557, 7
      %v4560 = vor.u32 %v4556, %v4559
      %v4561 = vrot.slane %v4560, 2
      %v4563 = vshll.u32 %v4510, 16
      %v4565 = vrot.slane %v4563, 7
      %v4566 = vsel %vm3915, %v4561, %v4565
      %v4567 = vld [vmem:[%s3 + $0x280] sm:$0xff]
      %v4568 = vld [vmem:[%s3 + $0x288] sm:$0xff]
      %v4569 = vld [vmem:[%s3 + $0x290] sm:$0xff]
      %v4570 = vld [vmem:[%s3 + $0x298] sm:$0xff]
      %v4571 = vld [vmem:[%s3 + $0x2a0] sm:$0xff]
      %v4572 = vld [vmem:[%s3 + $0x2a8] sm:$0xff]
      %v4573 = vld [vmem:[%s3 + $0x2b0] sm:$0xff]
      %v4574 = vld [vmem:[%s3 + $0x2b8] sm:$0xff]
      %v4575 = vld [vmem:[%s3 + $0x2c0] sm:$0xff]
      %v4576 = vld [vmem:[%s3 + $0x2c8] sm:$0xff]
      %v4577 = vld [vmem:[%s3 + $0x2d0] sm:$0xff]
      %v4578 = vld [vmem:[%s3 + $0x2d8] sm:$0xff]
      %v4579 = vld [vmem:[%s3 + $0x2e0] sm:$0xff]
      %v4580 = vld [vmem:[%s3 + $0x2e8] sm:$0xff]
      %v4581 = vld [vmem:[%s3 + $0x2f0] sm:$0xff]
      %v4582 = vld [vmem:[%s3 + $0x2f8] sm:$0xff]
      %v4583 = vcombine.low %v4524, %v4538
      %v4584 = vcombine.low %v4552, %v4566
      %v4586 = vunpack.c.l.s4 1983009808
      %v4587 = vunpack.c.0.s8 %v4586
      %v4588 = vlaneseq
      %v4589 = vshrl.u32 %v4588, 7
      %v4590 = vsub.s32 %v4587, %v4589
      %v4591 = vrot.slane %v4583, %v4590
      %v4593 = vunpack.c.l.s4 1983009808
      %v4594 = vunpack.c.0.s8 %v4593
      %v4595 = vlaneseq
      %v4596 = vshrl.u32 %v4595, 7
      %v4597 = vsub.s32 %v4594, %v4596
      %v4598 = vrot.slane %v4584, %v4597
      %v4599 = vcombine.low %v4591, %v4598
      %v4617 = vunpack.c.l.b16 %v4567
      %v4618 = vunpack.c.h.b16 %v4567
      %v4619 = vunpack.c.l.b16 %v4568
      %v4620 = vunpack.c.h.b16 %v4568
      %v4621 = vunpack.c.l.b16 %v4569
      %v4622 = vunpack.c.h.b16 %v4569
      %v4623 = vunpack.c.l.b16 %v4570
      %v4624 = vunpack.c.h.b16 %v4570
      %v4625 = vunpack.c.l.b16 %v4571
      %v4626 = vunpack.c.h.b16 %v4571
      %v4627 = vunpack.c.l.b16 %v4572
      %v4628 = vunpack.c.h.b16 %v4572
      %v4629 = vunpack.c.l.b16 %v4573
      %v4630 = vunpack.c.h.b16 %v4573
      %v4631 = vunpack.c.l.b16 %v4574
      %v4632 = vunpack.c.h.b16 %v4574
      %v4633 = vunpack.c.l.b16 %v4575
      %v4634 = vunpack.c.h.b16 %v4575
      %v4635 = vunpack.c.l.b16 %v4576
      %v4636 = vunpack.c.h.b16 %v4576
      %v4637 = vunpack.c.l.b16 %v4577
      %v4638 = vunpack.c.h.b16 %v4577
      %v4639 = vunpack.c.l.b16 %v4578
      %v4640 = vunpack.c.h.b16 %v4578
      %v4641 = vunpack.c.l.b16 %v4579
      %v4642 = vunpack.c.h.b16 %v4579
      %v4643 = vunpack.c.l.b16 %v4580
      %v4644 = vunpack.c.h.b16 %v4580
      %v4645 = vunpack.c.l.b16 %v4581
      %v4646 = vunpack.c.h.b16 %v4581
      %v4647 = vunpack.c.l.b16 %v4582
      %v4648 = vunpack.c.h.b16 %v4582
      %v4649 = vpack.c.b16 %v4619, %v4617
      %v4650 = vpack.c.b16 %v4620, %v4618
      %v4651 = vpack.c.b16 %v4623, %v4621
      %v4652 = vpack.c.b16 %v4624, %v4622
      %v4653 = vpack.c.b16 %v4627, %v4625
      %v4654 = vpack.c.b16 %v4628, %v4626
      %v4655 = vpack.c.b16 %v4631, %v4629
      %v4656 = vpack.c.b16 %v4632, %v4630
      %v4657 = vpack.c.b16 %v4635, %v4633
      %v4658 = vpack.c.b16 %v4636, %v4634
      %v4659 = vpack.c.b16 %v4639, %v4637
      %v4660 = vpack.c.b16 %v4640, %v4638
      %v4661 = vpack.c.b16 %v4643, %v4641
      %v4662 = vpack.c.b16 %v4644, %v4642
      %v4663 = vpack.c.b16 %v4647, %v4645
      %v4664 = vpack.c.b16 %v4648, %v4646
      %4681 = vmatprep.subr.bf16.mxu0 %v4650
      %4682 = vmatpush1.bf16.msra.mxu0 %v4649
      %4683 = vmatprep.subr.bf16.mxu0 %v4652
      %4684 = vmatpush1.bf16.msra.mxu0 %v4651
      %4685 = vmatprep.subr.bf16.mxu0 %v4654
      %4686 = vmatpush1.bf16.msra.mxu0 %v4653
      %4687 = vmatprep.subr.bf16.mxu0 %v4656
      %4688 = vmatpush1.bf16.msra.mxu0 %v4655
      %4689 = vmatprep.subr.bf16.mxu0 %v4658
      %4690 = vmatpush1.bf16.msra.mxu0 %v4657
      %4691 = vmatprep.subr.bf16.mxu0 %v4660
      %4692 = vmatpush1.bf16.msra.mxu0 %v4659
      %4693 = vmatprep.subr.bf16.mxu0 %v4662
      %4694 = vmatpush1.bf16.msra.mxu0 %v4661
      %4695 = vmatprep.subr.bf16.mxu0 %v4664
      %4696 = vmatpush1.bf16.msra.mxu0 %v4663
      %4697 = vmatprep.subr.bf16.mxu0 0
      %4698 = vmatpush1.bf16.msra.mxu0 0
      %4699 = vmatprep.subr.bf16.mxu0 0
      %4700 = vmatpush1.bf16.msra.mxu0 0
      %4701 = vmatprep.subr.bf16.mxu0 0
      %4702 = vmatpush1.bf16.msra.mxu0 0
      %4703 = vmatprep.subr.bf16.mxu0 0
      %4704 = vmatpush1.bf16.msra.mxu0 0
      %4705 = vmatprep.subr.bf16.mxu0 0
      %4706 = vmatpush1.bf16.msra.mxu0 0
      %4707 = vmatprep.subr.bf16.mxu0 0
      %4708 = vmatpush1.bf16.msra.mxu0 0
      %4709 = vmatprep.subr.bf16.mxu0 0
      %4710 = vmatpush1.bf16.msra.mxu0 0
      %4711 = vmatprep.subr.bf16.mxu0 0
      %4712 = vmatpush1.bf16.msra.mxu0 0
      %4713 = vmatprep.mubr.bf16.mxu0 0
      %4714 = vmatmul.mubr.bf16.gmra.mrb[0].mxu0 %v4599
      %v4715 = vpop.f32.mrb[0].mxu0
      %v4716 = vadd.f32 0.0, %v4715
      %v4717 = vpop.f32.mrb[0].mxu0
      %v4718 = vadd.f32 0.0, %v4717
      %v4719 = vpop.f32.mrb[0].mxu0
      %v4720 = vadd.f32 0.0, %v4719
      %v4721 = vpop.f32.mrb[0].mxu0
      %v4722 = vadd.f32 0.0, %v4721
      %4723 = vdwg.mxu0
      %v4724 = vadd.f32 %v4467, %v4716
      %v4725 = vadd.f32 %v4468, %v4718
      %v4726 = vadd.f32 %v4469, %v4720
      %v4727 = vadd.f32 %v4470, %v4722
      %v4728 = vld [vmem:[%s3378] sm:$0x3]
      %v4729 = vld [vmem:[%s3378 + $0x4] sm:$0x3]
      %v4730 = vld [vmem:[%s3378 + $0x8] sm:$0x3]
      %v4731 = vld [vmem:[%s3378 + $0xc] sm:$0x3]
      %v4732 = vld [vmem:[%s3 + $0x300] sm:$0xff]
      %v4733 = vld [vmem:[%s3 + $0x308] sm:$0xff]
      %v4734 = vld [vmem:[%s3 + $0x310] sm:$0xff]
      %v4735 = vld [vmem:[%s3 + $0x318] sm:$0xff]
      %v4736 = vld [vmem:[%s3 + $0x320] sm:$0xff]
      %v4737 = vld [vmem:[%s3 + $0x328] sm:$0xff]
      %v4738 = vld [vmem:[%s3 + $0x330] sm:$0xff]
      %v4739 = vld [vmem:[%s3 + $0x338] sm:$0xff]
      %v4740 = vld [vmem:[%s3 + $0x340] sm:$0xff]
      %v4741 = vld [vmem:[%s3 + $0x348] sm:$0xff]
      %v4742 = vld [vmem:[%s3 + $0x350] sm:$0xff]
      %v4743 = vld [vmem:[%s3 + $0x358] sm:$0xff]
      %v4744 = vld [vmem:[%s3 + $0x360] sm:$0xff]
      %v4745 = vld [vmem:[%s3 + $0x368] sm:$0xff]
      %v4746 = vld [vmem:[%s3 + $0x370] sm:$0xff]
      %v4747 = vld [vmem:[%s3 + $0x378] sm:$0xff]
      %v4752 = vcombine.low %v4728, %v4729
      %v4753 = vcombine.low %v4730, %v4731
      %v4755 = vunpack.c.l.s4 1983009808
      %v4756 = vunpack.c.0.s8 %v4755
      %v4757 = vlaneseq
      %v4758 = vshrl.u32 %v4757, 7
      %v4759 = vsub.s32 %v4756, %v4758
      %v4760 = vrot.slane %v4752, %v4759
      %v4762 = vunpack.c.l.s4 1983009808
      %v4763 = vunpack.c.0.s8 %v4762
      %v4764 = vlaneseq
      %v4765 = vshrl.u32 %v4764, 7
      %v4766 = vsub.s32 %v4763, %v4765
      %v4767 = vrot.slane %v4753, %v4766
      %v4768 = vcombine.low %v4760, %v4767
      %v4786 = vunpack.c.l.b16 %v4732
      %v4787 = vunpack.c.h.b16 %v4732
      %v4788 = vunpack.c.l.b16 %v4733
      %v4789 = vunpack.c.h.b16 %v4733
      %v4790 = vunpack.c.l.b16 %v4734
      %v4791 = vunpack.c.h.b16 %v4734
      %v4792 = vunpack.c.l.b16 %v4735
      %v4793 = vunpack.c.h.b16 %v4735
      %v4794 = vunpack.c.l.b16 %v4736
      %v4795 = vunpack.c.h.b16 %v4736
      %v4796 = vunpack.c.l.b16 %v4737
      %v4797 = vunpack.c.h.b16 %v4737
      %v4798 = vunpack.c.l.b16 %v4738
      %v4799 = vunpack.c.h.b16 %v4738
      %v4800 = vunpack.c.l.b16 %v4739
      %v4801 = vunpack.c.h.b16 %v4739
      %v4802 = vunpack.c.l.b16 %v4740
      %v4803 = vunpack.c.h.b16 %v4740
      %v4804 = vunpack.c.l.b16 %v4741
      %v4805 = vunpack.c.h.b16 %v4741
      %v4806 = vunpack.c.l.b16 %v4742
      %v4807 = vunpack.c.h.b16 %v4742
      %v4808 = vunpack.c.l.b16 %v4743
      %v4809 = vunpack.c.h.b16 %v4743
      %v4810 = vunpack.c.l.b16 %v4744
      %v4811 = vunpack.c.h.b16 %v4744
      %v4812 = vunpack.c.l.b16 %v4745
      %v4813 = vunpack.c.h.b16 %v4745
      %v4814 = vunpack.c.l.b16 %v4746
      %v4815 = vunpack.c.h.b16 %v4746
      %v4816 = vunpack.c.l.b16 %v4747
      %v4817 = vunpack.c.h.b16 %v4747
      %v4818 = vpack.c.b16 %v4788, %v4786
      %v4819 = vpack.c.b16 %v4789, %v4787
      %v4820 = vpack.c.b16 %v4792, %v4790
      %v4821 = vpack.c.b16 %v4793, %v4791
      %v4822 = vpack.c.b16 %v4796, %v4794
      %v4823 = vpack.c.b16 %v4797, %v4795
      %v4824 = vpack.c.b16 %v4800, %v4798
      %v4825 = vpack.c.b16 %v4801, %v4799
      %v4826 = vpack.c.b16 %v4804, %v4802
      %v4827 = vpack.c.b16 %v4805, %v4803
      %v4828 = vpack.c.b16 %v4808, %v4806
      %v4829 = vpack.c.b16 %v4809, %v4807
      %v4830 = vpack.c.b16 %v4812, %v4810
      %v4831 = vpack.c.b16 %v4813, %v4811
      %v4832 = vpack.c.b16 %v4816, %v4814
      %v4833 = vpack.c.b16 %v4817, %v4815
      %4850 = vmatprep.subr.bf16.mxu0 %v4819
      %4851 = vmatpush1.bf16.msra.mxu0 %v4818
      %4852 = vmatprep.subr.bf16.mxu0 %v4821
      %4853 = vmatpush1.bf16.msra.mxu0 %v4820
      %4854 = vmatprep.subr.bf16.mxu0 %v4823
      %4855 = vmatpush1.bf16.msra.mxu0 %v4822
      %4856 = vmatprep.subr.bf16.mxu0 %v4825
      %4857 = vmatpush1.bf16.msra.mxu0 %v4824
      %4858 = vmatprep.subr.bf16.mxu0 %v4827
      %4859 = vmatpush1.bf16.msra.mxu0 %v4826
      %4860 = vmatprep.subr.bf16.mxu0 %v4829
      %4861 = vmatpush1.bf16.msra.mxu0 %v4828
      %4862 = vmatprep.subr.bf16.mxu0 %v4831
      %4863 = vmatpush1.bf16.msra.mxu0 %v4830
      %4864 = vmatprep.subr.bf16.mxu0 %v4833
      %4865 = vmatpush1.bf16.msra.mxu0 %v4832
      %4866 = vmatprep.subr.bf16.mxu0 0
      %4867 = vmatpush1.bf16.msra.mxu0 0
      %4868 = vmatprep.subr.bf16.mxu0 0
      %4869 = vmatpush1.bf16.msra.mxu0 0
      %4870 = vmatprep.subr.bf16.mxu0 0
      %4871 = vmatpush1.bf16.msra.mxu0 0
      %4872 = vmatprep.subr.bf16.mxu0 0
      %4873 = vmatpush1.bf16.msra.mxu0 0
      %4874 = vmatprep.subr.bf16.mxu0 0
      %4875 = vmatpush1.bf16.msra.mxu0 0
      %4876 = vmatprep.subr.bf16.mxu0 0
      %4877 = vmatpush1.bf16.msra.mxu0 0
      %4878 = vmatprep.subr.bf16.mxu0 0
      %4879 = vmatpush1.bf16.msra.mxu0 0
      %4880 = vmatprep.subr.bf16.mxu0 0
      %4881 = vmatpush1.bf16.msra.mxu0 0
      %4882 = vmatprep.mubr.bf16.mxu0 0
      %4883 = vmatmul.mubr.bf16.gmra.mrb[0].mxu0 %v4768
      %v4884 = vpop.f32.mrb[0].mxu0
      %v4885 = vadd.f32 0.0, %v4884
      %v4886 = vpop.f32.mrb[0].mxu0
      %v4887 = vadd.f32 0.0, %v4886
      %v4888 = vpop.f32.mrb[0].mxu0
      %v4889 = vadd.f32 0.0, %v4888
      %v4890 = vpop.f32.mrb[0].mxu0
      %v4891 = vadd.f32 0.0, %v4890
      %4892 = vdwg.mxu0
      %v4893 = vadd.f32 %v4724, %v4885
      %v4894 = vadd.f32 %v4725, %v4887
      %v4895 = vadd.f32 %v4726, %v4889
      %v4896 = vadd.f32 %v4727, %v4891
      %v4897 = vld [vmem:[%s3415] sm:$0x3]
      %v4898 = vld [vmem:[%s3415 + $0x4] sm:$0x3]
      %v4899 = vld [vmem:[%s3415 + $0x8] sm:$0x3]
      %v4900 = vld [vmem:[%s3415 + $0xc] sm:$0x3]
      %v4901 = vld [vmem:[%s3 + $0x380] sm:$0xff]
      %v4902 = vld [vmem:[%s3 + $0x388] sm:$0xff]
      %v4903 = vld [vmem:[%s3 + $0x390] sm:$0xff]
      %v4904 = vld [vmem:[%s3 + $0x398] sm:$0xff]
      %v4905 = vld [vmem:[%s3 + $0x3a0] sm:$0xff]
      %v4906 = vld [vmem:[%s3 + $0x3a8] sm:$0xff]
      %v4907 = vld [vmem:[%s3 + $0x3b0] sm:$0xff]
      %v4908 = vld [vmem:[%s3 + $0x3b8] sm:$0xff]
      %v4909 = vld [vmem:[%s3 + $0x3c0] sm:$0xff]
      %v4910 = vld [vmem:[%s3 + $0x3c8] sm:$0xff]
      %v4911 = vld [vmem:[%s3 + $0x3d0] sm:$0xff]
      %v4912 = vld [vmem:[%s3 + $0x3d8] sm:$0xff]
      %v4913 = vld [vmem:[%s3 + $0x3e0] sm:$0xff]
      %v4914 = vld [vmem:[%s3 + $0x3e8] sm:$0xff]
      %v4915 = vld [vmem:[%s3 + $0x3f0] sm:$0xff]
      %v4916 = vld [vmem:[%s3 + $0x3f8] sm:$0xff]
      %v4921 = vcombine.low %v4897, %v4898
      %v4922 = vcombine.low %v4899, %v4900
      %v4924 = vunpack.c.l.s4 1983009808
      %v4925 = vunpack.c.0.s8 %v4924
      %v4926 = vlaneseq
      %v4927 = vshrl.u32 %v4926, 7
      %v4928 = vsub.s32 %v4925, %v4927
      %v4929 = vrot.slane %v4921, %v4928
      %v4931 = vunpack.c.l.s4 1983009808
      %v4932 = vunpack.c.0.s8 %v4931
      %v4933 = vlaneseq
      %v4934 = vshrl.u32 %v4933, 7
      %v4935 = vsub.s32 %v4932, %v4934
      %v4936 = vrot.slane %v4922, %v4935
      %v4937 = vcombine.low %v4929, %v4936
      %v4955 = vunpack.c.l.b16 %v4901
      %v4956 = vunpack.c.h.b16 %v4901
      %v4957 = vunpack.c.l.b16 %v4902
      %v4958 = vunpack.c.h.b16 %v4902
      %v4959 = vunpack.c.l.b16 %v4903
      %v4960 = vunpack.c.h.b16 %v4903
      %v4961 = vunpack.c.l.b16 %v4904
      %v4962 = vunpack.c.h.b16 %v4904
      %v4963 = vunpack.c.l.b16 %v4905
      %v4964 = vunpack.c.h.b16 %v4905
      %v4965 = vunpack.c.l.b16 %v4906
      %v4966 = vunpack.c.h.b16 %v4906
      %v4967 = vunpack.c.l.b16 %v4907
      %v4968 = vunpack.c.h.b16 %v4907
      %v4969 = vunpack.c.l.b16 %v4908
      %v4970 = vunpack.c.h.b16 %v4908
      %v4971 = vunpack.c.l.b16 %v4909
      %v4972 = vunpack.c.h.b16 %v4909
      %v4973 = vunpack.c.l.b16 %v4910
      %v4974 = vunpack.c.h.b16 %v4910
      %v4975 = vunpack.c.l.b16 %v4911
      %v4976 = vunpack.c.h.b16 %v4911
      %v4977 = vunpack.c.l.b16 %v4912
      %v4978 = vunpack.c.h.b16 %v4912
      %v4979 = vunpack.c.l.b16 %v4913
      %v4980 = vunpack.c.h.b16 %v4913
      %v4981 = vunpack.c.l.b16 %v4914
      %v4982 = vunpack.c.h.b16 %v4914
      %v4983 = vunpack.c.l.b16 %v4915
      %v4984 = vunpack.c.h.b16 %v4915
      %v4985 = vunpack.c.l.b16 %v4916
      %v4986 = vunpack.c.h.b16 %v4916
      %v4987 = vpack.c.b16 %v4957, %v4955
      %v4988 = vpack.c.b16 %v4958, %v4956
      %v4989 = vpack.c.b16 %v4961, %v4959
      %v4990 = vpack.c.b16 %v4962, %v4960
      %v4991 = vpack.c.b16 %v4965, %v4963
      %v4992 = vpack.c.b16 %v4966, %v4964
      %v4993 = vpack.c.b16 %v4969, %v4967
      %v4994 = vpack.c.b16 %v4970, %v4968
      %v4995 = vpack.c.b16 %v4973, %v4971
      %v4996 = vpack.c.b16 %v4974, %v4972
      %v4997 = vpack.c.b16 %v4977, %v4975
      %v4998 = vpack.c.b16 %v4978, %v4976
      %v4999 = vpack.c.b16 %v4981, %v4979
      %v5000 = vpack.c.b16 %v4982, %v4980
      %v5001 = vpack.c.b16 %v4985, %v4983
      %v5002 = vpack.c.b16 %v4986, %v4984
      %5019 = vmatprep.subr.bf16.mxu0 %v4988
      %5020 = vmatpush1.bf16.msra.mxu0 %v4987
      %5021 = vmatprep.subr.bf16.mxu0 %v4990
      %5022 = vmatpush1.bf16.msra.mxu0 %v4989
      %5023 = vmatprep.subr.bf16.mxu0 %v4992
      %5024 = vmatpush1.bf16.msra.mxu0 %v4991
      %5025 = vmatprep.subr.bf16.mxu0 %v4994
      %5026 = vmatpush1.bf16.msra.mxu0 %v4993
      %5027 = vmatprep.subr.bf16.mxu0 %v4996
      %5028 = vmatpush1.bf16.msra.mxu0 %v4995
      %5029 = vmatprep.subr.bf16.mxu0 %v4998
      %5030 = vmatpush1.bf16.msra.mxu0 %v4997
      %5031 = vmatprep.subr.bf16.mxu0 %v5000
      %5032 = vmatpush1.bf16.msra.mxu0 %v4999
      %5033 = vmatprep.subr.bf16.mxu0 %v5002
      %5034 = vmatpush1.bf16.msra.mxu0 %v5001
      %5035 = vmatprep.subr.bf16.mxu0 0
      %5036 = vmatpush1.bf16.msra.mxu0 0
      %5037 = vmatprep.subr.bf16.mxu0 0
      %5038 = vmatpush1.bf16.msra.mxu0 0
      %5039 = vmatprep.subr.bf16.mxu0 0
      %5040 = vmatpush1.bf16.msra.mxu0 0
      %5041 = vmatprep.subr.bf16.mxu0 0
      %5042 = vmatpush1.bf16.msra.mxu0 0
      %5043 = vmatprep.subr.bf16.mxu0 0
      %5044 = vmatpush1.bf16.msra.mxu0 0
      %5045 = vmatprep.subr.bf16.mxu0 0
      %5046 = vmatpush1.bf16.msra.mxu0 0
      %5047 = vmatprep.subr.bf16.mxu0 0
      %5048 = vmatpush1.bf16.msra.mxu0 0
      %5049 = vmatprep.subr.bf16.mxu0 0
      %5050 = vmatpush1.bf16.msra.mxu0 0
      %5051 = vmatprep.mubr.bf16.mxu0 0
      %5052 = vmatmul.mubr.bf16.gmra.mrb[0].mxu0 %v4937
      %v5053 = vpop.f32.mrb[0].mxu0
      %v5054 = vadd.f32 0.0, %v5053
      %v5055 = vpop.f32.mrb[0].mxu0
      %v5056 = vadd.f32 0.0, %v5055
      %v5057 = vpop.f32.mrb[0].mxu0
      %v5058 = vadd.f32 0.0, %v5057
      %v5059 = vpop.f32.mrb[0].mxu0
      %v5060 = vadd.f32 0.0, %v5059
      %5061 = vdwg.mxu0
      %v5062 = vadd.f32 %v4893, %v5054
      %v5063 = vadd.f32 %v4894, %v5056
      %v5064 = vadd.f32 %v4895, %v5058
      %v5065 = vadd.f32 %v4896, %v5060
      %v5066 = vld [vmem:[%s3378] sm:$0x7]
      %v5067 = vld [vmem:[%s3378 + $0x4] sm:$0x7]
      %v5068 = vld [vmem:[%s3378 + $0x8] sm:$0x7]
      %v5069 = vld [vmem:[%s3378 + $0xc] sm:$0x7]
      %v5075 = vunpack.c.l.s4 1983009808
      %v5076 = vunpack.c.0.s8 %v5075
      %v5077 = vlaneseq
      %v5078 = vshrl.u32 %v5077, 7
      %v5079 = vsub.s32 %v5076, %v5078
      %v5080 = vrot.slane %v5066, %v5079
      %v5081 = vcombine.high %v5080, %v5080
      %v5083 = vunpack.c.l.s4 1983009808
      %v5084 = vunpack.c.0.s8 %v5083
      %v5085 = vlaneseq
      %v5086 = vshrl.u32 %v5085, 7
      %v5087 = vsub.s32 %v5084, %v5086
      %v5088 = vrot.slane %v5067, %v5087
      %v5089 = vcombine.high %v5088, %v5088
      %v5091 = vunpack.c.l.s4 1983009808
      %v5092 = vunpack.c.0.s8 %v5091
      %v5093 = vlaneseq
      %v5094 = vshrl.u32 %v5093, 7
      %v5095 = vsub.s32 %v5092, %v5094
      %v5096 = vrot.slane %v5068, %v5095
      %v5097 = vcombine.high %v5096, %v5096
      %v5099 = vunpack.c.l.s4 1983009808
      %v5100 = vunpack.c.0.s8 %v5099
      %v5101 = vlaneseq
      %v5102 = vshrl.u32 %v5101, 7
      %v5103 = vsub.s32 %v5100, %v5102
      %v5104 = vrot.slane %v5069, %v5103
      %v5105 = vcombine.high %v5104, %v5104
      %v5107 = vshrl.u32 %v5080, 16
      %v5109 = vrot.slane %v5107, 6
      %v5110 = vshll.u32 %v5080, 16
      %v5112 = vrot.slane %v5110, 7
      %v5113 = vor.u32 %v5109, %v5112
      %v5114 = vrot.slane %v5113, 2
      %v5116 = vshll.u32 %v5081, 16
      %v5118 = vrot.slane %v5116, 7
      %v5119 = vsel %vm3915, %v5114, %v5118
      %v5121 = vshrl.u32 %v5088, 16
      %v5123 = vrot.slane %v5121, 6
      %v5124 = vshll.u32 %v5088, 16
      %v5126 = vrot.slane %v5124, 7
      %v5127 = vor.u32 %v5123, %v5126
      %v5128 = vrot.slane %v5127, 2
      %v5130 = vshll.u32 %v5089, 16
      %v5132 = vrot.slane %v5130, 7
      %v5133 = vsel %vm3915, %v5128, %v5132
      %v5135 = vshrl.u32 %v5096, 16
      %v5137 = vrot.slane %v5135, 6
      %v5138 = vshll.u32 %v5096, 16
      %v5140 = vrot.slane %v5138, 7
      %v5141 = vor.u32 %v5137, %v5140
      %v5142 = vrot.slane %v5141, 2
      %v5144 = vshll.u32 %v5097, 16
      %v5146 = vrot.slane %v5144, 7
      %v5147 = vsel %vm3915, %v5142, %v5146
      %v5149 = vshrl.u32 %v5104, 16
      %v5151 = vrot.slane %v5149, 6
      %v5152 = vshll.u32 %v5104, 16
      %v5154 = vrot.slane %v5152, 7
      %v5155 = vor.u32 %v5151, %v5154
      %v5156 = vrot.slane %v5155, 2
      %v5158 = vshll.u32 %v5105, 16
      %v5160 = vrot.slane %v5158, 7
      %v5161 = vsel %vm3915, %v5156, %v5160
      %v5162 = vld [vmem:[%s3 + $0x400] sm:$0xff]
      %v5163 = vld [vmem:[%s3 + $0x408] sm:$0xff]
      %v5164 = vld [vmem:[%s3 + $0x410] sm:$0xff]
      %v5165 = vld [vmem:[%s3 + $0x418] sm:$0xff]
      %v5166 = vld [vmem:[%s3 + $0x420] sm:$0xff]
      %v5167 = vld [vmem:[%s3 + $0x428] sm:$0xff]
      %v5168 = vld [vmem:[%s3 + $0x430] sm:$0xff]
      %v5169 = vld [vmem:[%s3 + $0x438] sm:$0xff]
      %v5170 = vld [vmem:[%s3 + $0x440] sm:$0xff]
      %v5171 = vld [vmem:[%s3 + $0x448] sm:$0xff]
      %v5172 = vld [vmem:[%s3 + $0x450] sm:$0xff]
      %v5173 = vld [vmem:[%s3 + $0x458] sm:$0xff]
      %v5174 = vld [vmem:[%s3 + $0x460] sm:$0xff]
      %v5175 = vld [vmem:[%s3 + $0x468] sm:$0xff]
      %v5176 = vld [vmem:[%s3 + $0x470] sm:$0xff]
      %v5177 = vld [vmem:[%s3 + $0x478] sm:$0xff]
      %v5178 = vcombine.low %v5119, %v5133
      %v5179 = vcombine.low %v5147, %v5161
      %v5181 = vunpack.c.l.s4 1983009808
      %v5182 = vunpack.c.0.s8 %v5181
      %v5183 = vlaneseq
      %v5184 = vshrl.u32 %v5183, 7
      %v5185 = vsub.s32 %v5182, %v5184
      %v5186 = vrot.slane %v5178, %v5185
      %v5188 = vunpack.c.l.s4 1983009808
      %v5189 = vunpack.c.0.s8 %v5188
      %v5190 = vlaneseq
      %v5191 = vshrl.u32 %v5190, 7
      %v5192 = vsub.s32 %v5189, %v5191
      %v5193 = vrot.slane %v5179, %v5192
      %v5194 = vcombine.low %v5186, %v5193
      %v5212 = vunpack.c.l.b16 %v5162
      %v5213 = vunpack.c.h.b16 %v5162
      %v5214 = vunpack.c.l.b16 %v5163
      %v5215 = vunpack.c.h.b16 %v5163
      %v5216 = vunpack.c.l.b16 %v5164
      %v5217 = vunpack.c.h.b16 %v5164
      %v5218 = vunpack.c.l.b16 %v5165
      %v5219 = vunpack.c.h.b16 %v5165
      %v5220 = vunpack.c.l.b16 %v5166
      %v5221 = vunpack.c.h.b16 %v5166
      %v5222 = vunpack.c.l.b16 %v5167
      %v5223 = vunpack.c.h.b16 %v5167
      %v5224 = vunpack.c.l.b16 %v5168
      %v5225 = vunpack.c.h.b16 %v5168
      %v5226 = vunpack.c.l.b16 %v5169
      %v5227 = vunpack.c.h.b16 %v5169
      %v5228 = vunpack.c.l.b16 %v5170
      %v5229 = vunpack.c.h.b16 %v5170
      %v5230 = vunpack.c.l.b16 %v5171
      %v5231 = vunpack.c.h.b16 %v5171
      %v5232 = vunpack.c.l.b16 %v5172
      %v5233 = vunpack.c.h.b16 %v5172
      %v5234 = vunpack.c.l.b16 %v5173
      %v5235 = vunpack.c.h.b16 %v5173
      %v5236 = vunpack.c.l.b16 %v5174
      %v5237 = vunpack.c.h.b16 %v5174
      %v5238 = vunpack.c.l.b16 %v5175
      %v5239 = vunpack.c.h.b16 %v5175
      %v5240 = vunpack.c.l.b16 %v5176
      %v5241 = vunpack.c.h.b16 %v5176
      %v5242 = vunpack.c.l.b16 %v5177
      %v5243 = vunpack.c.h.b16 %v5177
      %v5244 = vpack.c.b16 %v5214, %v5212
      %v5245 = vpack.c.b16 %v5215, %v5213
      %v5246 = vpack.c.b16 %v5218, %v5216
      %v5247 = vpack.c.b16 %v5219, %v5217
      %v5248 = vpack.c.b16 %v5222, %v5220
      %v5249 = vpack.c.b16 %v5223, %v5221
      %v5250 = vpack.c.b16 %v5226, %v5224
      %v5251 = vpack.c.b16 %v5227, %v5225
      %v5252 = vpack.c.b16 %v5230, %v5228
      %v5253 = vpack.c.b16 %v5231, %v5229
      %v5254 = vpack.c.b16 %v5234, %v5232
      %v5255 = vpack.c.b16 %v5235, %v5233
      %v5256 = vpack.c.b16 %v5238, %v5236
      %v5257 = vpack.c.b16 %v5239, %v5237
      %v5258 = vpack.c.b16 %v5242, %v5240
      %v5259 = vpack.c.b16 %v5243, %v5241
      %5276 = vmatprep.subr.bf16.mxu0 %v5245
      %5277 = vmatpush1.bf16.msra.mxu0 %v5244
      %5278 = vmatprep.subr.bf16.mxu0 %v5247
      %5279 = vmatpush1.bf16.msra.mxu0 %v5246
      %5280 = vmatprep.subr.bf16.mxu0 %v5249
      %5281 = vmatpush1.bf16.msra.mxu0 %v5248
      %5282 = vmatprep.subr.bf16.mxu0 %v5251
      %5283 = vmatpush1.bf16.msra.mxu0 %v5250
      %5284 = vmatprep.subr.bf16.mxu0 %v5253
      %5285 = vmatpush1.bf16.msra.mxu0 %v5252
      %5286 = vmatprep.subr.bf16.mxu0 %v5255
      %5287 = vmatpush1.bf16.msra.mxu0 %v5254
      %5288 = vmatprep.subr.bf16.mxu0 %v5257
      %5289 = vmatpush1.bf16.msra.mxu0 %v5256
      %5290 = vmatprep.subr.bf16.mxu0 %v5259
      %5291 = vmatpush1.bf16.msra.mxu0 %v5258
      %5292 = vmatprep.subr.bf16.mxu0 0
      %5293 = vmatpush1.bf16.msra.mxu0 0
      %5294 = vmatprep.subr.bf16.mxu0 0
      %5295 = vmatpush1.bf16.msra.mxu0 0
      %5296 = vmatprep.subr.bf16.mxu0 0
      %5297 = vmatpush1.bf16.msra.mxu0 0
      %5298 = vmatprep.subr.bf16.mxu0 0
      %5299 = vmatpush1.bf16.msra.mxu0 0
      %5300 = vmatprep.subr.bf16.mxu0 0
      %5301 = vmatpush1.bf16.msra.mxu0 0
      %5302 = vmatprep.subr.bf16.mxu0 0
      %5303 = vmatpush1.bf16.msra.mxu0 0
      %5304 = vmatprep.subr.bf16.mxu0 0
      %5305 = vmatpush1.bf16.msra.mxu0 0
      %5306 = vmatprep.subr.bf16.mxu0 0
      %5307 = vmatpush1.bf16.msra.mxu0 0
      %5308 = vmatprep.mubr.bf16.mxu0 0
      %5309 = vmatmul.mubr.bf16.gmra.mrb[0].mxu0 %v5194
      %v5310 = vpop.f32.mrb[0].mxu0
      %v5311 = vadd.f32 0.0, %v5310
      %v5312 = vpop.f32.mrb[0].mxu0
      %v5313 = vadd.f32 0.0, %v5312
      %v5314 = vpop.f32.mrb[0].mxu0
      %v5315 = vadd.f32 0.0, %v5314
      %v5316 = vpop.f32.mrb[0].mxu0
      %v5317 = vadd.f32 0.0, %v5316
      %5318 = vdwg.mxu0
      %v5319 = vadd.f32 %v5062, %v5311
      %v5320 = vadd.f32 %v5063, %v5313
      %v5321 = vadd.f32 %v5064, %v5315
      %v5322 = vadd.f32 %v5065, %v5317
      %v5323 = vld [vmem:[%s6] sm:$0x3]
      %v5325 = vlaneseq
      %v5326 = vshrl.u32 %v5325, 7
      %v5327 = vsub.s32 0, %v5326
      %v5328 = vrot.slane %v5323, %v5327
      %v5329 = vlaneseq
      %v5330 = vshrl.u32 %v5329, 7
      %v5331 = vsub.s32 1, %v5330
      %v5332 = vrot.slane %v5323, %v5331
      %v5335 = vadd.f32 %v5319, %v5328
      %v5336 = vadd.f32 %v5320, %v5332
      %v5337 = vadd.f32 %v5321, %v5328
      %v5338 = vadd.f32 %v5322, %v5332
      %v5339 = vsub.f32 0.0, %v5335
      %v5340 = vsub.f32 0.0, %v5336
      %v5341 = vsub.f32 0.0, %v5337
      %v5342 = vsub.f32 0.0, %v5338
      %v5343 = vmul.f32 %v5339, 1.442695
      %v5344 = vpow.pop %v5343
      %v5345 = vmul.f32 %v5340, 1.442695
      %v5346 = vpow.pop %v5345
      %v5347 = vmul.f32 %v5341, 1.442695
      %v5348 = vpow.pop %v5347
      %v5349 = vmul.f32 %v5342, 1.442695
      %v5350 = vpow.pop %v5349
      %v5351 = vadd.f32 %v5344, 1.0
      %v5352 = vadd.f32 %v5346, 1.0
      %v5353 = vadd.f32 %v5348, 1.0
      %v5354 = vadd.f32 %v5350, 1.0
      %v5355 = vrcp.pop %v5351
      %v5356 = vmul.f32 1.0, %v5355
      %v5357 = vrcp.pop %v5352
      %v5358 = vmul.f32 1.0, %v5357
      %v5359 = vrcp.pop %v5353
      %v5360 = vmul.f32 1.0, %v5359
      %v5361 = vrcp.pop %v5354
      %v5362 = vmul.f32 1.0, %v5361
      %v5363 = vmul.f32 %v5335, %v5356
      %v5364 = vmul.f32 %v5336, %v5358
      %v5365 = vmul.f32 %v5337, %v5360
      %v5366 = vmul.f32 %v5338, %v5362
      %5367 = vst [vmem:[%s305] sm:$0xff] %v5363
      %5368 = vst [vmem:[%s305 + $0x8] sm:$0xff] %v5364
      %5369 = vst [vmem:[%s305 + $0x10] sm:$0xff] %v5365
      %5370 = vst [vmem:[%s305 + $0x18] sm:$0xff] %v5366
      %p5371 = scmp.lt.s32.totalorder %s19, 1
      %s5372 = scalar_select %p5371, %s19, 1
      %s5373 = smul.addr %s5372, 4
      %s5374 = smul.addr %s5373, 8
      %s5375 = scalar_lea.vmem %s8, %s5374
      // Predicated region
      $region53: #{subencoder_forward.1} parent=51 // pred_check
        %p5376 = pneg %p210
      $region54: #{subencoder_forward.1} parent=51 // pred_check_branch
        %5378 = sbr.rel (%p5376) target = $region56
      $region55: #{subencoder_forward.1} parent=51 // pred_region
        _
      $region56: #{subencoder_forward.1} parent=51 // pred_fallthru
        _
    $region52: #{subencoder_forward.1} parent=5 // pred_fallthru
      _
    %p5379 = scmp.le.s32.totalorder 2, %s14
    // Predicated region
    $region57: #{subencoder_forward.1} parent=5 // pred_check
      %p5380 = pneg %p5379
    $region58: #{subencoder_forward.1} parent=5 // pred_check_branch
      %5382 = sbr.rel (%p5380) target = $region60
    $region59: #{subencoder_forward.1} parent=5 // pred_region
      %s5383 = ssub.s32 %s14, 2
      // Predicated region
      $region61: #{subencoder_forward.1} parent=59 // pred_check
        %p5384 = pneg %p216
      $region62: #{subencoder_forward.1} parent=59 // pred_check_branch
        %5386 = sbr.rel (%p5384) target = $region64
      $region63: #{subencoder_forward.1} parent=59 // pred_region
        %p5387 = scmp.lt.s32.totalorder %s20, 1
        %s5388 = scalar_select %p5387, %s20, 1
        %s5389 = smul.addr %s5388, 4
        %s5390 = smul.addr %s5389, 8
        %s5391 = scalar_lea.vmem %s8, %s5390
      $region64: #{subencoder_forward.1} parent=59 // pred_fallthru
        _
    $region60: #{subencoder_forward.1} parent=5 // pred_fallthru
      _
  $region6: #{subencoder_forward.1} parent=0 // loop_footer
    %s18 = sadd.s32 1, %s14
  $region7: #{subencoder_forward.1} parent=0 // loop_footer_branch
    %13 = sbr.rel target = $region3
  $region8: #{subencoder_forward.1} parent=0 // loop_exit
    _

</llo_original>
